<compile_context>
chip_gen: v5e
topology: v5e:2x2
jax: 0.10.0
libtpu: 0.0.40
codegen_flags: <defaults>
</compile_context>

<pallas_src>
import functools

import jax
import jax.numpy as jnp
from jax import lax
from jax.experimental import pallas as pl
from jax.experimental.pallas import tpu as pltpu

EMBED_DIM = 64
NUM_HEADS = 4
HEAD_DIM = EMBED_DIM // NUM_HEADS
NUM_LAYERS = 4
NEG_SLOPE = 0.2
LN_EPS = 1e-5

ATOM_FEATURE_DIMS = (119, 4, 12, 12, 10, 6, 6, 2, 2)   # OGB AtomEncoder vocab sizes
BOND_FEATURE_DIMS = (5, 6, 2)                           # OGB BondEncoder vocab sizes


def _round_up(x, m):
    return (x + m - 1) // m * m


def _divisor_tile(rows, target):
    """Largest multiple-of-8 tile <= target that divides rows (rows % 8 == 0)."""
    t = min(target, rows)
    while rows % t:
        t -= 8
    return max(t, 8)


def _chip_config():
    """(node_tile, edge_tile) targets for the attention kernel per TPU generation."""
    try:
        kind = jax.devices()[0].device_kind.lower()
    except Exception:
        kind = ""
    if "v5" in kind or "v4" in kind:
        return 128, 256          # 128x128 MXU, no bf16 VALU -> smaller one-hot
    return 256, 512              # v6e / v7x: 256-wide MXU


def _compiler_params(sem):
    return pltpu.CompilerParams(dimension_semantics=sem,
                                vmem_limit_bytes=48 * 1024 * 1024)


# ------------------------- generic row-tiled matmul -------------------------

def _rowmm_kernel(x_ref, w_ref, o_ref):
    o_ref[...] = jnp.dot(x_ref[...], w_ref[...],
                         preferred_element_type=jnp.float32)


def row_matmul(x, w, tile):
    """(rows, K)bf16 @ (K, Kout)bf16 -> (rows, Kout)f32, tiled over rows."""
    rows, kin = x.shape
    kout = w.shape[1]
    return pl.pallas_call(
        _rowmm_kernel,
        out_shape=jax.ShapeDtypeStruct((rows, kout), jnp.float32),
        grid_spec=pltpu.PrefetchScalarGridSpec(
            num_scalar_prefetch=0,
            grid=(rows // tile,),
            in_specs=[pl.BlockSpec((tile, kin), lambda i: (i, 0)),
                      pl.BlockSpec((kin, kout), lambda i: (0, 0))],
            out_specs=pl.BlockSpec((tile, kout), lambda i: (i, 0))),
        compiler_params=_compiler_params(("parallel",)),
    )(x, w)


# ---------------- fused GAT attention / aggregation / LN / residual ----------------

def _head_expand(v):
    """(rows, H) -> (rows, D): broadcast each head value over its HEAD_DIM lanes (VPU)."""
    rows = v.shape[0]
    return jnp.concatenate(
        [jnp.broadcast_to(v[:, h:h + 1], (rows, HEAD_DIM)) for h in range(NUM_HEADS)],
        axis=1)


def _attn_kernel(nblk_ref, eblk_ref, first_ref, last_ref, valid_ref,   # SMEM schedule
                 lg_ref, xs_ref, dst_ref, res_ref, bias_ref, g_ref, b_ref,
                 o_ref, acc_ref, den_ref, *, tn):
    s = pl.program_id(0)

    @pl.when(first_ref[s] == 1)
    def _():
        acc_ref[...] = jnp.zeros_like(acc_ref)
        den_ref[...] = jnp.zeros_like(den_ref)

    @pl.when(valid_ref[s] == 1)
    def _():
        p = jnp.exp(lg_ref[...])                           # (TE, H) f32, values in (0, 1]
        pf = _head_expand(p).astype(jnp.bfloat16)          # (TE, D) head-broadcast weights
        msg = pf * xs_ref[...]                             # bf16 message weighting
        # destination one-hot: (TN,1) sublane iota vs (1,TE) dst row — no full
        # (TN,TE) int32 iota; edges outside this node tile (incl. padding)
        # produce all-zero columns and drop out exactly.
        row_ids = (lax.broadcasted_iota(jnp.int32, (tn, 1), 0) + nblk_ref[s] * tn)
        oh = (row_ids == dst_ref[...]).astype(jnp.bfloat16)                 # (TN, TE)
        acc_ref[...] += jnp.dot(oh, msg, preferred_element_type=jnp.float32)  # Σ p·x_src
        den_ref[...] += jnp.dot(oh, pf, preferred_element_type=jnp.float32)   # Σ p (head-expanded)

    @pl.when(last_ref[s] == 1)
    def _():
        den = den_ref[...]
        inv = jnp.where(den > 0.0, pl.reciprocal(den, approx=True), 0.0)
        conv = acc_ref[...] * inv + bias_ref[...]          # zero-in-degree -> bias only
        mu = jnp.mean(conv, axis=-1, keepdims=True)
        var = jnp.mean((conv - mu) ** 2, axis=-1, keepdims=True)
        y = (conv - mu) * lax.rsqrt(var + LN_EPS) * g_ref[...] + b_ref[...]
        # TODO(synk): feature/attention dropout (p=0.7) omitted — eval-mode identity.
        # TODO(synk): 64-lane f32 store is masked; packing two rows per 128-lane slab
        # needs an in-kernel (TN,64)->(TN/2,128) relayout — left out for lowering safety.
        o_ref[...] = jnp.maximum(y, 0.0) + res_ref[...]


def gat_attention(nblk, eblk, first, last, valid, lg, xs, dst_row, res,
                  bias, gamma, beta, *, tn, te):
    n_pad, d = res.shape
    grid_len = int(nblk.shape[0])

    emap_row = lambda s, nb, eb, fi, la, va: (eb[s], 0)    # (E, .) edge-stream arrays
    emap_col = lambda s, nb, eb, fi, la, va: (0, eb[s])    # (1, E) dst ids
    nmap = lambda s, nb, eb, fi, la, va: (nb[s], 0)        # node-tile arrays
    cmap = lambda s, nb, eb, fi, la, va: (0, 0)            # constants

    cost = pl.CostEstimate(
        flops=int(4 * grid_len * tn * te * d),
        transcendentals=int(grid_len * te * NUM_HEADS),
        bytes_accessed=int(grid_len * te * (2 * d + 4 * NUM_HEADS + 4)
                           + 2 * n_pad * d * 4))

    return pl.pallas_call(
        functools.partial(_attn_kernel, tn=tn),
        out_shape=jax.ShapeDtypeStruct((n_pad, d), jnp.float32),
        grid_spec=pltpu.PrefetchScalarGridSpec(
            num_scalar_prefetch=5,
            grid=(grid_len,),
            in_specs=[pl.BlockSpec((te, NUM_HEADS), emap_row),   # shifted logits (f32)
                      pl.BlockSpec((te, d), emap_row),           # gathered src feats (bf16)
                      pl.BlockSpec((1, te), emap_col),           # destination ids (int32)
                      pl.BlockSpec((tn, d), nmap),               # residual node feats
                      pl.BlockSpec((1, d), cmap),                # conv bias
                      pl.BlockSpec((1, d), cmap),                # LN gamma
                      pl.BlockSpec((1, d), cmap)],               # LN beta
            out_specs=pl.BlockSpec((tn, d), nmap),
            scratch_shapes=[pltpu.VMEM((tn, d), jnp.float32),    # numerator
                            pltpu.VMEM((tn, d), jnp.float32)]),  # denominator (head-expanded)
        compiler_params=_compiler_params(("arbitrary",)),
        cost_estimate=cost,
    )(nblk, eblk, first, last, valid, lg, xs, dst_row, res, bias, gamma, beta)


def _build_attention_schedule(dst_sp, n_pad, e_pad, tn, te):
    """Flattened (<= nb_n + nb_e steps) schedule: step -> node/edge block + flags."""
    nb_n, nb_e = n_pad // tn, e_pad // te
    grid_len = nb_n + nb_e                                  # static upper bound

    starts = jnp.arange(nb_n, dtype=jnp.int32) * tn
    lo = jnp.searchsorted(dst_sp, starts, side="left").astype(jnp.int32)
    hi = jnp.searchsorted(dst_sp, starts + tn, side="left").astype(jnp.int32)
    has = hi > lo
    blk_lo = jnp.minimum(lo // te, nb_e - 1).astype(jnp.int32)
    blk_hi = jnp.minimum(jnp.where(has, (hi - 1) // te, 0), nb_e - 1).astype(jnp.int32)
    cnt = jnp.where(has, blk_hi - blk_lo + 1, 0).astype(jnp.int32)

    steps = jnp.maximum(cnt, 1)                             # empty blocks still init+finalize
    cum = jnp.cumsum(steps).astype(jnp.int32)
    start_off = (cum - steps).astype(jnp.int32)
    total = cum[-1]

    sids = jnp.arange(grid_len, dtype=jnp.int32)
    nblk = jnp.minimum(jnp.searchsorted(cum, sids, side="right").astype(jnp.int32),
                       nb_n - 1)
    local = sids - start_off[nblk]
    in_range = sids < total
    first = ((local == 0) & in_range).astype(jnp.int32)
    last = ((local == steps[nblk] - 1) & in_range).astype(jnp.int32)
    valid = (in_range & (cnt[nblk] > 0)).astype(jnp.int32)

    eblk_real = jnp.clip(blk_lo[nblk] + local, 0, nb_e - 1).astype(jnp.int32)
    last_eblk = eblk_real[jnp.maximum(total - 1, 0)]
    # padding steps re-use the last real (node, edge) block -> no extra DMAs
    eblk = jnp.where(in_range, eblk_real, last_eblk).astype(jnp.int32)
    return nblk, eblk, first, last, valid


# ------------------------------ edge update MLP ------------------------------

def _edge_update_kernel(ni_ref, nj_ref, e_ref, w1a_ref, w1b_ref, w1c_ref,
                        b1_ref, g_ref, be_ref, w2_ref, b2_ref, o_ref):
    e32 = e_ref[...]
    # concat([ni, nj, e]) @ W1 expressed as three K=64 partial matmuls (no concat in HBM)
    h = (jnp.dot(ni_ref[...], w1a_ref[...], preferred_element_type=jnp.float32)
         + jnp.dot(nj_ref[...], w1b_ref[...], preferred_element_type=jnp.float32)
         + jnp.dot(e32.astype(jnp.bfloat16), w1c_ref[...],
                   preferred_element_type=jnp.float32)
         + b1_ref[...])
    mu = jnp.mean(h, axis=-1, keepdims=True)
    var = jnp.mean((h - mu) ** 2, axis=-1, keepdims=True)
    h = (h - mu) * lax.rsqrt(var + LN_EPS) * g_ref[...] + be_ref[...]
    h = jnp.maximum(h, 0.0)
    h = jnp.dot(h.astype(jnp.bfloat16), w2_ref[...],
                preferred_element_type=jnp.float32) + b2_ref[...]
    o_ref[...] = jnp.maximum(h + e32, 0.0)                  # relu(mlp(x) + edge_feats)


def edge_update(ni, nj, e, w1a, w1b, w1c, b1, g, be, w2, b2, *, te):
    e_pad, d = e.shape
    d3 = w1a.shape[1]
    emap = lambda i: (i, 0)
    cmap = lambda i: (0, 0)
    return pl.pallas_call(
        _edge_update_kernel,
        out_shape=jax.ShapeDtypeStruct((e_pad, d), jnp.float32),
        grid_spec=pltpu.PrefetchScalarGridSpec(
            num_scalar_prefetch=0,
            grid=(e_pad // te,),
            in_specs=[pl.BlockSpec((te, d), emap),
                      pl.BlockSpec((te, d), emap),
                      pl.BlockSpec((te, d), emap),
                      pl.BlockSpec((d, d3), cmap),
                      pl.BlockSpec((d, d3), cmap),
                      pl.BlockSpec((d, d3), cmap),
                      pl.BlockSpec((1, d3), cmap),
                      pl.BlockSpec((1, d3), cmap),
                      pl.BlockSpec((1, d3), cmap),
                      pl.BlockSpec((d3, d), cmap),
                      pl.BlockSpec((1, d), cmap)],
            out_specs=pl.BlockSpec((te, d), emap)),
        compiler_params=_compiler_params(("parallel",)),
    )(ni, nj, e, w1a, w1b, w1c, b1, g, be, w2, b2)


# ----------------------------- parameter setup -----------------------------

def _head_project_matrix(att):
    """att (H, Dh) -> (D, H) block matrix so the per-head dot folds into W."""
    h, dh = att.shape
    m = jnp.zeros((h * dh, h), jnp.float32)
    for i in range(h):
        m = m.at[i * dh:(i + 1) * dh, i].set(att[i])
    return m


def init_params(key):
    d, h, dh = EMBED_DIM, NUM_HEADS, HEAD_DIM
    keys = iter(jax.random.split(key, 256))

    def nrm(shape, scale=0.1):
        return scale * jax.random.normal(next(keys), shape, jnp.float32)

    params = {
        "atom_emb": [nrm((v, d)) for v in ATOM_FEATURE_DIMS],
        "bond_emb": [nrm((v, d)) for v in BOND_FEATURE_DIMS],
        "layers": [],
    }
    for _ in range(NUM_LAYERS):
        params["layers"].append({
            "w_lin": nrm((d, d)),                       # GATConv lin (no bias)
            "w_edge": nrm((d, d)),                      # GATConv lin_edge (no bias)
            "a_src": _head_project_matrix(nrm((h, dh))),
            "a_dst": _head_project_matrix(nrm((h, dh))),
            "a_edge": _head_project_matrix(nrm((h, dh))),
            "conv_bias": jnp.zeros((1, d), jnp.float32),
            "ln_gamma": jnp.ones((1, d), jnp.float32),  # batch_norms[layer] (LayerNorm)
            "ln_beta": jnp.zeros((1, d), jnp.float32),
            "eu_w1": nrm((3 * d, 3 * d)),               # SparseEdgeUpdateLayer.mlp
            "eu_b1": jnp.zeros((1, 3 * d), jnp.float32),
            "eu_g": jnp.ones((1, 3 * d), jnp.float32),
            "eu_be": jnp.zeros((1, 3 * d), jnp.float32),
            "eu_w2": nrm((3 * d, d)),
            "eu_b2": jnp.zeros((1, d), jnp.float32),
        })
    return params


# --------------------------------- forward ---------------------------------

def gat_base_forward(params, node_feat, edge_attr, edge_index):
    d, hh = EMBED_DIM, NUM_HEADS
    n = node_feat.shape[0]
    e_cnt = edge_attr.shape[0]
    src, dst = edge_index[0], edge_index[1]

    tn_target, te_target = _chip_config()
    tn = min(tn_target, _round_up(n, 8))                # attention node tile
    te = min(te_target, _round_up(e_cnt, 128))          # attention edge tile
    n_pad = _round_up(n, tn)
    e_pad = _round_up(e_cnt, te)
    pad_e = e_pad - e_cnt

    mm_n = _divisor_tile(n_pad, 512)                    # projection row tile (HBM-roofline)
    te_eu = _divisor_tile(e_pad, 1024)                  # edge-update row tile

    # ---- sort edges by destination once (dst is layer-invariant): glue ----
    perm = jnp.argsort(dst)
    src_s = src[perm].astype(jnp.int32)
    dst_s = dst[perm].astype(jnp.int32)
    src_sp = jnp.concatenate([src_s, jnp.zeros((pad_e,), jnp.int32)])
    dst_sp = jnp.concatenate([dst_s, jnp.full((pad_e,), n_pad, jnp.int32)])
    dst_row = dst_sp.reshape(1, e_pad)                  # (1, E_pad) lane-major dst ids
    dst_gather = jnp.minimum(dst_sp, n_pad - 1)

    # flattened attention schedule (scalar prefetch for data-dependent index_maps)
    nblk, eblk, sfirst, slast, svalid = _build_attention_schedule(
        dst_sp, n_pad, e_pad, tn, te)

    # ---- encoders: sum of categorical embeddings (gathers: glue) ----
    x = functools.reduce(
        lambda a, b: a + b,
        [jnp.take(tbl, node_feat[:, i], axis=0)
         for i, tbl in enumerate(params["atom_emb"])])
    x = jnp.pad(x, ((0, n_pad - n), (0, 0)))
    edge_attr_s = edge_attr[perm]
    e = functools.reduce(
        lambda a, b: a + b,
        [jnp.take(tbl, edge_attr_s[:, i], axis=0)
         for i, tbl in enumerate(params["bond_emb"])])
    e = jnp.pad(e, ((0, pad_e), (0, 0)))
    x_bf = x.astype(jnp.bfloat16)

    for lp in params["layers"]:
        # TODO(synk): MyGATConv source not provided; implemented with PyG
        # GATConv(edge_dim=D, concat=True) semantics (edge feats only enter the
        # attention logits; message = alpha * x_src; heads concatenated + bias).

        # fold the H-wide attention projections into the node weight so the
        # projection kernel emits one lane-dense (rows, 128) slab
        wl = lp["w_lin"]
        wn_cat = jnp.concatenate(
            [wl, wl @ lp["a_src"], wl @ lp["a_dst"],
             jnp.zeros((d, 128 - d - 2 * hh), jnp.float32)], axis=1).astype(jnp.bfloat16)

        pn = row_matmul(x_bf, wn_cat, mm_n)             # (n_pad, 128) f32

        # one slab gather per edge -> both x_src projection and src logit term
        pn_src = jnp.take(pn, src_sp, axis=0)           # (e_pad, 128)
        xs = pn_src[:, :d].astype(jnp.bfloat16)         # gathered source feats
        als = pn_src[:, d:d + hh]
        ald = jnp.take(pn[:, d + hh:d + 2 * hh], dst_gather, axis=0)
        ale = e @ (lp["w_edge"] @ lp["a_edge"])         # tiny (E,4) glue matmul, fuses with add

        # per-edge logits + exact per-destination max shift (O(E*H) glue)
        z = als + ald + ale
        z = jnp.where(z > 0, z, NEG_SLOPE * z)          # LeakyReLU
        seg_max = jax.ops.segment_max(z[:e_cnt], dst_s, num_segments=n_pad,
                                      indices_are_sorted=True)
        lg = jnp.concatenate(
            [z[:e_cnt] - seg_max[dst_s], jnp.zeros((pad_e, hh), jnp.float32)], axis=0)

        # fused attention + scatter-add + bias + LayerNorm + ReLU + residual
        x = gat_attention(nblk, eblk, sfirst, slast, svalid, lg, xs, dst_row, x,
                          lp["conv_bias"], lp["ln_gamma"], lp["ln_beta"],
                          tn=tn, te=te)
        x_bf = x.astype(jnp.bfloat16)

        # edge_feats = relu(mlp([n_i | n_j | e]) + e)   (concat never materialized)
        ni = jnp.take(x_bf, src_sp, axis=0)
        nj = jnp.take(x_bf, dst_gather, axis=0)
        w1 = lp["eu_w1"].astype(jnp.bfloat16)
        e = edge_update(ni, nj, e, w1[:d], w1[d:2 * d], w1[2 * d:],
                        lp["eu_b1"], lp["eu_g"], lp["eu_be"],
                        lp["eu_w2"].astype(jnp.bfloat16), lp["eu_b2"], te=te_eu)

    inv_perm = jnp.argsort(perm)
    return x[:n], e[:e_cnt][inv_perm]


if __name__ == "__main__":
    key = jax.random.PRNGKey(0)
    pkey, fkey = jax.random.split(key)
    params = init_params(pkey)

    n_nodes, n_edges = 16, 32
    # Bidirectional ring graph: every node has in-degree 2 (valid softmax segments).
    fwd = jnp.arange(n_nodes, dtype=jnp.int32)
    src = jnp.concatenate([fwd, (fwd + 1) % n_nodes])
    dst = jnp.concatenate([(fwd + 1) % n_nodes, fwd])
    edge_index = jnp.stack([src, dst], axis=0).astype(jnp.int32)

    fkeys = jax.random.split(fkey, len(ATOM_FEATURE_DIMS) + len(BOND_FEATURE_DIMS))
    node_feat = jnp.stack(
        [jax.random.randint(fkeys[i], (n_nodes,), 0, v)
         for i, v in enumerate(ATOM_FEATURE_DIMS)], axis=1).astype(jnp.int32)
    edge_attr = jnp.stack(
        [jax.random.randint(fkeys[len(ATOM_FEATURE_DIMS) + i], (n_edges,), 0, v)
         for i, v in enumerate(BOND_FEATURE_DIMS)], axis=1).astype(jnp.int32)

    node_out, edge_out = jax.jit(gat_base_forward)(params, node_feat, edge_attr, edge_index)
    jax.block_until_ready((node_out, edge_out))

    assert node_out.shape == (n_nodes, EMBED_DIM)
    assert edge_out.shape == (n_edges, EMBED_DIM)
    assert bool(jnp.isfinite(node_out).all()) and bool(jnp.isfinite(edge_out).all())
    print("KERNEL_OK")
</pallas_src>

<mosaic_0001>
module attributes {stable_mosaic.version = 11 : i64} {
  func.func @_rowmm_kernel(%arg0: i32, %arg1: memref<16x64xbf16, #tpu.memory_space<vmem>>, %arg2: memref<64x128xbf16, #tpu.memory_space<vmem>>, %arg3: memref<16x128xf32, #tpu.memory_space<vmem>>) attributes {dimension_semantics = [#tpu.dimension_semantics<parallel>], iteration_bounds = array<i64: 1>, scalar_prefetch = 0 : i64, scratch_operands = 0 : i64, tpu.core_type = #tpu.core_type<tc>, window_params = [{transform_indices = @transform_0, window_bounds = array<i64: 16, 64>}, {pipeline_mode = #tpu.pipeline_mode<synchronous>, transform_indices = @transform_1, window_bounds = array<i64: 64, 128>}, {transform_indices = @transform_2, window_bounds = array<i64: 16, 128>}]} {
    %c0 = arith.constant 0 : index
    %c0_0 = arith.constant 0 : index
    %0 = vector.load %arg1[%c0, %c0_0] : memref<16x64xbf16, #tpu.memory_space<vmem>>, vector<16x64xbf16>
    %c0_1 = arith.constant 0 : index
    %c0_2 = arith.constant 0 : index
    %1 = vector.load %arg2[%c0_1, %c0_2] : memref<64x128xbf16, #tpu.memory_space<vmem>>, vector<64x128xbf16>
    %cst = arith.constant dense<0.000000e+00> : vector<16x128xf32>
    %2 = tpu.matmul %0, %1, %cst {dimension_numbers = #tpu.dot_dimension_numbers<[1], [0], [0], [1], [0, 0, 1, 1], [], []>} : vector<16x64xbf16>, vector<64x128xbf16>, vector<16x128xf32> -> vector<16x128xf32>
    %c0_3 = arith.constant 0 : index
    %c0_4 = arith.constant 0 : index
    %3 = vector.load %arg3[%c0_3, %c0_4] : memref<16x128xf32, #tpu.memory_space<vmem>>, vector<16x128xf32>
    tpu.vector_store %arg3[%c0_3, %c0_4], %2 {strides = array<i32>} : memref<16x128xf32, #tpu.memory_space<vmem>>, vector<16x128xf32>,
    return
  }
  func.func @transform_0(%arg0: i32) -> (i32, i32) {
    %c0_i32 = arith.constant 0 : i32
    %c0_i32_0 = arith.constant 0 : i32
    return %arg0, %c0_i32 : i32, i32
  }
  func.func @transform_1(%arg0: i32) -> (i32, i32) {
    %c0_i32 = arith.constant 0 : i32
    %c0_i32_0 = arith.constant 0 : i32
    %c0_i32_1 = arith.constant 0 : i32
    return %c0_i32, %c0_i32_0 : i32, i32
  }
  func.func @transform_2(%arg0: i32) -> (i32, i32) {
    %c0_i32 = arith.constant 0 : i32
    %c0_i32_0 = arith.constant 0 : i32
    return %arg0, %c0_i32 : i32, i32
  }
}

module attributes {stable_mosaic.version = 11 : i64} {
  func.func @_attn_kernel(%arg0: i32, %arg1: memref<2xi32, #tpu.memory_space<smem>>, %arg2: memref<2xi32, #tpu.memory_space<smem>>, %arg3: memref<2xi32, #tpu.memory_space<smem>>, %arg4: memref<2xi32, #tpu.memory_space<smem>>, %arg5: memref<2xi32, #tpu.memory_space<smem>>, %arg6: memref<128x4xf32, #tpu.memory_space<vmem>>, %arg7: memref<128x64xbf16, #tpu.memory_space<vmem>>, %arg8: memref<1x128xi32, #tpu.memory_space<vmem>>, %arg9: memref<16x64xf32, #tpu.memory_space<vmem>>, %arg10: memref<1x64xf32, #tpu.memory_space<vmem>>, %arg11: memref<1x64xf32, #tpu.memory_space<vmem>>, %arg12: memref<1x64xf32, #tpu.memory_space<vmem>>, %arg13: memref<16x64xf32, #tpu.memory_space<vmem>>, %arg14: memref<16x64xf32, #tpu.memory_space<vmem>>, %arg15: memref<16x64xf32, #tpu.memory_space<vmem>>) attributes {dimension_semantics = [#tpu.dimension_semantics<arbitrary>], iteration_bounds = array<i64: 2>, scalar_prefetch = 5 : i64, scratch_operands = 2 : i64, tpu.core_type = #tpu.core_type<tc>, window_params = [{transform_indices = @transform_0, window_bounds = array<i64: 128, 4>}, {transform_indices = @transform_1, window_bounds = array<i64: 128, 64>}, {transform_indices = @transform_2, window_bounds = array<i64: 1, 128>}, {transform_indices = @transform_3, window_bounds = array<i64: 16, 64>}, {pipeline_mode = #tpu.pipeline_mode<synchronous>, transform_indices = @transform_4, window_bounds = array<i64: 1, 64>}, {pipeline_mode = #tpu.pipeline_mode<synchronous>, transform_indices = @transform_5, window_bounds = array<i64: 1, 64>}, {pipeline_mode = #tpu.pipeline_mode<synchronous>, transform_indices = @transform_6, window_bounds = array<i64: 1, 64>}, {transform_indices = @transform_7, window_bounds = array<i64: 16, 64>}]} {
    %0 = arith.index_cast %arg0 : i32 to index
    %1 = memref.load %arg3[%0] : memref<2xi32, #tpu.memory_space<smem>>
    %c1_i32 = arith.constant 1 : i32
    %2 = arith.cmpi eq, %1, %c1_i32 : i32
    %3 = arith.extui %2 : i1 to i32
    %c0_i32 = arith.constant 0 : i32
    %4 = arith.cmpi ne, %3, %c0_i32 : i32
    scf.if %4 {
      %cst = arith.constant 0.000000e+00 : f32
      %15 = vector.broadcast %cst : f32 to vector<16x64xf32>
      %c0 = arith.constant 0 : index
      %c0_4 = arith.constant 0 : index
      %16 = vector.load %arg14[%c0, %c0_4] : memref<16x64xf32, #tpu.memory_space<vmem>>, vector<16x64xf32>
      tpu.vector_store %arg14[%c0, %c0_4], %15 {strides = array<i32>} : memref<16x64xf32, #tpu.memory_space<vmem>>, vector<16x64xf32>,
      %cst_5 = arith.constant 0.000000e+00 : f32
      %17 = vector.broadcast %cst_5 : f32 to vector<16x64xf32>
      %c0_6 = arith.constant 0 : index
      %c0_7 = arith.constant 0 : index
      %18 = vector.load %arg15[%c0_6, %c0_7] : memref<16x64xf32, #tpu.memory_space<vmem>>, vector<16x64xf32>
      tpu.vector_store %arg15[%c0_6, %c0_7], %17 {strides = array<i32>} : memref<16x64xf32, #tpu.memory_space<vmem>>, vector<16x64xf32>,
    } else {
    }
    %5 = arith.index_cast %arg0 : i32 to index
    %6 = memref.load %arg5[%5] : memref<2xi32, #tpu.memory_space<smem>>
    %c1_i32_0 = arith.constant 1 : i32
    %7 = arith.cmpi eq, %6, %c1_i32_0 : i32
    %8 = arith.extui %7 : i1 to i32
    %c0_i32_1 = arith.constant 0 : i32
    %9 = arith.cmpi ne, %8, %c0_i32_1 : i32
    scf.if %9 {
      %c0 = arith.constant 0 : index
      %c0_4 = arith.constant 0 : index
      %15 = vector.load %arg6[%c0, %c0_4] : memref<128x4xf32, #tpu.memory_space<vmem>>, vector<128x4xf32>
      %16 = math.exp %15 : vector<128x4xf32>
      %17 = vector.extract_strided_slice %16 {offsets = [0, 0], sizes = [128, 1], strides = [1, 1]} : vector<128x4xf32> to vector<128x1xf32>
      %18 = vector.shape_cast %17 : vector<128x1xf32> to vector<128x1xf32>
      %19 = vector.broadcast %18 : vector<128x1xf32> to vector<128x16xf32>
      %20 = vector.extract_strided_slice %16 {offsets = [0, 1], sizes = [128, 1], strides = [1, 1]} : vector<128x4xf32> to vector<128x1xf32>
      %21 = vector.shape_cast %20 : vector<128x1xf32> to vector<128x1xf32>
      %22 = vector.broadcast %21 : vector<128x1xf32> to vector<128x16xf32>
      %23 = vector.extract_strided_slice %16 {offsets = [0, 2], sizes = [128, 1], strides = [1, 1]} : vector<128x4xf32> to vector<128x1xf32>
      %24 = vector.shape_cast %23 : vector<128x1xf32> to vector<128x1xf32>
      %25 = vector.broadcast %24 : vector<128x1xf32> to vector<128x16xf32>
      %26 = vector.extract_strided_slice %16 {offsets = [0, 3], sizes = [128, 1], strides = [1, 1]} : vector<128x4xf32> to vector<128x1xf32>
      %27 = vector.shape_cast %26 : vector<128x1xf32> to vector<128x1xf32>
      %28 = vector.broadcast %27 : vector<128x1xf32> to vector<128x16xf32>
      %29 = tpu.concatenate %19, %22, %25, %28 in 1 : vector<128x16xf32>, vector<128x16xf32>, vector<128x16xf32>, vector<128x16xf32> -> vector<128x64xf32>
      %30 = arith.truncf %29 : vector<128x64xf32> to vector<128x64xbf16>
      %c0_5 = arith.constant 0 : index
      %c0_6 = arith.constant 0 : index
      %31 = vector.load %arg7[%c0_5, %c0_6] : memref<128x64xbf16, #tpu.memory_space<vmem>>, vector<128x64xbf16>
      %32 = arith.mulf %30, %31 : vector<128x64xbf16>
      %33 = tpu.iota {dimensions = array<i32: 0>} : vector<16x1xi32>
      %34 = arith.index_cast %arg0 : i32 to index
      %35 = memref.load %arg1[%34] : memref<2xi32, #tpu.memory_space<smem>>
      %c16_i32 = arith.constant 16 : i32
      %36 = arith.muli %35, %c16_i32 : i32
      %37 = vector.broadcast %36 : i32 to vector<16x1xi32>
      %38 = arith.addi %33, %37 : vector<16x1xi32>
      %c0_7 = arith.constant 0 : index
      %c0_8 = arith.constant 0 : index
      %39 = vector.load %arg8[%c0_7, %c0_8] : memref<1x128xi32, #tpu.memory_space<vmem>>, vector<1x128xi32>
      %40 = vector.broadcast %38 : vector<16x1xi32> to vector<16x128xi32>
      %41 = vector.broadcast %39 : vector<1x128xi32> to vector<16x128xi32>
      %42 = arith.cmpi eq, %40, %41 : vector<16x128xi32>
      %43 = arith.extui %42 : vector<16x128xi1> to vector<16x128xi32>
      %44 = arith.sitofp %43 : vector<16x128xi32> to vector<16x128xf32>
      %45 = arith.truncf %44 : vector<16x128xf32> to vector<16x128xbf16>
      %c0_9 = arith.constant 0 : index
      %c0_10 = arith.constant 0 : index
      %46 = vector.load %arg14[%c0_9, %c0_10] : memref<16x64xf32, #tpu.memory_space<vmem>>, vector<16x64xf32>
      %cst = arith.constant dense<0.000000e+00> : vector<16x64xf32>
      %47 = tpu.matmul %45, %32, %cst {dimension_numbers = #tpu.dot_dimension_numbers<[1], [0], [0], [1], [0, 0, 1, 1], [], []>} : vector<16x128xbf16>, vector<128x64xbf16>, vector<16x64xf32> -> vector<16x64xf32>
      %48 = arith.addf %46, %47 : vector<16x64xf32>
      %c0_11 = arith.constant 0 : index
      %c0_12 = arith.constant 0 : index
      %49 = vector.load %arg14[%c0_11, %c0_12] : memref<16x64xf32, #tpu.memory_space<vmem>>, vector<16x64xf32>
      tpu.vector_store %arg14[%c0_11, %c0_12], %48 {strides = array<i32>} : memref<16x64xf32, #tpu.memory_space<vmem>>, vector<16x64xf32>,
      %c0_13 = arith.constant 0 : index
      %c0_14 = arith.constant 0 : index
      %50 = vector.load %arg15[%c0_13, %c0_14] : memref<16x64xf32, #tpu.memory_space<vmem>>, vector<16x64xf32>
      %cst_15 = arith.constant dense<0.000000e+00> : vector<16x64xf32>
      %51 = tpu.matmul %45, %30, %cst_15 {dimension_numbers = #tpu.dot_dimension_numbers<[1], [0], [0], [1], [0, 0, 1, 1], [], []>} : vector<16x128xbf16>, vector<128x64xbf16>, vector<16x64xf32> -> vector<16x64xf32>
      %52 = arith.addf %50, %51 : vector<16x64xf32>
      %c0_16 = arith.constant 0 : index
      %c0_17 = arith.constant 0 : index
      %53 = vector.load %arg15[%c0_16, %c0_17] : memref<16x64xf32, #tpu.memory_space<vmem>>, vector<16x64xf32>
      tpu.vector_store %arg15[%c0_16, %c0_17], %52 {strides = array<i32>} : memref<16x64xf32, #tpu.memory_space<vmem>>, vector<16x64xf32>,
    } else {
    }
    %10 = arith.index_cast %arg0 : i32 to index
    %11 = memref.load %arg4[%10] : memref<2xi32, #tpu.memory_space<smem>>
    %c1_i32_2 = arith.constant 1 : i32
    %12 = arith.cmpi eq, %11, %c1_i32_2 : i32
    %13 = arith.extui %12 : i1 to i32
    %c0_i32_3 = arith.constant 0 : i32
    %14 = arith.cmpi ne, %13, %c0_i32_3 : i32
    scf.if %14 {
      %c0 = arith.constant 0 : index
      %c0_4 = arith.constant 0 : index
      %15 = vector.load %arg15[%c0, %c0_4] : memref<16x64xf32, #tpu.memory_space<vmem>>, vector<16x64xf32>
      %cst = arith.constant 0.000000e+00 : f32
      %16 = vector.broadcast %cst : f32 to vector<16x64xf32>
      %17 = arith.cmpf ogt, %15, %16 : vector<16x64xf32>
      %18 = tpu.reciprocal %15 {approx = true} : vector<16x64xf32> -> vector<16x64xf32>
      %cst_5 = arith.constant 0.000000e+00 : f32
      %19 = vector.broadcast %cst_5 : f32 to vector<16x64xf32>
      %20 = arith.select %17, %18, %19 : vector<16x64xi1>, vector<16x64xf32>
      %c0_6 = arith.constant 0 : index
      %c0_7 = arith.constant 0 : index
      %21 = vector.load %arg14[%c0_6, %c0_7] : memref<16x64xf32, #tpu.memory_space<vmem>>, vector<16x64xf32>
      %22 = arith.mulf %21, %20 : vector<16x64xf32>
      %c0_8 = arith.constant 0 : index
      %c0_9 = arith.constant 0 : index
      %23 = vector.load %arg10[%c0_8, %c0_9] : memref<1x64xf32, #tpu.memory_space<vmem>>, vector<1x64xf32>
      %24 = vector.broadcast %23 : vector<1x64xf32> to vector<16x64xf32>
      %25 = arith.addf %22, %24 : vector<16x64xf32>
      %cst_10 = arith.constant dense<0.000000e+00> : vector<16xf32>
      %26 = vector.multi_reduction <add>, %25, %cst_10 [1] : vector<16x64xf32> to vector<16xf32>
      %27 = vector.shape_cast %26 : vector<16xf32> to vector<16x1xf32>
      %cst_11 = arith.constant 6.400000e+01 : f32
      %28 = vector.broadcast %cst_11 : f32 to vector<16x1xf32>
      %29 = arith.divf %27, %28 : vector<16x1xf32>
      %30 = vector.broadcast %29 : vector<16x1xf32> to vector<16x64xf32>
      %31 = arith.subf %25, %30 : vector<16x64xf32>
      %32 = arith.mulf %31, %31 : vector<16x64xf32>
      %cst_12 = arith.constant dense<0.000000e+00> : vector<16xf32>
      %33 = vector.multi_reduction <add>, %32, %cst_12 [1] : vector<16x64xf32> to vector<16xf32>
      %34 = vector.shape_cast %33 : vector<16xf32> to vector<16x1xf32>
      %cst_13 = arith.constant 6.400000e+01 : f32
      %35 = vector.broadcast %cst_13 : f32 to vector<16x1xf32>
      %36 = arith.divf %34, %35 : vector<16x1xf32>
      %37 = vector.broadcast %29 : vector<16x1xf32> to vector<16x64xf32>
      %38 = arith.subf %25, %37 : vector<16x64xf32>
      %cst_14 = arith.constant 9.99999974E-6 : f32
      %39 = vector.broadcast %cst_14 : f32 to vector<16x1xf32>
      %40 = arith.addf %36, %39 : vector<16x1xf32>
      %41 = math.rsqrt %40 : vector<16x1xf32>
      %42 = vector.broadcast %41 : vector<16x1xf32> to vector<16x64xf32>
      %43 = arith.mulf %38, %42 : vector<16x64xf32>
      %c0_15 = arith.constant 0 : index
      %c0_16 = arith.constant 0 : index
      %44 = vector.load %arg11[%c0_15, %c0_16] : memref<1x64xf32, #tpu.memory_space<vmem>>, vector<1x64xf32>
      %45 = vector.broadcast %44 : vector<1x64xf32> to vector<16x64xf32>
      %46 = arith.mulf %43, %45 : vector<16x64xf32>
      %c0_17 = arith.constant 0 : index
      %c0_18 = arith.constant 0 : index
      %47 = vector.load %arg12[%c0_17, %c0_18] : memref<1x64xf32, #tpu.memory_space<vmem>>, vector<1x64xf32>
      %48 = vector.broadcast %47 : vector<1x64xf32> to vector<16x64xf32>
      %49 = arith.addf %46, %48 : vector<16x64xf32>
      %cst_19 = arith.constant 0.000000e+00 : f32
      %50 = vector.broadcast %cst_19 : f32 to vector<16x64xf32>
      %51 = arith.maximumf %49, %50 : vector<16x64xf32>
      %c0_20 = arith.constant 0 : index
      %c0_21 = arith.constant 0 : index
      %52 = vector.load %arg9[%c0_20, %c0_21] : memref<16x64xf32, #tpu.memory_space<vmem>>, vector<16x64xf32>
      %53 = arith.addf %51, %52 : vector<16x64xf32>
      %c0_22 = arith.constant 0 : index
      %c0_23 = arith.constant 0 : index
      %54 = vector.load %arg13[%c0_22, %c0_23] : memref<16x64xf32, #tpu.memory_space<vmem>>, vector<16x64xf32>
      tpu.vector_store %arg13[%c0_22, %c0_23], %53 {strides = array<i32>} : memref<16x64xf32, #tpu.memory_space<vmem>>, vector<16x64xf32>,
    } else {
    }
    return
  }
  func.func @transform_0(%arg0: i32, %arg1: memref<2xi32, #tpu.memory_space<smem>>, %arg2: memref<2xi32, #tpu.memory_space<smem>>, %arg3: memref<2xi32, #tpu.memory_space<smem>>, %arg4: memref<2xi32, #tpu.memory_space<smem>>, %arg5: memref<2xi32, #tpu.memory_space<smem>>) -> (i32, i32) {
    %0 = arith.index_cast %arg0 : i32 to index
    %1 = memref.load %arg2[%0] : memref<2xi32, #tpu.memory_space<smem>>
    %c0_i32 = arith.constant 0 : i32
    %c0_i32_0 = arith.constant 0 : i32
    return %1, %c0_i32 : i32, i32
  }
  func.func @transform_1(%arg0: i32, %arg1: memref<2xi32, #tpu.memory_space<smem>>, %arg2: memref<2xi32, #tpu.memory_space<smem>>, %arg3: memref<2xi32, #tpu.memory_space<smem>>, %arg4: memref<2xi32, #tpu.memory_space<smem>>, %arg5: memref<2xi32, #tpu.memory_space<smem>>) -> (i32, i32) {
    %0 = arith.index_cast %arg0 : i32 to index
    %1 = memref.load %arg2[%0] : memref<2xi32, #tpu.memory_space<smem>>
    %c0_i32 = arith.constant 0 : i32
    %c0_i32_0 = arith.constant 0 : i32
    return %1, %c0_i32 : i32, i32
  }
  func.func @transform_2(%arg0: i32, %arg1: memref<2xi32, #tpu.memory_space<smem>>, %arg2: memref<2xi32, #tpu.memory_space<smem>>, %arg3: memref<2xi32, #tpu.memory_space<smem>>, %arg4: memref<2xi32, #tpu.memory_space<smem>>, %arg5: memref<2xi32, #tpu.memory_space<smem>>) -> (i32, i32) {
    %0 = arith.index_cast %arg0 : i32 to index
    %1 = memref.load %arg2[%0] : memref<2xi32, #tpu.memory_space<smem>>
    %c0_i32 = arith.constant 0 : i32
    %c0_i32_0 = arith.constant 0 : i32
    return %c0_i32, %1 : i32, i32
  }
  func.func @transform_3(%arg0: i32, %arg1: memref<2xi32, #tpu.memory_space<smem>>, %arg2: memref<2xi32, #tpu.memory_space<smem>>, %arg3: memref<2xi32, #tpu.memory_space<smem>>, %arg4: memref<2xi32, #tpu.memory_space<smem>>, %arg5: memref<2xi32, #tpu.memory_space<smem>>) -> (i32, i32) {
    %0 = arith.index_cast %arg0 : i32 to index
    %1 = memref.load %arg1[%0] : memref<2xi32, #tpu.memory_space<smem>>
    %c0_i32 = arith.constant 0 : i32
    %c0_i32_0 = arith.constant 0 : i32
    return %1, %c0_i32 : i32, i32
  }
  func.func @transform_4(%arg0: i32, %arg1: memref<2xi32, #tpu.memory_space<smem>>, %arg2: memref<2xi32, #tpu.memory_space<smem>>, %arg3: memref<2xi32, #tpu.memory_space<smem>>, %arg4: memref<2xi32, #tpu.memory_space<smem>>, %arg5: memref<2xi32, #tpu.memory_space<smem>>) -> (i32, i32) {
    %c0_i32 = arith.constant 0 : i32
    %c0_i32_0 = arith.constant 0 : i32
    %c0_i32_1 = arith.constant 0 : i32
    return %c0_i32, %c0_i32_0 : i32, i32
  }
  func.func @transform_5(%arg0: i32, %arg1: memref<2xi32, #tpu.memory_space<smem>>, %arg2: memref<2xi32, #tpu.memory_space<smem>>, %arg3: memref<2xi32, #tpu.memory_space<smem>>, %arg4: memref<2xi32, #tpu.memory_space<smem>>, %arg5: memref<2xi32, #tpu.memory_space<smem>>) -> (i32, i32) {
    %c0_i32 = arith.constant 0 : i32
    %c0_i32_0 = arith.constant 0 : i32
    %c0_i32_1 = arith.constant 0 : i32
    return %c0_i32, %c0_i32_0 : i32, i32
  }
  func.func @transform_6(%arg0: i32, %arg1: memref<2xi32, #tpu.memory_space<smem>>, %arg2: memref<2xi32, #tpu.memory_space<smem>>, %arg3: memref<2xi32, #tpu.memory_space<smem>>, %arg4: memref<2xi32, #tpu.memory_space<smem>>, %arg5: memref<2xi32, #tpu.memory_space<smem>>) -> (i32, i32) {
    %c0_i32 = arith.constant 0 : i32
    %c0_i32_0 = arith.constant 0 : i32
    %c0_i32_1 = arith.constant 0 : i32
    return %c0_i32, %c0_i32_0 : i32, i32
  }
  func.func @transform_7(%arg0: i32, %arg1: memref<2xi32, #tpu.memory_space<smem>>, %arg2: memref<2xi32, #tpu.memory_space<smem>>, %arg3: memref<2xi32, #tpu.memory_space<smem>>, %arg4: memref<2xi32, #tpu.memory_space<smem>>, %arg5: memref<2xi32, #tpu.memory_space<smem>>) -> (i32, i32) {
    %0 = arith.index_cast %arg0 : i32 to index
    %1 = memref.load %arg1[%0] : memref<2xi32, #tpu.memory_space<smem>>
    %c0_i32 = arith.constant 0 : i32
    %c0_i32_0 = arith.constant 0 : i32
    return %1, %c0_i32 : i32, i32
  }
}

module attributes {stable_mosaic.version = 11 : i64} {
  func.func @_edge_update_kernel(%arg0: i32, %arg1: memref<128x64xbf16, #tpu.memory_space<vmem>>, %arg2: memref<128x64xbf16, #tpu.memory_space<vmem>>, %arg3: memref<128x64xf32, #tpu.memory_space<vmem>>, %arg4: memref<64x192xbf16, #tpu.memory_space<vmem>>, %arg5: memref<64x192xbf16, #tpu.memory_space<vmem>>, %arg6: memref<64x192xbf16, #tpu.memory_space<vmem>>, %arg7: memref<1x192xf32, #tpu.memory_space<vmem>>, %arg8: memref<1x192xf32, #tpu.memory_space<vmem>>, %arg9: memref<1x192xf32, #tpu.memory_space<vmem>>, %arg10: memref<192x64xbf16, #tpu.memory_space<vmem>>, %arg11: memref<1x64xf32, #tpu.memory_space<vmem>>, %arg12: memref<128x64xf32, #tpu.memory_space<vmem>>) attributes {dimension_semantics = [#tpu.dimension_semantics<parallel>], iteration_bounds = array<i64: 1>, scalar_prefetch = 0 : i64, scratch_operands = 0 : i64, tpu.core_type = #tpu.core_type<tc>, window_params = [{transform_indices = @transform_0, window_bounds = array<i64: 128, 64>}, {transform_indices = @transform_1, window_bounds = array<i64: 128, 64>}, {transform_indices = @transform_2, window_bounds = array<i64: 128, 64>}, {pipeline_mode = #tpu.pipeline_mode<synchronous>, transform_indices = @transform_3, window_bounds = array<i64: 64, 192>}, {pipeline_mode = #tpu.pipeline_mode<synchronous>, transform_indices = @transform_4, window_bounds = array<i64: 64, 192>}, {pipeline_mode = #tpu.pipeline_mode<synchronous>, transform_indices = @transform_5, window_bounds = array<i64: 64, 192>}, {pipeline_mode = #tpu.pipeline_mode<synchronous>, transform_indices = @transform_6, window_bounds = array<i64: 1, 192>}, {pipeline_mode = #tpu.pipeline_mode<synchronous>, transform_indices = @transform_7, window_bounds = array<i64: 1, 192>}, {pipeline_mode = #tpu.pipeline_mode<synchronous>, transform_indices = @transform_8, window_bounds = array<i64: 1, 192>}, {pipeline_mode = #tpu.pipeline_mode<synchronous>, transform_indices = @transform_9, window_bounds = array<i64: 192, 64>}, {pipeline_mode = #tpu.pipeline_mode<synchronous>, transform_indices = @transform_10, window_bounds = array<i64: 1, 64>}, {transform_indices = @transform_11, window_bounds = array<i64: 128, 64>}]} {
    %c0 = arith.constant 0 : index
    %c0_0 = arith.constant 0 : index
    %0 = vector.load %arg3[%c0, %c0_0] : memref<128x64xf32, #tpu.memory_space<vmem>>, vector<128x64xf32>
    %c0_1 = arith.constant 0 : index
    %c0_2 = arith.constant 0 : index
    %1 = vector.load %arg1[%c0_1, %c0_2] : memref<128x64xbf16, #tpu.memory_space<vmem>>, vector<128x64xbf16>
    %c0_3 = arith.constant 0 : index
    %c0_4 = arith.constant 0 : index
    %2 = vector.load %arg4[%c0_3, %c0_4] : memref<64x192xbf16, #tpu.memory_space<vmem>>, vector<64x192xbf16>
    %cst = arith.constant dense<0.000000e+00> : vector<128x192xf32>
    %3 = tpu.matmul %1, %2, %cst {dimension_numbers = #tpu.dot_dimension_numbers<[1], [0], [0], [1], [0, 0, 1, 1], [], []>} : vector<128x64xbf16>, vector<64x192xbf16>, vector<128x192xf32> -> vector<128x192xf32>
    %c0_5 = arith.constant 0 : index
    %c0_6 = arith.constant 0 : index
    %4 = vector.load %arg2[%c0_5, %c0_6] : memref<128x64xbf16, #tpu.memory_space<vmem>>, vector<128x64xbf16>
    %c0_7 = arith.constant 0 : index
    %c0_8 = arith.constant 0 : index
    %5 = vector.load %arg5[%c0_7, %c0_8] : memref<64x192xbf16, #tpu.memory_space<vmem>>, vector<64x192xbf16>
    %cst_9 = arith.constant dense<0.000000e+00> : vector<128x192xf32>
    %6 = tpu.matmul %4, %5, %cst_9 {dimension_numbers = #tpu.dot_dimension_numbers<[1], [0], [0], [1], [0, 0, 1, 1], [], []>} : vector<128x64xbf16>, vector<64x192xbf16>, vector<128x192xf32> -> vector<128x192xf32>
    %7 = arith.addf %3, %6 : vector<128x192xf32>
    %8 = arith.truncf %0 : vector<128x64xf32> to vector<128x64xbf16>
    %c0_10 = arith.constant 0 : index
    %c0_11 = arith.constant 0 : index
    %9 = vector.load %arg6[%c0_10, %c0_11] : memref<64x192xbf16, #tpu.memory_space<vmem>>, vector<64x192xbf16>
    %cst_12 = arith.constant dense<0.000000e+00> : vector<128x192xf32>
    %10 = tpu.matmul %8, %9, %cst_12 {dimension_numbers = #tpu.dot_dimension_numbers<[1], [0], [0], [1], [0, 0, 1, 1], [], []>} : vector<128x64xbf16>, vector<64x192xbf16>, vector<128x192xf32> -> vector<128x192xf32>
    %11 = arith.addf %7, %10 : vector<128x192xf32>
    %c0_13 = arith.constant 0 : index
    %c0_14 = arith.constant 0 : index
    %12 = vector.load %arg7[%c0_13, %c0_14] : memref<1x192xf32, #tpu.memory_space<vmem>>, vector<1x192xf32>
    %13 = vector.broadcast %12 : vector<1x192xf32> to vector<128x192xf32>
    %14 = arith.addf %11, %13 : vector<128x192xf32>
    %cst_15 = arith.constant dense<0.000000e+00> : vector<128xf32>
    %15 = vector.multi_reduction <add>, %14, %cst_15 [1] : vector<128x192xf32> to vector<128xf32>
    %16 = vector.shape_cast %15 : vector<128xf32> to vector<128x1xf32>
    %cst_16 = arith.constant 1.920000e+02 : f32
    %17 = vector.broadcast %cst_16 : f32 to vector<128x1xf32>
    %18 = arith.divf %16, %17 : vector<128x1xf32>
    %19 = vector.broadcast %18 : vector<128x1xf32> to vector<128x192xf32>
    %20 = arith.subf %14, %19 : vector<128x192xf32>
    %21 = arith.mulf %20, %20 : vector<128x192xf32>
    %cst_17 = arith.constant dense<0.000000e+00> : vector<128xf32>
    %22 = vector.multi_reduction <add>, %21, %cst_17 [1] : vector<128x192xf32> to vector<128xf32>
    %23 = vector.shape_cast %22 : vector<128xf32> to vector<128x1xf32>
    %cst_18 = arith.constant 1.920000e+02 : f32
    %24 = vector.broadcast %cst_18 : f32 to vector<128x1xf32>
    %25 = arith.divf %23, %24 : vector<128x1xf32>
    %26 = vector.broadcast %18 : vector<128x1xf32> to vector<128x192xf32>
    %27 = arith.subf %14, %26 : vector<128x192xf32>
    %cst_19 = arith.constant 9.99999974E-6 : f32
    %28 = vector.broadcast %cst_19 : f32 to vector<128x1xf32>
    %29 = arith.addf %25, %28 : vector<128x1xf32>
    %30 = math.rsqrt %29 : vector<128x1xf32>
    %31 = vector.broadcast %30 : vector<128x1xf32> to vector<128x192xf32>
    %32 = arith.mulf %27, %31 : vector<128x192xf32>
    %c0_20 = arith.constant 0 : index
    %c0_21 = arith.constant 0 : index
    %33 = vector.load %arg8[%c0_20, %c0_21] : memref<1x192xf32, #tpu.memory_space<vmem>>, vector<1x192xf32>
    %34 = vector.broadcast %33 : vector<1x192xf32> to vector<128x192xf32>
    %35 = arith.mulf %32, %34 : vector<128x192xf32>
    %c0_22 = arith.constant 0 : index
    %c0_23 = arith.constant 0 : index
    %36 = vector.load %arg9[%c0_22, %c0_23] : memref<1x192xf32, #tpu.memory_space<vmem>>, vector<1x192xf32>
    %37 = vector.broadcast %36 : vector<1x192xf32> to vector<128x192xf32>
    %38 = arith.addf %35, %37 : vector<128x192xf32>
    %cst_24 = arith.constant 0.000000e+00 : f32
    %39 = vector.broadcast %cst_24 : f32 to vector<128x192xf32>
    %40 = arith.maximumf %38, %39 : vector<128x192xf32>
    %41 = arith.truncf %40 : vector<128x192xf32> to vector<128x192xbf16>
    %c0_25 = arith.constant 0 : index
    %c0_26 = arith.constant 0 : index
    %42 = vector.load %arg10[%c0_25, %c0_26] : memref<192x64xbf16, #tpu.memory_space<vmem>>, vector<192x64xbf16>
    %cst_27 = arith.constant dense<0.000000e+00> : vector<128x64xf32>
    %43 = tpu.matmul %41, %42, %cst_27 {dimension_numbers = #tpu.dot_dimension_numbers<[1], [0], [0], [1], [0, 0, 1, 1], [], []>} : vector<128x192xbf16>, vector<192x64xbf16>, vector<128x64xf32> -> vector<128x64xf32>
    %c0_28 = arith.constant 0 : index
    %c0_29 = arith.constant 0 : index
    %44 = vector.load %arg11[%c0_28, %c0_29] : memref<1x64xf32, #tpu.memory_space<vmem>>, vector<1x64xf32>
    %45 = vector.broadcast %44 : vector<1x64xf32> to vector<128x64xf32>
    %46 = arith.addf %43, %45 : vector<128x64xf32>
    %47 = arith.addf %46, %0 : vector<128x64xf32>
    %cst_30 = arith.constant 0.000000e+00 : f32
    %48 = vector.broadcast %cst_30 : f32 to vector<128x64xf32>
    %49 = arith.maximumf %47, %48 : vector<128x64xf32>
    %c0_31 = arith.constant 0 : index
    %c0_32 = arith.constant 0 : index
    %50 = vector.load %arg12[%c0_31, %c0_32] : memref<128x64xf32, #tpu.memory_space<vmem>>, vector<128x64xf32>
    tpu.vector_store %arg12[%c0_31, %c0_32], %49 {strides = array<i32>} : memref<128x64xf32, #tpu.memory_space<vmem>>, vector<128x64xf32>,
    return
  }
  func.func @transform_0(%arg0: i32) -> (i32, i32) {
    %c0_i32 = arith.constant 0 : i32
    %c0_i32_0 = arith.constant 0 : i32
    return %arg0, %c0_i32 : i32, i32
  }
  func.func @transform_1(%arg0: i32) -> (i32, i32) {
    %c0_i32 = arith.constant 0 : i32
    %c0_i32_0 = arith.constant 0 : i32
    return %arg0, %c0_i32 : i32, i32
  }
  func.func @transform_2(%arg0: i32) -> (i32, i32) {
    %c0_i32 = arith.constant 0 : i32
    %c0_i32_0 = arith.constant 0 : i32
    return %arg0, %c0_i32 : i32, i32
  }
  func.func @transform_3(%arg0: i32) -> (i32, i32) {
    %c0_i32 = arith.constant 0 : i32
    %c0_i32_0 = arith.constant 0 : i32
    %c0_i32_1 = arith.constant 0 : i32
    return %c0_i32, %c0_i32_0 : i32, i32
  }
  func.func @transform_4(%arg0: i32) -> (i32, i32) {
    %c0_i32 = arith.constant 0 : i32
    %c0_i32_0 = arith.constant 0 : i32
    %c0_i32_1 = arith.constant 0 : i32
    return %c0_i32, %c0_i32_0 : i32, i32
  }
  func.func @transform_5(%arg0: i32) -> (i32, i32) {
    %c0_i32 = arith.constant 0 : i32
    %c0_i32_0 = arith.constant 0 : i32
    %c0_i32_1 = arith.constant 0 : i32
    return %c0_i32, %c0_i32_0 : i32, i32
  }
  func.func @transform_6(%arg0: i32) -> (i32, i32) {
    %c0_i32 = arith.constant 0 : i32
    %c0_i32_0 = arith.constant 0 : i32
    %c0_i32_1 = arith.constant 0 : i32
    return %c0_i32, %c0_i32_0 : i32, i32
  }
  func.func @transform_7(%arg0: i32) -> (i32, i32) {
    %c0_i32 = arith.constant 0 : i32
    %c0_i32_0 = arith.constant 0 : i32
    %c0_i32_1 = arith.constant 0 : i32
    return %c0_i32, %c0_i32_0 : i32, i32
  }
  func.func @transform_8(%arg0: i32) -> (i32, i32) {
    %c0_i32 = arith.constant 0 : i32
    %c0_i32_0 = arith.constant 0 : i32
    %c0_i32_1 = arith.constant 0 : i32
    return %c0_i32, %c0_i32_0 : i32, i32
  }
  func.func @transform_9(%arg0: i32) -> (i32, i32) {
    %c0_i32 = arith.constant 0 : i32
    %c0_i32_0 = arith.constant 0 : i32
    %c0_i32_1 = arith.constant 0 : i32
    return %c0_i32, %c0_i32_0 : i32, i32
  }
  func.func @transform_10(%arg0: i32) -> (i32, i32) {
    %c0_i32 = arith.constant 0 : i32
    %c0_i32_0 = arith.constant 0 : i32
    %c0_i32_1 = arith.constant 0 : i32
    return %c0_i32, %c0_i32_0 : i32, i32
  }
  func.func @transform_11(%arg0: i32) -> (i32, i32) {
    %c0_i32 = arith.constant 0 : i32
    %c0_i32_0 = arith.constant 0 : i32
    return %arg0, %c0_i32 : i32, i32
  }
}

</mosaic_0001>

<llo_original>
// kernel: gat_base_forward.12
$region0: #{gat_base_forward.12}
  #allocation0 [shape = 'u32[]', space=smem, size = 0x4, offset = 0x4, fixed_abs, tag = 'smem constant byte address 0x4 - core index']
  #allocation1 [shape = 'u32[72,128]{1,0:T(1,128)}', space=vmem, size = 0x9000, scoped, tag = 'internal scratch']
  %s0 = inlined_call_operand.vmem [shape: bf16[16,64], index: 0, kind: input, shape index: {}]
  %s1 = inlined_call_operand.vmem [shape: bf16[64,128], index: 1, kind: input, shape index: {}]
  %s2 = inlined_call_operand.vmem [shape: f32[16,128], index: 2, kind: output, shape index: {}]
  %s3 = sld [smem:[#allocation0]]
  $region18: #{gat_base_forward.12} parent=0
    _
  %s5 = ssub.s32 1, %s3
  %s6 = scalar_select 0, %s5, %s3
  // Predicated region
  $region2: #{gat_base_forward.12} parent=0 // pred_check
    _
  $region3: #{gat_base_forward.12} parent=0 // pred_check_branch
    %8 = sbr.rel (0) target = $region5
  $region4: #{gat_base_forward.12} parent=0 // pred_region
    _
  $region5: #{gat_base_forward.12} parent=0 // pred_fallthru
    _
  // Predicated region
  $region6: #{gat_base_forward.12} parent=0 // pred_check
    _
  $region7: #{gat_base_forward.12} parent=0 // pred_check_branch
    %10 = sbr.rel (0) target = $region9
  $region8: #{gat_base_forward.12} parent=0 // pred_region
    _
  $region9: #{gat_base_forward.12} parent=0 // pred_fallthru
    _
  %v12 = vld [vmem:[%s0] sm:$0xf]
  %v13 = vld [vmem:[%s0 + $0x4] sm:$0xf]
  %v14 = vld [vmem:[%s1] sm:$0xf]
  %v15 = vld [vmem:[%s1 + $0x4] sm:$0xf]
  %v16 = vld [vmem:[%s1 + $0x8] sm:$0xf]
  %v17 = vld [vmem:[%s1 + $0xc] sm:$0xf]
  %v18 = vld [vmem:[%s1 + $0x10] sm:$0xf]
  %v19 = vld [vmem:[%s1 + $0x14] sm:$0xf]
  %v20 = vld [vmem:[%s1 + $0x18] sm:$0xf]
  %v21 = vld [vmem:[%s1 + $0x1c] sm:$0xf]
  %v24 = vunpack.c.l.b16 %v12
  %v25 = vunpack.c.l.b16 %v13
  %v26 = vpack.c.b16 %v25, %v24
  %v35 = vunpack.c.l.b16 %v14
  %v36 = vunpack.c.l.b16 %v15
  %v37 = vunpack.c.l.b16 %v16
  %v38 = vunpack.c.l.b16 %v17
  %v39 = vunpack.c.l.b16 %v18
  %v40 = vunpack.c.l.b16 %v19
  %v41 = vunpack.c.l.b16 %v20
  %v42 = vunpack.c.l.b16 %v21
  %v43 = vpack.c.b16 %v36, %v35
  %v44 = vpack.c.b16 %v38, %v37
  %v45 = vpack.c.b16 %v40, %v39
  %v46 = vpack.c.b16 %v42, %v41
  %vm51 = vcmask 523264
  %v53 = vsel %vm51, %v26, 0
  %55 = vmatpush.bf16.msra.mxu0 0
  %56 = vmatpush.bf16.msra.mxu0 0
  %57 = vmatpush.bf16.msra.mxu0 0
  %58 = vmatpush.bf16.msra.mxu0 0
  %59 = vmatpush.bf16.msra.mxu0 %v46
  %60 = vmatpush.bf16.msra.mxu0 %v45
  %61 = vmatpush.bf16.msra.mxu0 %v44
  %62 = vmatpush.bf16.msra.mxu0 %v43
  %63 = vmatmul.bf16.gmra.mxu0 %v53
  %v64 = vpop.f32.mrf.mxu0
  %v65 = vadd.f32 0.0, %v64
  %v66 = vpop.f32.mrf.mxu0
  %v67 = vadd.f32 0.0, %v66
  %68 = vdwg.mxu0
  %69 = vst [vmem:[%s2] sm:$0xff] %v65
  %70 = vst [vmem:[%s2 + $0x8] sm:$0xff] %v67
  // Predicated region
  $region10: #{gat_base_forward.12} parent=0 // pred_check
    _
  $region11: #{gat_base_forward.12} parent=0 // pred_check_branch
    %72 = sbr.rel (0) target = $region13
  $region12: #{gat_base_forward.12} parent=0 // pred_region
    _
  $region13: #{gat_base_forward.12} parent=0 // pred_fallthru
    _
  // Predicated region
  $region14: #{gat_base_forward.12} parent=0 // pred_check
    _
  $region15: #{gat_base_forward.12} parent=0 // pred_check_branch
    %74 = sbr.rel (0) target = $region17
  $region16: #{gat_base_forward.12} parent=0 // pred_region
    _
  $region17: #{gat_base_forward.12} parent=0 // pred_fallthru
    _

// kernel: sub.22
$region0: #{sub.22}
  #allocation0 [shape = 's32[1]{0}', space=sflag, size = 0x4, scoped, tag = 'scoped memory for sub.22']
  %s0 = inlined_call_operand.vmem [shape: f32[32,4], index: 0, kind: input, shape index: {}]
  %s1 = inlined_call_operand.vmem [shape: f32[32,4], index: 1, kind: input, shape index: {}]
  %s2 = inlined_call_operand.vmem [shape: f32[32,4], index: 2, kind: output, shape index: {}]
  %v3 = vld [vmem:[%s0] sm:$0xff]
  %v4 = vld [vmem:[%s1] sm:$0xff]
  %5 = xla_tuple %v3, %v4
  %6 = xla_tuple %5
  %v7 = vsub.f32 %v3, %v4
  %8 = xla_tuple %v7
  %9 = vst [vmem:[%s2] sm:$0xff] %v7
  %s10 = scalar_lea.vmem %s0, 8
  %v11 = vld [vmem:[%s10] sm:$0xff]
  %s12 = scalar_lea.vmem %s1, 8
  %v13 = vld [vmem:[%s12] sm:$0xff]
  %14 = xla_tuple %v11, %v13
  %15 = xla_tuple %14
  %v16 = vsub.f32 %v11, %v13
  %17 = xla_tuple %v16
  %s18 = scalar_lea.vmem %s2, 8
  %19 = vst [vmem:[%s18] sm:$0xff] %v16
  %s20 = scalar_lea.vmem %s0, 16
  %v21 = vld [vmem:[%s20] sm:$0xff]
  %s22 = scalar_lea.vmem %s1, 16
  %v23 = vld [vmem:[%s22] sm:$0xff]
  %24 = xla_tuple %v21, %v23
  %25 = xla_tuple %24
  %v26 = vsub.f32 %v21, %v23
  %27 = xla_tuple %v26
  %s28 = scalar_lea.vmem %s2, 16
  %29 = vst [vmem:[%s28] sm:$0xff] %v26
  %s30 = scalar_lea.vmem %s0, 24
  %v31 = vld [vmem:[%s30] sm:$0xff]
  %s32 = scalar_lea.vmem %s1, 24
  %v33 = vld [vmem:[%s32] sm:$0xff]
  %34 = xla_tuple %v31, %v33
  %35 = xla_tuple %34
  %v36 = vsub.f32 %v31, %v33
  %37 = xla_tuple %v36
  %s38 = scalar_lea.vmem %s2, 24
  %39 = vst [vmem:[%s38] sm:$0xff] %v36

// kernel: gat_base_forward.13
$region0: #{gat_base_forward.13}
  #allocation0 [shape = 'u32[]', space=smem, size = 0x4, offset = 0x4, fixed_abs, tag = 'smem constant byte address 0x4 - core index']
  #allocation1 [shape = 'u32[72,128]{1,0:T(1,128)}', space=vmem, size = 0x9000, scoped, tag = 'internal scratch']
  #allocation2 [shape = 'f32[16,64]{1,0:T(8,128)}', space=vmem, size = 0x2000, scoped, tag = 'scratch operand']
  #allocation3 [shape = 'f32[16,64]{1,0:T(8,128)}', space=vmem, size = 0x2000, scoped, tag = 'scratch operand']
  #allocation4 [shape = 's32[1]{0}', space=sflag, size = 0x4, scoped, tag = 'scoped memory for gat_base_forward.13']
  #allocation5 [shape = 'u8[512]{0}', space=smem, size = 0x200, scoped, tag = 'prefetched SMEM operand 0']
  #allocation6 [shape = 'u8[512]{0}', space=smem, size = 0x200, scoped, tag = 'prefetched SMEM operand 1']
  #allocation7 [shape = 'u8[512]{0}', space=smem, size = 0x200, scoped, tag = 'prefetched SMEM operand 2']
  #allocation8 [shape = 'u8[512]{0}', space=smem, size = 0x200, scoped, tag = 'prefetched SMEM operand 3']
  #allocation9 [shape = 'u8[512]{0}', space=smem, size = 0x200, scoped, tag = 'prefetched SMEM operand 4']
  %s0 = inlined_call_operand.vmem [shape: s32[2], index: 0, kind: input, shape index: {}]
  %s1 = inlined_call_operand.vmem [shape: s32[2], index: 1, kind: input, shape index: {}]
  %s2 = inlined_call_operand.vmem [shape: s32[2], index: 2, kind: input, shape index: {}]
  %s3 = inlined_call_operand.vmem [shape: s32[2], index: 3, kind: input, shape index: {}]
  %s4 = inlined_call_operand.vmem [shape: s32[2], index: 4, kind: input, shape index: {}]
  %s5 = inlined_call_operand.vmem [shape: f32[128,4], index: 5, kind: input, shape index: {}]
  %s6 = inlined_call_operand.vmem [shape: bf16[128,64], index: 6, kind: input, shape index: {}]
  %s7 = inlined_call_operand.vmem [shape: s32[1,128], index: 7, kind: input, shape index: {}]
  %s8 = inlined_call_operand.vmem [shape: f32[16,64], index: 8, kind: input, shape index: {}]
  %s9 = inlined_call_operand.vmem [shape: f32[1,64], index: 9, kind: input, shape index: {}]
  %s10 = inlined_call_operand.vmem [shape: f32[1,64], index: 10, kind: input, shape index: {}]
  %s11 = inlined_call_operand.vmem [shape: f32[1,64], index: 11, kind: input, shape index: {}]
  %s12 = inlined_call_operand.vmem [shape: f32[16,64], index: 12, kind: output, shape index: {}]
  %s13 = sld [smem:[#allocation0]]
  $region73: #{gat_base_forward.13} parent=0
    _
  %s15 = ssub.s32 1, %s13
  %s16 = scalar_select 0, %s15, %s13
  %s18 = sshll.u32 %s0, 4
  %s19 = int_to_ptr.vmem [resolvable:$true] %s18
  %21 = dma.vmem_to_smem %s19, 16, [#allocation5], [#allocation4]
  %s23 = sshll.u32 %s1, 4
  %s24 = int_to_ptr.vmem [resolvable:$true] %s23
  %26 = dma.vmem_to_smem %s24, 16, [#allocation6], [#allocation4]
  %s28 = sshll.u32 %s2, 4
  %s29 = int_to_ptr.vmem [resolvable:$true] %s28
  %31 = dma.vmem_to_smem %s29, 16, [#allocation7], [#allocation4]
  %s33 = sshll.u32 %s3, 4
  %s34 = int_to_ptr.vmem [resolvable:$true] %s33
  %36 = dma.vmem_to_smem %s34, 16, [#allocation8], [#allocation4]
  %s38 = sshll.u32 %s4, 4
  %s39 = int_to_ptr.vmem [resolvable:$true] %s38
  %41 = dma.vmem_to_smem %s39, 16, [#allocation9], [#allocation4]
  %43 = dma.done [#allocation4], 80
  %44 = sfence
  loop: start=0, step=1, limit=4
  $region2: #{gat_base_forward.13} parent=0 // loop_pre_header
    _
  $region3: #{gat_base_forward.13} parent=0 // loop_header
    %s46 = sphi 0, %s50
    %p47 = scmp.ge.s32.totalorder %s46, 4
    %s58 = sphi 0, %s60
    %s61 = sphi 0, %s58
    %s62 = sphi 0, %s61
    %s78 = sphi 0, %s62
    %s86 = sphi 0, %s88
    %s89 = sphi 0, %s86
    %s90 = sphi 0, %s89
    %s106 = sphi 0, %s90
    %s114 = sphi 0, %s116
    %s117 = sphi 0, %s114
    %s118 = sphi 0, %s117
    %s134 = sphi 0, %s118
    %s142 = sphi 0, %s144
    %s145 = sphi 0, %s142
    %s146 = sphi 0, %s145
    %s162 = sphi 0, %s146
    %s166 = sphi 0, %s166
    %s168 = sphi 0, %s166
    %s169 = sphi 0, %s168
    %s183 = sphi 0, %s169
    %s187 = sphi 0, %s187
    %s189 = sphi 0, %s187
    %s190 = sphi 0, %s189
    %s204 = sphi 0, %s190
    %s208 = sphi 0, %s208
    %s210 = sphi 0, %s208
    %s211 = sphi 0, %s210
    %s225 = sphi 0, %s211
    %s233 = sphi 0, %s235
    %s236 = sphi 0, %s233
    %s237 = sphi 0, %s236
    %s253 = sphi 0, %s237
  $region4: #{gat_base_forward.13} parent=0 // loop_header_branch
    %49 = sbr.rel (%p47) target = $region8
  $region5: #{gat_base_forward.13} parent=0 // loop_body
    %s51 = ssub.s32 %s46, 1
    %s52 = ssub.s32 %s46, 2
    %s53 = sadd.s32 %s46, 1
    %s54 = sld [smem:[#allocation6 + %s46]]
    %s55 = sld [smem:[#allocation6 + %s53]]
    %s56 = ssub.s32 %s54, %s55
    %p57 = scmp.eq.s32.totalorder %s56, 0
    %s59 = sadd.s32 %s58, 1
    %s60 = scalar_select %p57, %s58, %s59
    %p63 = pneg %p57
    %p64 = scmp.eq.s32.totalorder %s46, 1
    %p65 = por %p63, %p64
    %p66 = scmp.ne.s32.totalorder %s58, %s61
    %p67 = scmp.eq.s32.totalorder %s46, 0
    %p68 = por %p66, %p67
    %p69 = scmp.ne.s32.totalorder %s58, %s61
    %p70 = scmp.eq.s32.totalorder %s51, 1
    %p71 = por %p69, %p70
    %p72 = scmp.ne.s32.totalorder %s61, %s62
    %p73 = scmp.eq.s32.totalorder %s51, 0
    %p74 = por %p72, %p73
    %p75 = scmp.ne.s32.totalorder %s61, %s62
    %p76 = scmp.eq.s32.totalorder %s52, 1
    %p77 = por %p75, %p76
    %p79 = scmp.ne.s32.totalorder %s62, %s78
    %p80 = scmp.eq.s32.totalorder %s52, 0
    %p81 = por %p79, %p80
    %s82 = sld [smem:[#allocation6 + %s46]]
    %s83 = sld [smem:[#allocation6 + %s53]]
    %s84 = ssub.s32 %s82, %s83
    %p85 = scmp.eq.s32.totalorder %s84, 0
    %s87 = sadd.s32 %s86, 1
    %s88 = scalar_select %p85, %s86, %s87
    %p91 = pneg %p85
    %p92 = scmp.eq.s32.totalorder %s46, 1
    %p93 = por %p91, %p92
    %p94 = scmp.ne.s32.totalorder %s86, %s89
    %p95 = scmp.eq.s32.totalorder %s46, 0
    %p96 = por %p94, %p95
    %p97 = scmp.ne.s32.totalorder %s86, %s89
    %p98 = scmp.eq.s32.totalorder %s51, 1
    %p99 = por %p97, %p98
    %p100 = scmp.ne.s32.totalorder %s89, %s90
    %p101 = scmp.eq.s32.totalorder %s51, 0
    %p102 = por %p100, %p101
    %p103 = scmp.ne.s32.totalorder %s89, %s90
    %p104 = scmp.eq.s32.totalorder %s52, 1
    %p105 = por %p103, %p104
    %p107 = scmp.ne.s32.totalorder %s90, %s106
    %p108 = scmp.eq.s32.totalorder %s52, 0
    %p109 = por %p107, %p108
    %s110 = sld [smem:[#allocation6 + %s46]]
    %s111 = sld [smem:[#allocation6 + %s53]]
    %s112 = ssub.s32 %s110, %s111
    %p113 = scmp.eq.s32.totalorder %s112, 0
    %s115 = sadd.s32 %s114, 1
    %s116 = scalar_select %p113, %s114, %s115
    %p119 = pneg %p113
    %p120 = scmp.eq.s32.totalorder %s46, 1
    %p121 = por %p119, %p120
    %p122 = scmp.ne.s32.totalorder %s114, %s117
    %p123 = scmp.eq.s32.totalorder %s46, 0
    %p124 = por %p122, %p123
    %p125 = scmp.ne.s32.totalorder %s114, %s117
    %p126 = scmp.eq.s32.totalorder %s51, 1
    %p127 = por %p125, %p126
    %p128 = scmp.ne.s32.totalorder %s117, %s118
    %p129 = scmp.eq.s32.totalorder %s51, 0
    %p130 = por %p128, %p129
    %p131 = scmp.ne.s32.totalorder %s117, %s118
    %p132 = scmp.eq.s32.totalorder %s52, 1
    %p133 = por %p131, %p132
    %p135 = scmp.ne.s32.totalorder %s118, %s134
    %p136 = scmp.eq.s32.totalorder %s52, 0
    %p137 = por %p135, %p136
    %s138 = sld [smem:[#allocation5 + %s46]]
    %s139 = sld [smem:[#allocation5 + %s53]]
    %s140 = ssub.s32 %s138, %s139
    %p141 = scmp.eq.s32.totalorder %s140, 0
    %s143 = sadd.s32 %s142, 1
    %s144 = scalar_select %p141, %s142, %s143
    %p147 = pneg %p141
    %p148 = scmp.eq.s32.totalorder %s46, 1
    %p149 = por %p147, %p148
    %p150 = scmp.ne.s32.totalorder %s142, %s145
    %p151 = scmp.eq.s32.totalorder %s46, 0
    %p152 = por %p150, %p151
    %p153 = scmp.ne.s32.totalorder %s142, %s145
    %p154 = scmp.eq.s32.totalorder %s51, 1
    %p155 = por %p153, %p154
    %p156 = scmp.ne.s32.totalorder %s145, %s146
    %p157 = scmp.eq.s32.totalorder %s51, 0
    %p158 = por %p156, %p157
    %p159 = scmp.ne.s32.totalorder %s145, %s146
    %p160 = scmp.eq.s32.totalorder %s52, 1
    %p161 = por %p159, %p160
    %p163 = scmp.ne.s32.totalorder %s146, %s162
    %p164 = scmp.eq.s32.totalorder %s52, 0
    %p165 = por %p163, %p164
    %s167 = sadd.s32 %s166, 1
    %p170 = scmp.eq.s32.totalorder %s46, 1
    %p171 = scmp.ne.s32.totalorder %s166, %s168
    %p172 = scmp.eq.s32.totalorder %s46, 0
    %p173 = por %p171, %p172
    %p174 = scmp.ne.s32.totalorder %s166, %s168
    %p175 = scmp.eq.s32.totalorder %s51, 1
    %p176 = por %p174, %p175
    %p177 = scmp.ne.s32.totalorder %s168, %s169
    %p178 = scmp.eq.s32.totalorder %s51, 0
    %p179 = por %p177, %p178
    %p180 = scmp.ne.s32.totalorder %s168, %s169
    %p181 = scmp.eq.s32.totalorder %s52, 1
    %p182 = por %p180, %p181
    %p184 = scmp.ne.s32.totalorder %s169, %s183
    %p185 = scmp.eq.s32.totalorder %s52, 0
    %p186 = por %p184, %p185
    %s188 = sadd.s32 %s187, 1
    %p191 = scmp.eq.s32.totalorder %s46, 1
    %p192 = scmp.ne.s32.totalorder %s187, %s189
    %p193 = scmp.eq.s32.totalorder %s46, 0
    %p194 = por %p192, %p193
    %p195 = scmp.ne.s32.totalorder %s187, %s189
    %p196 = scmp.eq.s32.totalorder %s51, 1
    %p197 = por %p195, %p196
    %p198 = scmp.ne.s32.totalorder %s189, %s190
    %p199 = scmp.eq.s32.totalorder %s51, 0
    %p200 = por %p198, %p199
    %p201 = scmp.ne.s32.totalorder %s189, %s190
    %p202 = scmp.eq.s32.totalorder %s52, 1
    %p203 = por %p201, %p202
    %p205 = scmp.ne.s32.totalorder %s190, %s204
    %p206 = scmp.eq.s32.totalorder %s52, 0
    %p207 = por %p205, %p206
    %s209 = sadd.s32 %s208, 1
    %p212 = scmp.eq.s32.totalorder %s46, 1
    %p213 = scmp.ne.s32.totalorder %s208, %s210
    %p214 = scmp.eq.s32.totalorder %s46, 0
    %p215 = por %p213, %p214
    %p216 = scmp.ne.s32.totalorder %s208, %s210
    %p217 = scmp.eq.s32.totalorder %s51, 1
    %p218 = por %p216, %p217
    %p219 = scmp.ne.s32.totalorder %s210, %s211
    %p220 = scmp.eq.s32.totalorder %s51, 0
    %p221 = por %p219, %p220
    %p222 = scmp.ne.s32.totalorder %s210, %s211
    %p223 = scmp.eq.s32.totalorder %s52, 1
    %p224 = por %p222, %p223
    %p226 = scmp.ne.s32.totalorder %s211, %s225
    %p227 = scmp.eq.s32.totalorder %s52, 0
    %p228 = por %p226, %p227
    %s229 = sld [smem:[#allocation5 + %s46]]
    %s230 = sld [smem:[#allocation5 + %s53]]
    %s231 = ssub.s32 %s229, %s230
    %p232 = scmp.eq.s32.totalorder %s231, 0
    %s234 = sadd.s32 %s233, 1
    %s235 = scalar_select %p232, %s233, %s234
    %p238 = pneg %p232
    %p239 = scmp.eq.s32.totalorder %s46, 1
    %p240 = por %p238, %p239
    %p241 = scmp.ne.s32.totalorder %s233, %s236
    %p242 = scmp.eq.s32.totalorder %s46, 0
    %p243 = por %p241, %p242
    %p244 = scmp.ne.s32.totalorder %s233, %s236
    %p245 = scmp.eq.s32.totalorder %s51, 1
    %p246 = por %p244, %p245
    %p247 = scmp.ne.s32.totalorder %s236, %s237
    %p248 = scmp.eq.s32.totalorder %s51, 0
    %p249 = por %p247, %p248
    %p250 = scmp.ne.s32.totalorder %s236, %s237
    %p251 = scmp.eq.s32.totalorder %s52, 1
    %p252 = por %p250, %p251
    %p254 = scmp.ne.s32.totalorder %s237, %s253
    %p255 = scmp.eq.s32.totalorder %s52, 0
    %p256 = por %p254, %p255
    %p257 = scmp.le.s32.totalorder 1, %s46
    %p258 = scmp.lt.s32.totalorder %s46, 3
    %p259 = pnand %p257, %p258
    %p260 = pneg %p259
    // Predicated region
    $region9: #{gat_base_forward.13} parent=5 // pred_check
      _
    $region10: #{gat_base_forward.13} parent=5 // pred_check_branch
      %262 = sbr.rel (%p259) target = $region12
    $region11: #{gat_base_forward.13} parent=5 // pred_region
      %s263 = ssub.s32 %s46, 1
      // Predicated region
      $region13: #{gat_base_forward.13} parent=11 // pred_check
        %p264 = pneg %p179
      $region14: #{gat_base_forward.13} parent=11 // pred_check_branch
        %266 = sbr.rel (%p264) target = $region16
      $region15: #{gat_base_forward.13} parent=11 // pred_region
        _
      $region16: #{gat_base_forward.13} parent=11 // pred_fallthru
        _
      // Predicated region
      $region17: #{gat_base_forward.13} parent=11 // pred_check
        %p267 = pneg %p200
      $region18: #{gat_base_forward.13} parent=11 // pred_check_branch
        %269 = sbr.rel (%p267) target = $region20
      $region19: #{gat_base_forward.13} parent=11 // pred_region
        _
      $region20: #{gat_base_forward.13} parent=11 // pred_fallthru
        _
      // Predicated region
      $region21: #{gat_base_forward.13} parent=11 // pred_check
        %p270 = pneg %p221
      $region22: #{gat_base_forward.13} parent=11 // pred_check_branch
        %272 = sbr.rel (%p270) target = $region24
      $region23: #{gat_base_forward.13} parent=11 // pred_region
        _
      $region24: #{gat_base_forward.13} parent=11 // pred_fallthru
        _
    $region12: #{gat_base_forward.13} parent=5 // pred_fallthru
      _
    %p273 = scmp.lt.s32.totalorder %s46, 2
    // Predicated region
    $region25: #{gat_base_forward.13} parent=5 // pred_check
      %p274 = pneg %p273
    $region26: #{gat_base_forward.13} parent=5 // pred_check_branch
      %276 = sbr.rel (%p274) target = $region28
    $region27: #{gat_base_forward.13} parent=5 // pred_region
      // Predicated region
      $region29: #{gat_base_forward.13} parent=27 // pred_check
        %p277 = pneg %p68
      $region30: #{gat_base_forward.13} parent=27 // pred_check_branch
        %279 = sbr.rel (%p277) target = $region32
      $region31: #{gat_base_forward.13} parent=27 // pred_region
        %s280 = sld [smem:[#allocation6 + %s46]]
        %s281 = smul.u32 16, %s280
        %p282 = scmp.lt.s32.totalorder %s281, 15
        %s283 = scalar_select %p282, %s281, 15
        %s284 = smul.addr %s283, 8
        %s285 = scalar_lea.vmem %s5, %s284
        %s286 = sld [smem:[#allocation6 + %s46]]
        %s287 = smul.u32 16, %s286
      $region32: #{gat_base_forward.13} parent=27 // pred_fallthru
        _
      // Predicated region
      $region33: #{gat_base_forward.13} parent=27 // pred_check
        %p288 = pneg %p96
      $region34: #{gat_base_forward.13} parent=27 // pred_check_branch
        %290 = sbr.rel (%p288) target = $region36
      $region35: #{gat_base_forward.13} parent=27 // pred_region
        %s291 = sld [smem:[#allocation6 + %s46]]
        %s292 = smul.u32 16, %s291
        %p293 = scmp.lt.s32.totalorder %s292, 15
        %s294 = scalar_select %p293, %s292, 15
        %s295 = smul.addr %s294, 4
        %s296 = scalar_lea.vmem %s6, %s295
        %s297 = sld [smem:[#allocation6 + %s46]]
        %s298 = smul.u32 16, %s297
      $region36: #{gat_base_forward.13} parent=27 // pred_fallthru
        _
      // Predicated region
      $region37: #{gat_base_forward.13} parent=27 // pred_check
        %p299 = pneg %p124
      $region38: #{gat_base_forward.13} parent=27 // pred_check_branch
        %301 = sbr.rel (%p299) target = $region40
      $region39: #{gat_base_forward.13} parent=27 // pred_region
        %s302 = sld [smem:[#allocation6 + %s46]]
        %p303 = scmp.lt.s32.totalorder %s302, 0
        %s304 = scalar_select %p303, %s302, 0
        %s305 = scalar_lea.vmem %s7, %s304
        %s306 = sld [smem:[#allocation6 + %s46]]
      $region40: #{gat_base_forward.13} parent=27 // pred_fallthru
        _
      // Predicated region
      $region41: #{gat_base_forward.13} parent=27 // pred_check
        %p307 = pneg %p152
      $region42: #{gat_base_forward.13} parent=27 // pred_check_branch
        %309 = sbr.rel (%p307) target = $region44
      $region43: #{gat_base_forward.13} parent=27 // pred_region
        %s310 = sld [smem:[#allocation5 + %s46]]
        %s311 = smul.u32 2, %s310
        %p312 = scmp.lt.s32.totalorder %s311, 1
        %s313 = scalar_select %p312, %s311, 1
        %s314 = smul.addr %s313, 8
        %s315 = scalar_lea.vmem %s8, %s314
        %s316 = sld [smem:[#allocation5 + %s46]]
        %s317 = smul.u32 2, %s316
      $region44: #{gat_base_forward.13} parent=27 // pred_fallthru
        _
    $region28: #{gat_base_forward.13} parent=5 // pred_fallthru
      _
    %p318 = scmp.le.s32.totalorder 1, %s46
    %p319 = scmp.lt.s32.totalorder %s46, 3
    %p320 = pnand %p318, %p319
    %p321 = pneg %p320
    // Predicated region
    $region45: #{gat_base_forward.13} parent=5 // pred_check
      _
    $region46: #{gat_base_forward.13} parent=5 // pred_check_branch
      %323 = sbr.rel (%p320) target = $region48
    $region47: #{gat_base_forward.13} parent=5 // pred_region
      %s324 = ssub.s32 %s46, 1
      %s325 = sld [smem:[#allocation6 + %s51]]
      %s326 = smul.u32 16, %s325
      %p327 = scmp.lt.s32.totalorder %s326, 15
      %s328 = scalar_select %p327, %s326, 15
      %s329 = smul.addr %s328, 8
      %s330 = scalar_lea.vmem %s5, %s329
      %p331 = pneg %p74
      %p332 = pneg %p71
      %s333 = sld [smem:[#allocation6 + %s51]]
      %s334 = smul.u32 16, %s333
      %p335 = scmp.lt.s32.totalorder %s334, 15
      %s336 = scalar_select %p335, %s334, 15
      %s337 = smul.addr %s336, 4
      %s338 = scalar_lea.vmem %s6, %s337
      %p339 = pneg %p102
      %p340 = pneg %p99
      %s341 = sld [smem:[#allocation6 + %s51]]
      %p342 = scmp.lt.s32.totalorder %s341, 0
      %s343 = scalar_select %p342, %s341, 0
      %s344 = scalar_lea.vmem %s7, %s343
      %p345 = pneg %p130
      %p346 = pneg %p127
      %s347 = sld [smem:[#allocation5 + %s51]]
      %s348 = smul.u32 2, %s347
      %p349 = scmp.lt.s32.totalorder %s348, 1
      %s350 = scalar_select %p349, %s348, 1
      %s351 = smul.addr %s350, 8
      %s352 = scalar_lea.vmem %s8, %s351
      %p353 = pneg %p158
      %p354 = pneg %p155
      %p355 = pneg %p179
      %p356 = pneg %p176
      %p357 = pneg %p200
      %p358 = pneg %p197
      %p359 = pneg %p221
      %p360 = pneg %p218
      %p361 = pneg %p249
      %p362 = pneg %p246
      %s363 = sld [smem:[#allocation5 + %s51]]
      %s364 = smul.u32 2, %s363
      %p365 = scmp.lt.s32.totalorder %s364, 1
      %s366 = scalar_select %p365, %s364, 1
      %s367 = smul.addr %s366, 8
      %s368 = scalar_lea.vmem %s12, %s367
      %s369 = sld [smem:[#allocation6 + %s51]]
      %s370 = smul.u32 16, %s369
      %p371 = scmp.lt.s32.totalorder %s370, 15
      %s372 = scalar_select %p371, %s370, 15
      %s373 = smul.addr %s372, 8
      %s374 = scalar_lea.vmem %s5, %s373
      %s375 = sld [smem:[#allocation6 + %s51]]
      %s376 = smul.u32 16, %s375
      %s377 = sld [smem:[#allocation6 + %s51]]
      %s378 = smul.u32 16, %s377
      %p379 = scmp.lt.s32.totalorder %s378, 15
      %s380 = scalar_select %p379, %s378, 15
      %s381 = smul.addr %s380, 4
      %s382 = scalar_lea.vmem %s6, %s381
      %s383 = sld [smem:[#allocation6 + %s51]]
      %s384 = smul.u32 16, %s383
      %s385 = sld [smem:[#allocation6 + %s51]]
      %p386 = scmp.lt.s32.totalorder %s385, 0
      %s387 = scalar_select %p386, %s385, 0
      %s388 = scalar_lea.vmem %s7, %s387
      %s389 = sld [smem:[#allocation6 + %s51]]
      %s390 = sld [smem:[#allocation5 + %s51]]
      %s391 = smul.u32 2, %s390
      %p392 = scmp.lt.s32.totalorder %s391, 1
      %s393 = scalar_select %p392, %s391, 1
      %s394 = smul.addr %s393, 8
      %s395 = scalar_lea.vmem %s8, %s394
      %s396 = sld [smem:[#allocation5 + %s51]]
      %s397 = smul.u32 2, %s396
      %s398 = sld [smem:[#allocation5 + %s51]]
      %s399 = smul.u32 2, %s398
      %p400 = scmp.lt.s32.totalorder %s399, 1
      %s401 = scalar_select %p400, %s399, 1
      %s402 = smul.addr %s401, 8
      %s403 = scalar_lea.vmem %s12, %s402
      %s404 = sld [smem:[#allocation5 + %s51]]
      %s405 = smul.u32 2, %s404
      %s406 = sld [smem:[#allocation7 + %s51]]
      %p407 = scmp.eq.s32.totalorder %s406, 1
      // Predicated region
      $region49: #{gat_base_forward.13} parent=47 // pred_check
        %p408 = pneg %p407
      $region50: #{gat_base_forward.13} parent=47 // pred_check_branch
        %410 = sbr.rel (%p408) target = $region52
      $region51: #{gat_base_forward.13} parent=47 // pred_region
        %vm411 = vcmask 523264
        %412 = vst.msk [vmem:[#allocation2] sm:$0xff] %vm411, 0.0
        %413 = vst.msk [vmem:[#allocation2 + $0x8] sm:$0xff] %vm411, 0.0
        %414 = vst.msk [vmem:[#allocation3] sm:$0xff] %vm411, 0.0
        %415 = vst.msk [vmem:[#allocation3 + $0x8] sm:$0xff] %vm411, 0.0
      $region52: #{gat_base_forward.13} parent=47 // pred_fallthru
        _
      %s416 = sld [smem:[#allocation9 + %s51]]
      %p417 = scmp.eq.s32.totalorder %s416, 1
      // Predicated region
      $region53: #{gat_base_forward.13} parent=47 // pred_check
        %p418 = pneg %p417
      $region54: #{gat_base_forward.13} parent=47 // pred_check_branch
        %420 = sbr.rel (%p418) target = $region56
      $region55: #{gat_base_forward.13} parent=47 // pred_region
        %v421 = vld [vmem:[%s374] sm:$0xff]
        %v422 = vld [vmem:[%s374 + $0x8] sm:$0xff]
        %v423 = vld [vmem:[%s374 + $0x10] sm:$0xff]
        %v424 = vld [vmem:[%s374 + $0x18] sm:$0xff]
        %v425 = vld [vmem:[%s374 + $0x20] sm:$0xff]
        %v426 = vld [vmem:[%s374 + $0x28] sm:$0xff]
        %v427 = vld [vmem:[%s374 + $0x30] sm:$0xff]
        %v428 = vld [vmem:[%s374 + $0x38] sm:$0xff]
        %v429 = vld [vmem:[%s374 + $0x40] sm:$0xff]
        %v430 = vld [vmem:[%s374 + $0x48] sm:$0xff]
        %v431 = vld [vmem:[%s374 + $0x50] sm:$0xff]
        %v432 = vld [vmem:[%s374 + $0x58] sm:$0xff]
        %v433 = vld [vmem:[%s374 + $0x60] sm:$0xff]
        %v434 = vld [vmem:[%s374 + $0x68] sm:$0xff]
        %v435 = vld [vmem:[%s374 + $0x70] sm:$0xff]
        %v436 = vld [vmem:[%s374 + $0x78] sm:$0xff]
        %v437 = vmul.f32 %v421, 1.442695
        %v438 = vpow.pop %v437
        %v439 = vmul.f32 %v422, 1.442695
        %v440 = vpow.pop %v439
        %v441 = vmul.f32 %v423, 1.442695
        %v442 = vpow.pop %v441
        %v443 = vmul.f32 %v424, 1.442695
        %v444 = vpow.pop %v443
        %v445 = vmul.f32 %v425, 1.442695
        %v446 = vpow.pop %v445
        %v447 = vmul.f32 %v426, 1.442695
        %v448 = vpow.pop %v447
        %v449 = vmul.f32 %v427, 1.442695
        %v450 = vpow.pop %v449
        %v451 = vmul.f32 %v428, 1.442695
        %v452 = vpow.pop %v451
        %v453 = vmul.f32 %v429, 1.442695
        %v454 = vpow.pop %v453
        %v455 = vmul.f32 %v430, 1.442695
        %v456 = vpow.pop %v455
        %v457 = vmul.f32 %v431, 1.442695
        %v458 = vpow.pop %v457
        %v459 = vmul.f32 %v432, 1.442695
        %v460 = vpow.pop %v459
        %v461 = vmul.f32 %v433, 1.442695
        %v462 = vpow.pop %v461
        %v463 = vmul.f32 %v434, 1.442695
        %v464 = vpow.pop %v463
        %v465 = vmul.f32 %v435, 1.442695
        %v466 = vpow.pop %v465
        %v467 = vmul.f32 %v436, 1.442695
        %v468 = vpow.pop %v467
        %470 = vset.pattern.permute.xlu0 0
        %471 = vperm.xlu0 %470, %v438
        %v472 = vpop.permute.xlu0 %471
        %475 = vset.pattern.permute.xlu0 0
        %476 = vperm.xlu0 %475, %v440
        %v477 = vpop.permute.xlu0 %476
        %480 = vset.pattern.permute.xlu0 0
        %481 = vperm.xlu0 %480, %v442
        %v482 = vpop.permute.xlu0 %481
        %485 = vset.pattern.permute.xlu0 0
        %486 = vperm.xlu0 %485, %v444
        %v487 = vpop.permute.xlu0 %486
        %490 = vset.pattern.permute.xlu0 0
        %491 = vperm.xlu0 %490, %v446
        %v492 = vpop.permute.xlu0 %491
        %495 = vset.pattern.permute.xlu0 0
        %496 = vperm.xlu0 %495, %v448
        %v497 = vpop.permute.xlu0 %496
        %500 = vset.pattern.permute.xlu0 0
        %501 = vperm.xlu0 %500, %v450
        %v502 = vpop.permute.xlu0 %501
        %505 = vset.pattern.permute.xlu0 0
        %506 = vperm.xlu0 %505, %v452
        %v507 = vpop.permute.xlu0 %506
        %510 = vset.pattern.permute.xlu0 0
        %511 = vperm.xlu0 %510, %v454
        %v512 = vpop.permute.xlu0 %511
        %515 = vset.pattern.permute.xlu0 0
        %516 = vperm.xlu0 %515, %v456
        %v517 = vpop.permute.xlu0 %516
        %520 = vset.pattern.permute.xlu0 0
        %521 = vperm.xlu0 %520, %v458
        %v522 = vpop.permute.xlu0 %521
        %525 = vset.pattern.permute.xlu0 0
        %526 = vperm.xlu0 %525, %v460
        %v527 = vpop.permute.xlu0 %526
        %530 = vset.pattern.permute.xlu0 0
        %531 = vperm.xlu0 %530, %v462
        %v532 = vpop.permute.xlu0 %531
        %535 = vset.pattern.permute.xlu0 0
        %536 = vperm.xlu0 %535, %v464
        %v537 = vpop.permute.xlu0 %536
        %540 = vset.pattern.permute.xlu0 0
        %541 = vperm.xlu0 %540, %v466
        %v542 = vpop.permute.xlu0 %541
        %545 = vset.pattern.permute.xlu0 0
        %546 = vperm.xlu0 %545, %v468
        %v547 = vpop.permute.xlu0 %546
        %549 = vset.pattern.permute.xlu0 1
        %550 = vperm.xlu0 %549, %v438
        %v551 = vpop.permute.xlu0 %550
        %553 = vset.pattern.permute.xlu0 1
        %554 = vperm.xlu0 %553, %v440
        %v555 = vpop.permute.xlu0 %554
        %557 = vset.pattern.permute.xlu0 1
        %558 = vperm.xlu0 %557, %v442
        %v559 = vpop.permute.xlu0 %558
        %561 = vset.pattern.permute.xlu0 1
        %562 = vperm.xlu0 %561, %v444
        %v563 = vpop.permute.xlu0 %562
        %565 = vset.pattern.permute.xlu0 1
        %566 = vperm.xlu0 %565, %v446
        %v567 = vpop.permute.xlu0 %566
        %569 = vset.pattern.permute.xlu0 1
        %570 = vperm.xlu0 %569, %v448
        %v571 = vpop.permute.xlu0 %570
        %573 = vset.pattern.permute.xlu0 1
        %574 = vperm.xlu0 %573, %v450
        %v575 = vpop.permute.xlu0 %574
        %577 = vset.pattern.permute.xlu0 1
        %578 = vperm.xlu0 %577, %v452
        %v579 = vpop.permute.xlu0 %578
        %581 = vset.pattern.permute.xlu0 1
        %582 = vperm.xlu0 %581, %v454
        %v583 = vpop.permute.xlu0 %582
        %585 = vset.pattern.permute.xlu0 1
        %586 = vperm.xlu0 %585, %v456
        %v587 = vpop.permute.xlu0 %586
        %589 = vset.pattern.permute.xlu0 1
        %590 = vperm.xlu0 %589, %v458
        %v591 = vpop.permute.xlu0 %590
        %593 = vset.pattern.permute.xlu0 1
        %594 = vperm.xlu0 %593, %v460
        %v595 = vpop.permute.xlu0 %594
        %597 = vset.pattern.permute.xlu0 1
        %598 = vperm.xlu0 %597, %v462
        %v599 = vpop.permute.xlu0 %598
        %601 = vset.pattern.permute.xlu0 1
        %602 = vperm.xlu0 %601, %v464
        %v603 = vpop.permute.xlu0 %602
        %605 = vset.pattern.permute.xlu0 1
        %606 = vperm.xlu0 %605, %v466
        %v607 = vpop.permute.xlu0 %606
        %609 = vset.pattern.permute.xlu0 1
        %610 = vperm.xlu0 %609, %v468
        %v611 = vpop.permute.xlu0 %610
        %613 = vset.pattern.permute.xlu0 2
        %614 = vperm.xlu0 %613, %v438
        %v615 = vpop.permute.xlu0 %614
        %617 = vset.pattern.permute.xlu0 2
        %618 = vperm.xlu0 %617, %v440
        %v619 = vpop.permute.xlu0 %618
        %621 = vset.pattern.permute.xlu0 2
        %622 = vperm.xlu0 %621, %v442
        %v623 = vpop.permute.xlu0 %622
        %625 = vset.pattern.permute.xlu0 2
        %626 = vperm.xlu0 %625, %v444
        %v627 = vpop.permute.xlu0 %626
        %629 = vset.pattern.permute.xlu0 2
        %630 = vperm.xlu0 %629, %v446
        %v631 = vpop.permute.xlu0 %630
        %633 = vset.pattern.permute.xlu0 2
        %634 = vperm.xlu0 %633, %v448
        %v635 = vpop.permute.xlu0 %634
        %637 = vset.pattern.permute.xlu0 2
        %638 = vperm.xlu0 %637, %v450
        %v639 = vpop.permute.xlu0 %638
        %641 = vset.pattern.permute.xlu0 2
        %642 = vperm.xlu0 %641, %v452
        %v643 = vpop.permute.xlu0 %642
        %645 = vset.pattern.permute.xlu0 2
        %646 = vperm.xlu0 %645, %v454
        %v647 = vpop.permute.xlu0 %646
        %649 = vset.pattern.permute.xlu0 2
        %650 = vperm.xlu0 %649, %v456
        %v651 = vpop.permute.xlu0 %650
        %653 = vset.pattern.permute.xlu0 2
        %654 = vperm.xlu0 %653, %v458
        %v655 = vpop.permute.xlu0 %654
        %657 = vset.pattern.permute.xlu0 2
        %658 = vperm.xlu0 %657, %v460
        %v659 = vpop.permute.xlu0 %658
        %661 = vset.pattern.permute.xlu0 2
        %662 = vperm.xlu0 %661, %v462
        %v663 = vpop.permute.xlu0 %662
        %665 = vset.pattern.permute.xlu0 2
        %666 = vperm.xlu0 %665, %v464
        %v667 = vpop.permute.xlu0 %666
        %669 = vset.pattern.permute.xlu0 2
        %670 = vperm.xlu0 %669, %v466
        %v671 = vpop.permute.xlu0 %670
        %673 = vset.pattern.permute.xlu0 2
        %674 = vperm.xlu0 %673, %v468
        %v675 = vpop.permute.xlu0 %674
        %677 = vset.pattern.permute.xlu0 3
        %678 = vperm.xlu0 %677, %v438
        %v679 = vpop.permute.xlu0 %678
        %681 = vset.pattern.permute.xlu0 3
        %682 = vperm.xlu0 %681, %v440
        %v683 = vpop.permute.xlu0 %682
        %685 = vset.pattern.permute.xlu0 3
        %686 = vperm.xlu0 %685, %v442
        %v687 = vpop.permute.xlu0 %686
        %689 = vset.pattern.permute.xlu0 3
        %690 = vperm.xlu0 %689, %v444
        %v691 = vpop.permute.xlu0 %690
        %693 = vset.pattern.permute.xlu0 3
        %694 = vperm.xlu0 %693, %v446
        %v695 = vpop.permute.xlu0 %694
        %697 = vset.pattern.permute.xlu0 3
        %698 = vperm.xlu0 %697, %v448
        %v699 = vpop.permute.xlu0 %698
        %701 = vset.pattern.permute.xlu0 3
        %702 = vperm.xlu0 %701, %v450
        %v703 = vpop.permute.xlu0 %702
        %705 = vset.pattern.permute.xlu0 3
        %706 = vperm.xlu0 %705, %v452
        %v707 = vpop.permute.xlu0 %706
        %709 = vset.pattern.permute.xlu0 3
        %710 = vperm.xlu0 %709, %v454
        %v711 = vpop.permute.xlu0 %710
        %713 = vset.pattern.permute.xlu0 3
        %714 = vperm.xlu0 %713, %v456
        %v715 = vpop.permute.xlu0 %714
        %717 = vset.pattern.permute.xlu0 3
        %718 = vperm.xlu0 %717, %v458
        %v719 = vpop.permute.xlu0 %718
        %721 = vset.pattern.permute.xlu0 3
        %722 = vperm.xlu0 %721, %v460
        %v723 = vpop.permute.xlu0 %722
        %725 = vset.pattern.permute.xlu0 3
        %726 = vperm.xlu0 %725, %v462
        %v727 = vpop.permute.xlu0 %726
        %729 = vset.pattern.permute.xlu0 3
        %730 = vperm.xlu0 %729, %v464
        %v731 = vpop.permute.xlu0 %730
        %733 = vset.pattern.permute.xlu0 3
        %734 = vperm.xlu0 %733, %v466
        %v735 = vpop.permute.xlu0 %734
        %737 = vset.pattern.permute.xlu0 3
        %738 = vperm.xlu0 %737, %v468
        %v739 = vpop.permute.xlu0 %738
        %vm741 = vcmask 130048
        %v742 = vsel %vm741, %v472, %v551
        %v743 = vsel %vm741, %v477, %v555
        %v744 = vsel %vm741, %v482, %v559
        %v745 = vsel %vm741, %v487, %v563
        %v746 = vsel %vm741, %v492, %v567
        %v747 = vsel %vm741, %v497, %v571
        %v748 = vsel %vm741, %v502, %v575
        %v749 = vsel %vm741, %v507, %v579
        %v750 = vsel %vm741, %v512, %v583
        %v751 = vsel %vm741, %v517, %v587
        %v752 = vsel %vm741, %v522, %v591
        %v753 = vsel %vm741, %v527, %v595
        %v754 = vsel %vm741, %v532, %v599
        %v755 = vsel %vm741, %v537, %v603
        %v756 = vsel %vm741, %v542, %v607
        %v757 = vsel %vm741, %v547, %v611
        %vm758 = vcmask 261120
        %v759 = vsel %vm758, %v742, %v615
        %v760 = vsel %vm758, %v743, %v619
        %v761 = vsel %vm758, %v744, %v623
        %v762 = vsel %vm758, %v745, %v627
        %v763 = vsel %vm758, %v746, %v631
        %v764 = vsel %vm758, %v747, %v635
        %v765 = vsel %vm758, %v748, %v639
        %v766 = vsel %vm758, %v749, %v643
        %v767 = vsel %vm758, %v750, %v647
        %v768 = vsel %vm758, %v751, %v651
        %v769 = vsel %vm758, %v752, %v655
        %v770 = vsel %vm758, %v753, %v659
        %v771 = vsel %vm758, %v754, %v663
        %v772 = vsel %vm758, %v755, %v667
        %v773 = vsel %vm758, %v756, %v671
        %v774 = vsel %vm758, %v757, %v675
        %vm775 = vcmask 392192
        %v776 = vsel %vm775, %v759, %v679
        %v777 = vsel %vm775, %v760, %v683
        %v778 = vsel %vm775, %v761, %v687
        %v779 = vsel %vm775, %v762, %v691
        %v780 = vsel %vm775, %v763, %v695
        %v781 = vsel %vm775, %v764, %v699
        %v782 = vsel %vm775, %v765, %v703
        %v783 = vsel %vm775, %v766, %v707
        %v784 = vsel %vm775, %v767, %v711
        %v785 = vsel %vm775, %v768, %v715
        %v786 = vsel %vm775, %v769, %v719
        %v787 = vsel %vm775, %v770, %v723
        %v788 = vsel %vm775, %v771, %v727
        %v789 = vsel %vm775, %v772, %v731
        %v790 = vsel %vm775, %v773, %v735
        %v791 = vsel %vm775, %v774, %v739
        %v792 = vpack.c.bf16 %v776, %v776
        %v793 = vpack.c.bf16 %v777, %v777
        %v794 = vpack.c.bf16 %v778, %v778
        %v795 = vpack.c.bf16 %v779, %v779
        %v796 = vpack.c.bf16 %v780, %v780
        %v797 = vpack.c.bf16 %v781, %v781
        %v798 = vpack.c.bf16 %v782, %v782
        %v799 = vpack.c.bf16 %v783, %v783
        %v800 = vpack.c.bf16 %v784, %v784
        %v801 = vpack.c.bf16 %v785, %v785
        %v802 = vpack.c.bf16 %v786, %v786
        %v803 = vpack.c.bf16 %v787, %v787
        %v804 = vpack.c.bf16 %v788, %v788
        %v805 = vpack.c.bf16 %v789, %v789
        %v806 = vpack.c.bf16 %v790, %v790
        %v807 = vpack.c.bf16 %v791, %v791
        %v808 = vld [vmem:[%s382] sm:$0xf]
        %v809 = vld [vmem:[%s382 + $0x4] sm:$0xf]
        %v810 = vld [vmem:[%s382 + $0x8] sm:$0xf]
        %v811 = vld [vmem:[%s382 + $0xc] sm:$0xf]
        %v812 = vld [vmem:[%s382 + $0x10] sm:$0xf]
        %v813 = vld [vmem:[%s382 + $0x14] sm:$0xf]
        %v814 = vld [vmem:[%s382 + $0x18] sm:$0xf]
        %v815 = vld [vmem:[%s382 + $0x1c] sm:$0xf]
        %v816 = vld [vmem:[%s382 + $0x20] sm:$0xf]
        %v817 = vld [vmem:[%s382 + $0x24] sm:$0xf]
        %v818 = vld [vmem:[%s382 + $0x28] sm:$0xf]
        %v819 = vld [vmem:[%s382 + $0x2c] sm:$0xf]
        %v820 = vld [vmem:[%s382 + $0x30] sm:$0xf]
        %v821 = vld [vmem:[%s382 + $0x34] sm:$0xf]
        %v822 = vld [vmem:[%s382 + $0x38] sm:$0xf]
        %v823 = vld [vmem:[%s382 + $0x3c] sm:$0xf]
        %v824 = vunpack.c.l.bf16 %v792
        %v825 = vunpack.c.l.bf16 %v793
        %v826 = vunpack.c.l.bf16 %v794
        %v827 = vunpack.c.l.bf16 %v795
        %v828 = vunpack.c.l.bf16 %v796
        %v829 = vunpack.c.l.bf16 %v797
        %v830 = vunpack.c.l.bf16 %v798
        %v831 = vunpack.c.l.bf16 %v799
        %v832 = vunpack.c.l.bf16 %v800
        %v833 = vunpack.c.l.bf16 %v801
        %v834 = vunpack.c.l.bf16 %v802
        %v835 = vunpack.c.l.bf16 %v803
        %v836 = vunpack.c.l.bf16 %v804
        %v837 = vunpack.c.l.bf16 %v805
        %v838 = vunpack.c.l.bf16 %v806
        %v839 = vunpack.c.l.bf16 %v807
        %v840 = vunpack.c.l.bf16 %v808
        %v841 = vunpack.c.l.bf16 %v809
        %v842 = vunpack.c.l.bf16 %v810
        %v843 = vunpack.c.l.bf16 %v811
        %v844 = vunpack.c.l.bf16 %v812
        %v845 = vunpack.c.l.bf16 %v813
        %v846 = vunpack.c.l.bf16 %v814
        %v847 = vunpack.c.l.bf16 %v815
        %v848 = vunpack.c.l.bf16 %v816
        %v849 = vunpack.c.l.bf16 %v817
        %v850 = vunpack.c.l.bf16 %v818
        %v851 = vunpack.c.l.bf16 %v819
        %v852 = vunpack.c.l.bf16 %v820
        %v853 = vunpack.c.l.bf16 %v821
        %v854 = vunpack.c.l.bf16 %v822
        %v855 = vunpack.c.l.bf16 %v823
        %v856 = vmul.f32 %v824, %v840
        %v857 = vmul.f32 %v825, %v841
        %v858 = vmul.f32 %v826, %v842
        %v859 = vmul.f32 %v827, %v843
        %v860 = vmul.f32 %v828, %v844
        %v861 = vmul.f32 %v829, %v845
        %v862 = vmul.f32 %v830, %v846
        %v863 = vmul.f32 %v831, %v847
        %v864 = vmul.f32 %v832, %v848
        %v865 = vmul.f32 %v833, %v849
        %v866 = vmul.f32 %v834, %v850
        %v867 = vmul.f32 %v835, %v851
        %v868 = vmul.f32 %v836, %v852
        %v869 = vmul.f32 %v837, %v853
        %v870 = vmul.f32 %v838, %v854
        %v871 = vmul.f32 %v839, %v855
        %v872 = vpack.c.bf16 %v857, %v856
        %v873 = vpack.c.bf16 %v859, %v858
        %v874 = vpack.c.bf16 %v861, %v860
        %v875 = vpack.c.bf16 %v863, %v862
        %v876 = vpack.c.bf16 %v865, %v864
        %v877 = vpack.c.bf16 %v867, %v866
        %v878 = vpack.c.bf16 %v869, %v868
        %v879 = vpack.c.bf16 %v871, %v870
        %v880 = vlaneseq
        %v881 = vshrl.u32 %v880, 7
        %v882 = vadd.s32 %v881, 8
        %s883 = sld [smem:[#allocation5 + %s51]]
        %s884 = smul.u32 %s883, 16
        %v885 = vstv %s884
        %v886 = vadd.s32 %v881, %v885
        %v887 = vadd.s32 %v882, %v885
        %v888 = vld [vmem:[%s388] sm:$0x1]
        %v889 = vperm.slane %v888, 0
        %vm890 = vcmp.eq.s32.totalorder %v886, %v889
        %vm891 = vcmp.eq.s32.totalorder %v887, %v889
        %v892 = vsel %vm890, 1, 0
        %v893 = vsel %vm891, 1, 0
        %v894 = vcvt.s32.f32 %v892
        %v895 = vcvt.s32.f32 %v893
        %v896 = vpack.c.bf16 %v895, %v894
        %v897 = vld [vmem:[#allocation2] sm:$0xff]
        %v898 = vld [vmem:[#allocation2 + $0x8] sm:$0xff]
        %899 = vmatpush.bf16.msra.mxu0 %v879
        %900 = vmatpush.bf16.msra.mxu0 %v878
        %901 = vmatpush.bf16.msra.mxu0 %v877
        %902 = vmatpush.bf16.msra.mxu0 %v876
        %903 = vmatpush.bf16.msra.mxu0 %v875
        %904 = vmatpush.bf16.msra.mxu0 %v874
        %905 = vmatpush.bf16.msra.mxu0 %v873
        %906 = vmatpush.bf16.msra.mxu0 %v872
        %907 = vmatmul.bf16.gmra.mxu0 %v896
        %v908 = vpop.f32.mrf.mxu0
        %v909 = vadd.f32 0.0, %v908
        %v910 = vpop.f32.mrf.mxu0
        %v911 = vadd.f32 0.0, %v910
        %912 = vdwg.mxu0
        %v913 = vadd.f32 %v897, %v909
        %v914 = vadd.f32 %v898, %v911
        %vm915 = vcmask 523264
        %916 = vst.msk [vmem:[#allocation2] sm:$0xff] %vm915, %v913
        %917 = vst.msk [vmem:[#allocation2 + $0x8] sm:$0xff] %vm915, %v914
        %v918 = vld [vmem:[#allocation3] sm:$0xff]
        %v919 = vld [vmem:[#allocation3 + $0x8] sm:$0xff]
        %v936 = vunpack.c.l.b16 %v792
        %v937 = vunpack.c.l.b16 %v793
        %v938 = vunpack.c.l.b16 %v794
        %v939 = vunpack.c.l.b16 %v795
        %v940 = vunpack.c.l.b16 %v796
        %v941 = vunpack.c.l.b16 %v797
        %v942 = vunpack.c.l.b16 %v798
        %v943 = vunpack.c.l.b16 %v799
        %v944 = vunpack.c.l.b16 %v800
        %v945 = vunpack.c.l.b16 %v801
        %v946 = vunpack.c.l.b16 %v802
        %v947 = vunpack.c.l.b16 %v803
        %v948 = vunpack.c.l.b16 %v804
        %v949 = vunpack.c.l.b16 %v805
        %v950 = vunpack.c.l.b16 %v806
        %v951 = vunpack.c.l.b16 %v807
        %v952 = vpack.c.b16 %v937, %v936
        %v953 = vpack.c.b16 %v939, %v938
        %v954 = vpack.c.b16 %v941, %v940
        %v955 = vpack.c.b16 %v943, %v942
        %v956 = vpack.c.b16 %v945, %v944
        %v957 = vpack.c.b16 %v947, %v946
        %v958 = vpack.c.b16 %v949, %v948
        %v959 = vpack.c.b16 %v951, %v950
        %968 = vmatpush.bf16.msra.mxu0 %v959
        %969 = vmatpush.bf16.msra.mxu0 %v958
        %970 = vmatpush.bf16.msra.mxu0 %v957
        %971 = vmatpush.bf16.msra.mxu0 %v956
        %972 = vmatpush.bf16.msra.mxu0 %v955
        %973 = vmatpush.bf16.msra.mxu0 %v954
        %974 = vmatpush.bf16.msra.mxu0 %v953
        %975 = vmatpush.bf16.msra.mxu0 %v952
        %976 = vmatmul.bf16.gmra.mxu0 %v896
        %v977 = vpop.f32.mrf.mxu0
        %v978 = vadd.f32 0.0, %v977
        %v979 = vpop.f32.mrf.mxu0
        %v980 = vadd.f32 0.0, %v979
        %981 = vdwg.mxu0
        %v982 = vadd.f32 %v918, %v978
        %v983 = vadd.f32 %v919, %v980
        %984 = vst.msk [vmem:[#allocation3] sm:$0xff] %vm915, %v982
        %985 = vst.msk [vmem:[#allocation3 + $0x8] sm:$0xff] %vm915, %v983
      $region56: #{gat_base_forward.13} parent=47 // pred_fallthru
        _
      %s986 = sld [smem:[#allocation8 + %s51]]
      %p987 = scmp.eq.s32.totalorder %s986, 1
      // Predicated region
      $region57: #{gat_base_forward.13} parent=47 // pred_check
        %p988 = pneg %p987
      $region58: #{gat_base_forward.13} parent=47 // pred_check_branch
        %990 = sbr.rel (%p988) target = $region60
      $region59: #{gat_base_forward.13} parent=47 // pred_region
        %v991 = vld [vmem:[#allocation3] sm:$0xff]
        %v992 = vld [vmem:[#allocation3 + $0x8] sm:$0xff]
        %vm993 = vcmp.gt.f32.partialorder %v991, 0.0
        %vm994 = vcmp.gt.f32.partialorder %v992, 0.0
        %v995 = vrcp.pop %v991
        %v996 = vrcp.pop %v992
        %v997 = vsel %vm993, %v995, 0.0
        %v998 = vsel %vm994, %v996, 0.0
        %v999 = vld [vmem:[#allocation2] sm:$0xff]
        %v1000 = vld [vmem:[#allocation2 + $0x8] sm:$0xff]
        %v1001 = vmul.f32 %v999, %v997
        %v1002 = vmul.f32 %v1000, %v998
        %v1003 = vld [vmem:[%s9] sm:$0x1]
        %v1005 = vperm.slane %v1003, 0
        %v1007 = vadd.f32 %v1001, %v1005
        %v1008 = vadd.f32 %v1002, %v1005
        %vm1009 = vcmask 523264
        %v1010 = vsel %vm1009, %v1007, 0.0
        %1011 = vadd.xlane.f32.xlu0 %v1010
        %v1012 = vpop.xlane.xlu0 %1011
        %v1013 = vsel %vm1009, %v1008, 0.0
        %1014 = vadd.xlane.f32.xlu0 %v1013
        %v1015 = vpop.xlane.xlu0 %1014
        %v1016 = vrcp.pop 64.0
        %v1017 = vmul.f32 64.0, %v1016
        %v1018 = vsub.f32 1.0, %v1017
        %v1019 = vmul.f32 %v1016, %v1018
        %v1020 = vadd.f32 %v1016, %v1019
        %vm1021 = vweird.f32 %v1016
        %v1022 = vsel %vm1021, %v1016, %v1020
        %v1023 = vmul.f32 %v1012, %v1022
        %v1024 = vmul.f32 %v1015, %v1022
        %v1025 = vsub.f32 %v1007, %v1023
        %v1026 = vsub.f32 %v1008, %v1024
        %v1027 = vmul.f32 %v1025, %v1025
        %v1028 = vmul.f32 %v1026, %v1026
        %v1029 = vsel %vm1009, %v1027, 0.0
        %1030 = vadd.xlane.f32.xlu0 %v1029
        %v1031 = vpop.xlane.xlu0 %1030
        %v1032 = vsel %vm1009, %v1028, 0.0
        %1033 = vadd.xlane.f32.xlu0 %v1032
        %v1034 = vpop.xlane.xlu0 %1033
        %v1035 = vmul.f32 %v1031, %v1022
        %v1036 = vmul.f32 %v1034, %v1022
        %v1037 = vadd.f32 %v1035, 1e-05
        %v1038 = vadd.f32 %v1036, 1e-05
        %v1039 = vrsqrt.pop %v1037
        %v1040 = vmul.f32 %v1039, %v1037
        %v1041 = vmul.f32 %v1040, %v1039
        %v1042 = vmul.f32 0.5, %v1041
        %v1043 = vsub.f32 1.5, %v1042
        %v1044 = vmul.f32 %v1039, %v1043
        %vm1045 = vweird.f32 %v1037
        %vm1046 = vweird.f32 %v1039
        %vm1047 = vmor %vm1045, %vm1046
        %v1048 = vsel %vm1047, %v1039, %v1044
        %v1049 = vrsqrt.pop %v1038
        %v1050 = vmul.f32 %v1049, %v1038
        %v1051 = vmul.f32 %v1050, %v1049
        %v1052 = vmul.f32 0.5, %v1051
        %v1053 = vsub.f32 1.5, %v1052
        %v1054 = vmul.f32 %v1049, %v1053
        %vm1055 = vweird.f32 %v1038
        %vm1056 = vweird.f32 %v1049
        %vm1057 = vmor %vm1055, %vm1056
        %v1058 = vsel %vm1057, %v1049, %v1054
        %v1059 = vmul.f32 %v1025, %v1048
        %v1060 = vmul.f32 %v1026, %v1058
        %v1061 = vld [vmem:[%s10] sm:$0x1]
        %v1063 = vperm.slane %v1061, 0
        %v1065 = vmul.f32 %v1059, %v1063
        %v1066 = vmul.f32 %v1060, %v1063
        %v1067 = vld [vmem:[%s11] sm:$0x1]
        %v1069 = vperm.slane %v1067, 0
        %v1071 = vadd.f32 %v1065, %v1069
        %v1072 = vadd.f32 %v1066, %v1069
        %v1073 = vmax.f32 %v1071, 0.0
        %v1074 = vmax.f32 %v1072, 0.0
        %v1075 = vld [vmem:[%s395] sm:$0xff]
        %v1076 = vld [vmem:[%s395 + $0x8] sm:$0xff]
        %v1077 = vadd.f32 %v1073, %v1075
        %v1078 = vadd.f32 %v1074, %v1076
        %1079 = vst.msk [vmem:[%s403] sm:$0xff] %vm1009, %v1077
        %1080 = vst.msk [vmem:[%s403 + $0x8] sm:$0xff] %vm1009, %v1078
      $region60: #{gat_base_forward.13} parent=47 // pred_fallthru
        _
      %s1081 = sld [smem:[#allocation5 + %s51]]
      %s1082 = smul.u32 2, %s1081
      %p1083 = scmp.lt.s32.totalorder %s1082, 1
      %s1084 = scalar_select %p1083, %s1082, 1
      %s1085 = smul.addr %s1084, 8
      %s1086 = scalar_lea.vmem %s12, %s1085
      // Predicated region
      $region61: #{gat_base_forward.13} parent=47 // pred_check
        %p1087 = pneg %p246
      $region62: #{gat_base_forward.13} parent=47 // pred_check_branch
        %1089 = sbr.rel (%p1087) target = $region64
      $region63: #{gat_base_forward.13} parent=47 // pred_region
        %s1090 = sld [smem:[#allocation5 + %s51]]
        %s1091 = smul.u32 2, %s1090
      $region64: #{gat_base_forward.13} parent=47 // pred_fallthru
        _
    $region48: #{gat_base_forward.13} parent=5 // pred_fallthru
      _
    %p1092 = scmp.le.s32.totalorder 2, %s46
    // Predicated region
    $region65: #{gat_base_forward.13} parent=5 // pred_check
      %p1093 = pneg %p1092
    $region66: #{gat_base_forward.13} parent=5 // pred_check_branch
      %1095 = sbr.rel (%p1093) target = $region68
    $region67: #{gat_base_forward.13} parent=5 // pred_region
      %s1096 = ssub.s32 %s46, 2
      // Predicated region
      $region69: #{gat_base_forward.13} parent=67 // pred_check
        %p1097 = pneg %p252
      $region70: #{gat_base_forward.13} parent=67 // pred_check_branch
        %1099 = sbr.rel (%p1097) target = $region72
      $region71: #{gat_base_forward.13} parent=67 // pred_region
        %s1100 = sld [smem:[#allocation5 + %s52]]
        %s1101 = smul.u32 2, %s1100
        %p1102 = scmp.lt.s32.totalorder %s1101, 1
        %s1103 = scalar_select %p1102, %s1101, 1
        %s1104 = smul.addr %s1103, 8
        %s1105 = scalar_lea.vmem %s12, %s1104
      $region72: #{gat_base_forward.13} parent=67 // pred_fallthru
        _
    $region68: #{gat_base_forward.13} parent=5 // pred_fallthru
      _
  $region6: #{gat_base_forward.13} parent=0 // loop_footer
    %s50 = sadd.s32 1, %s46
  $region7: #{gat_base_forward.13} parent=0 // loop_footer_branch
    %45 = sbr.rel target = $region3
  $region8: #{gat_base_forward.13} parent=0 // loop_exit
    _

// kernel: gat_base_forward.14
$region0: #{gat_base_forward.14}
  #allocation0 [shape = 'u32[]', space=smem, size = 0x4, offset = 0x4, fixed_abs, tag = 'smem constant byte address 0x4 - core index']
  #allocation1 [shape = 'u32[72,128]{1,0:T(1,128)}', space=vmem, size = 0x9000, scoped, tag = 'internal scratch']
  %s0 = inlined_call_operand.vmem [shape: bf16[128,64], index: 0, kind: input, shape index: {}]
  %s1 = inlined_call_operand.vmem [shape: bf16[128,64], index: 1, kind: input, shape index: {}]
  %s2 = inlined_call_operand.vmem [shape: f32[128,64], index: 2, kind: input, shape index: {}]
  %s3 = inlined_call_operand.vmem [shape: bf16[64,192], index: 3, kind: input, shape index: {}]
  %s4 = inlined_call_operand.vmem [shape: bf16[64,192], index: 4, kind: input, shape index: {}]
  %s5 = inlined_call_operand.vmem [shape: bf16[64,192], index: 5, kind: input, shape index: {}]
  %s6 = inlined_call_operand.vmem [shape: f32[1,192], index: 6, kind: input, shape index: {}]
  %s7 = inlined_call_operand.vmem [shape: f32[1,192], index: 7, kind: input, shape index: {}]
  %s8 = inlined_call_operand.vmem [shape: f32[1,192], index: 8, kind: input, shape index: {}]
  %s9 = inlined_call_operand.vmem [shape: bf16[192,64], index: 9, kind: input, shape index: {}]
  %s10 = inlined_call_operand.vmem [shape: f32[1,64], index: 10, kind: input, shape index: {}]
  %s11 = inlined_call_operand.vmem [shape: f32[128,64], index: 11, kind: output, shape index: {}]
  %s12 = sld [smem:[#allocation0]]
  $region54: #{gat_base_forward.14} parent=0
    _
  %s14 = ssub.s32 1, %s12
  %s15 = scalar_select 0, %s14, %s12
  // Predicated region
  $region2: #{gat_base_forward.14} parent=0 // pred_check
    _
  $region3: #{gat_base_forward.14} parent=0 // pred_check_branch
    %17 = sbr.rel (0) target = $region5
  $region4: #{gat_base_forward.14} parent=0 // pred_region
    _
  $region5: #{gat_base_forward.14} parent=0 // pred_fallthru
    _
  // Predicated region
  $region6: #{gat_base_forward.14} parent=0 // pred_check
    _
  $region7: #{gat_base_forward.14} parent=0 // pred_check_branch
    %19 = sbr.rel (0) target = $region9
  $region8: #{gat_base_forward.14} parent=0 // pred_region
    _
  $region9: #{gat_base_forward.14} parent=0 // pred_fallthru
    _
  // Predicated region
  $region10: #{gat_base_forward.14} parent=0 // pred_check
    _
  $region11: #{gat_base_forward.14} parent=0 // pred_check_branch
    %21 = sbr.rel (0) target = $region13
  $region12: #{gat_base_forward.14} parent=0 // pred_region
    _
  $region13: #{gat_base_forward.14} parent=0 // pred_fallthru
    _
  // Predicated region
  $region14: #{gat_base_forward.14} parent=0 // pred_check
    _
  $region15: #{gat_base_forward.14} parent=0 // pred_check_branch
    %23 = sbr.rel (0) target = $region17
  $region16: #{gat_base_forward.14} parent=0 // pred_region
    _
  $region17: #{gat_base_forward.14} parent=0 // pred_fallthru
    _
  // Predicated region
  $region18: #{gat_base_forward.14} parent=0 // pred_check
    _
  $region19: #{gat_base_forward.14} parent=0 // pred_check_branch
    %25 = sbr.rel (0) target = $region21
  $region20: #{gat_base_forward.14} parent=0 // pred_region
    _
  $region21: #{gat_base_forward.14} parent=0 // pred_fallthru
    _
  // Predicated region
  $region22: #{gat_base_forward.14} parent=0 // pred_check
    _
  $region23: #{gat_base_forward.14} parent=0 // pred_check_branch
    %27 = sbr.rel (0) target = $region25
  $region24: #{gat_base_forward.14} parent=0 // pred_region
    _
  $region25: #{gat_base_forward.14} parent=0 // pred_fallthru
    _
  // Predicated region
  $region26: #{gat_base_forward.14} parent=0 // pred_check
    _
  $region27: #{gat_base_forward.14} parent=0 // pred_check_branch
    %29 = sbr.rel (0) target = $region29
  $region28: #{gat_base_forward.14} parent=0 // pred_region
    _
  $region29: #{gat_base_forward.14} parent=0 // pred_fallthru
    _
  // Predicated region
  $region30: #{gat_base_forward.14} parent=0 // pred_check
    _
  $region31: #{gat_base_forward.14} parent=0 // pred_check_branch
    %31 = sbr.rel (0) target = $region33
  $region32: #{gat_base_forward.14} parent=0 // pred_region
    _
  $region33: #{gat_base_forward.14} parent=0 // pred_fallthru
    _
  // Predicated region
  $region34: #{gat_base_forward.14} parent=0 // pred_check
    _
  $region35: #{gat_base_forward.14} parent=0 // pred_check_branch
    %33 = sbr.rel (0) target = $region37
  $region36: #{gat_base_forward.14} parent=0 // pred_region
    _
  $region37: #{gat_base_forward.14} parent=0 // pred_fallthru
    _
  // Predicated region
  $region38: #{gat_base_forward.14} parent=0 // pred_check
    _
  $region39: #{gat_base_forward.14} parent=0 // pred_check_branch
    %35 = sbr.rel (0) target = $region41
  $region40: #{gat_base_forward.14} parent=0 // pred_region
    _
  $region41: #{gat_base_forward.14} parent=0 // pred_fallthru
    _
  // Predicated region
  $region42: #{gat_base_forward.14} parent=0 // pred_check
    _
  $region43: #{gat_base_forward.14} parent=0 // pred_check_branch
    %37 = sbr.rel (0) target = $region45
  $region44: #{gat_base_forward.14} parent=0 // pred_region
    _
  $region45: #{gat_base_forward.14} parent=0 // pred_fallthru
    _
  %v39 = vld [vmem:[%s2] sm:$0xff]
  %v40 = vld [vmem:[%s2 + $0x8] sm:$0xff]
  %v41 = vld [vmem:[%s2 + $0x10] sm:$0xff]
  %v42 = vld [vmem:[%s2 + $0x18] sm:$0xff]
  %v43 = vld [vmem:[%s2 + $0x20] sm:$0xff]
  %v44 = vld [vmem:[%s2 + $0x28] sm:$0xff]
  %v45 = vld [vmem:[%s2 + $0x30] sm:$0xff]
  %v46 = vld [vmem:[%s2 + $0x38] sm:$0xff]
  %v47 = vld [vmem:[%s2 + $0x40] sm:$0xff]
  %v48 = vld [vmem:[%s2 + $0x48] sm:$0xff]
  %v49 = vld [vmem:[%s2 + $0x50] sm:$0xff]
  %v50 = vld [vmem:[%s2 + $0x58] sm:$0xff]
  %v51 = vld [vmem:[%s2 + $0x60] sm:$0xff]
  %v52 = vld [vmem:[%s2 + $0x68] sm:$0xff]
  %v53 = vld [vmem:[%s2 + $0x70] sm:$0xff]
  %v54 = vld [vmem:[%s2 + $0x78] sm:$0xff]
  %v55 = vld [vmem:[%s0] sm:$0xf]
  %v56 = vld [vmem:[%s0 + $0x4] sm:$0xf]
  %v57 = vld [vmem:[%s0 + $0x8] sm:$0xf]
  %v58 = vld [vmem:[%s0 + $0xc] sm:$0xf]
  %v59 = vld [vmem:[%s0 + $0x10] sm:$0xf]
  %v60 = vld [vmem:[%s0 + $0x14] sm:$0xf]
  %v61 = vld [vmem:[%s0 + $0x18] sm:$0xf]
  %v62 = vld [vmem:[%s0 + $0x1c] sm:$0xf]
  %v63 = vld [vmem:[%s0 + $0x20] sm:$0xf]
  %v64 = vld [vmem:[%s0 + $0x24] sm:$0xf]
  %v65 = vld [vmem:[%s0 + $0x28] sm:$0xf]
  %v66 = vld [vmem:[%s0 + $0x2c] sm:$0xf]
  %v67 = vld [vmem:[%s0 + $0x30] sm:$0xf]
  %v68 = vld [vmem:[%s0 + $0x34] sm:$0xf]
  %v69 = vld [vmem:[%s0 + $0x38] sm:$0xf]
  %v70 = vld [vmem:[%s0 + $0x3c] sm:$0xf]
  %v71 = vld [vmem:[%s3] sm:$0xff]
  %v72 = vld [vmem:[%s3 + $0x8] sm:$0xff]
  %v73 = vld [vmem:[%s3 + $0x10] sm:$0xff]
  %v74 = vld [vmem:[%s3 + $0x18] sm:$0xff]
  %v75 = vld [vmem:[%s3 + $0x20] sm:$0xff]
  %v76 = vld [vmem:[%s3 + $0x28] sm:$0xff]
  %v77 = vld [vmem:[%s3 + $0x30] sm:$0xff]
  %v78 = vld [vmem:[%s3 + $0x38] sm:$0xff]
  %v79 = vld [vmem:[%s1] sm:$0xf]
  %v80 = vld [vmem:[%s1 + $0x4] sm:$0xf]
  %v81 = vld [vmem:[%s1 + $0x8] sm:$0xf]
  %v82 = vld [vmem:[%s1 + $0xc] sm:$0xf]
  %v83 = vld [vmem:[%s1 + $0x10] sm:$0xf]
  %v84 = vld [vmem:[%s1 + $0x14] sm:$0xf]
  %v85 = vld [vmem:[%s1 + $0x18] sm:$0xf]
  %v86 = vld [vmem:[%s1 + $0x1c] sm:$0xf]
  %v87 = vld [vmem:[%s1 + $0x20] sm:$0xf]
  %v88 = vld [vmem:[%s1 + $0x24] sm:$0xf]
  %v89 = vld [vmem:[%s1 + $0x28] sm:$0xf]
  %v90 = vld [vmem:[%s1 + $0x2c] sm:$0xf]
  %v91 = vld [vmem:[%s1 + $0x30] sm:$0xf]
  %v92 = vld [vmem:[%s1 + $0x34] sm:$0xf]
  %v93 = vld [vmem:[%s1 + $0x38] sm:$0xf]
  %v94 = vld [vmem:[%s1 + $0x3c] sm:$0xf]
  %v95 = vld [vmem:[%s4] sm:$0xff]
  %v96 = vld [vmem:[%s4 + $0x8] sm:$0xff]
  %v97 = vld [vmem:[%s4 + $0x10] sm:$0xff]
  %v98 = vld [vmem:[%s4 + $0x18] sm:$0xff]
  %v99 = vld [vmem:[%s4 + $0x20] sm:$0xff]
  %v100 = vld [vmem:[%s4 + $0x28] sm:$0xff]
  %v101 = vld [vmem:[%s4 + $0x30] sm:$0xff]
  %v102 = vld [vmem:[%s4 + $0x38] sm:$0xff]
  %v119 = vunpack.c.l.b16 %v79
  %v120 = vunpack.c.l.b16 %v80
  %v121 = vunpack.c.l.b16 %v81
  %v122 = vunpack.c.l.b16 %v82
  %v123 = vunpack.c.l.b16 %v83
  %v124 = vunpack.c.l.b16 %v84
  %v125 = vunpack.c.l.b16 %v85
  %v126 = vunpack.c.l.b16 %v86
  %v127 = vunpack.c.l.b16 %v87
  %v128 = vunpack.c.l.b16 %v88
  %v129 = vunpack.c.l.b16 %v89
  %v130 = vunpack.c.l.b16 %v90
  %v131 = vunpack.c.l.b16 %v91
  %v132 = vunpack.c.l.b16 %v92
  %v133 = vunpack.c.l.b16 %v93
  %v134 = vunpack.c.l.b16 %v94
  %v135 = vpack.c.b16 %v120, %v119
  %v136 = vpack.c.b16 %v122, %v121
  %v137 = vpack.c.b16 %v124, %v123
  %v138 = vpack.c.b16 %v126, %v125
  %v139 = vpack.c.b16 %v128, %v127
  %v140 = vpack.c.b16 %v130, %v129
  %v141 = vpack.c.b16 %v132, %v131
  %v142 = vpack.c.b16 %v134, %v133
  %v151 = vunpack.c.l.b16 %v95
  %v152 = vunpack.c.h.b16 %v95
  %v153 = vunpack.c.l.b16 %v96
  %v154 = vunpack.c.h.b16 %v96
  %v155 = vunpack.c.l.b16 %v97
  %v156 = vunpack.c.h.b16 %v97
  %v157 = vunpack.c.l.b16 %v98
  %v158 = vunpack.c.h.b16 %v98
  %v159 = vunpack.c.l.b16 %v99
  %v160 = vunpack.c.h.b16 %v99
  %v161 = vunpack.c.l.b16 %v100
  %v162 = vunpack.c.h.b16 %v100
  %v163 = vunpack.c.l.b16 %v101
  %v164 = vunpack.c.h.b16 %v101
  %v165 = vunpack.c.l.b16 %v102
  %v166 = vunpack.c.h.b16 %v102
  %v167 = vpack.c.b16 %v153, %v151
  %v168 = vpack.c.b16 %v154, %v152
  %v169 = vpack.c.b16 %v157, %v155
  %v170 = vpack.c.b16 %v158, %v156
  %v171 = vpack.c.b16 %v161, %v159
  %v172 = vpack.c.b16 %v162, %v160
  %v173 = vpack.c.b16 %v165, %v163
  %v174 = vpack.c.b16 %v166, %v164
  %vm183 = vcmask 523264
  %v185 = vsel %vm183, %v135, 0
  %v188 = vsel %vm183, %v136, 0
  %v191 = vsel %vm183, %v137, 0
  %v194 = vsel %vm183, %v138, 0
  %v197 = vsel %vm183, %v139, 0
  %v200 = vsel %vm183, %v140, 0
  %v203 = vsel %vm183, %v141, 0
  %v206 = vsel %vm183, %v142, 0
  %208 = vmatpush.bf16.msra.mxu0 0
  %209 = vmatpush.bf16.msra.mxu0 0
  %210 = vmatpush.bf16.msra.mxu0 0
  %211 = vmatpush.bf16.msra.mxu0 0
  %212 = vmatpush.bf16.msra.mxu0 %v173
  %213 = vmatpush.bf16.msra.mxu0 %v171
  %214 = vmatpush.bf16.msra.mxu0 %v169
  %215 = vmatpush.bf16.msra.mxu0 %v167
  %216 = vmatmul.bf16.gmra.mxu0 %v185
  %v217 = vpop.f32.mrf.mxu0
  %v218 = vadd.f32 0.0, %v217
  %v219 = vpop.f32.mrf.mxu0
  %v220 = vadd.f32 0.0, %v219
  %221 = vmatmul.bf16.gmra.mxu0 %v188
  %v222 = vpop.f32.mrf.mxu0
  %v223 = vadd.f32 0.0, %v222
  %v224 = vpop.f32.mrf.mxu0
  %v225 = vadd.f32 0.0, %v224
  %226 = vmatmul.bf16.gmra.mxu0 %v191
  %v227 = vpop.f32.mrf.mxu0
  %v228 = vadd.f32 0.0, %v227
  %v229 = vpop.f32.mrf.mxu0
  %v230 = vadd.f32 0.0, %v229
  %231 = vmatmul.bf16.gmra.mxu0 %v194
  %v232 = vpop.f32.mrf.mxu0
  %v233 = vadd.f32 0.0, %v232
  %v234 = vpop.f32.mrf.mxu0
  %v235 = vadd.f32 0.0, %v234
  %236 = vmatmul.bf16.gmra.mxu0 %v197
  %v237 = vpop.f32.mrf.mxu0
  %v238 = vadd.f32 0.0, %v237
  %v239 = vpop.f32.mrf.mxu0
  %v240 = vadd.f32 0.0, %v239
  %241 = vmatmul.bf16.gmra.mxu0 %v200
  %v242 = vpop.f32.mrf.mxu0
  %v243 = vadd.f32 0.0, %v242
  %v244 = vpop.f32.mrf.mxu0
  %v245 = vadd.f32 0.0, %v244
  %246 = vmatmul.bf16.gmra.mxu0 %v203
  %v247 = vpop.f32.mrf.mxu0
  %v248 = vadd.f32 0.0, %v247
  %v249 = vpop.f32.mrf.mxu0
  %v250 = vadd.f32 0.0, %v249
  %251 = vmatmul.bf16.gmra.mxu0 %v206
  %v252 = vpop.f32.mrf.mxu0
  %v253 = vadd.f32 0.0, %v252
  %v254 = vpop.f32.mrf.mxu0
  %v255 = vadd.f32 0.0, %v254
  %256 = vdwg.mxu0
  %257 = vmatpush.bf16.msra.mxu0 0
  %258 = vmatpush.bf16.msra.mxu0 0
  %259 = vmatpush.bf16.msra.mxu0 0
  %260 = vmatpush.bf16.msra.mxu0 0
  %261 = vmatpush.bf16.msra.mxu0 %v174
  %262 = vmatpush.bf16.msra.mxu0 %v172
  %263 = vmatpush.bf16.msra.mxu0 %v170
  %264 = vmatpush.bf16.msra.mxu0 %v168
  %265 = vmatmul.bf16.gmra.mxu0 %v185
  %v266 = vpop.f32.mrf.mxu0
  %v267 = vadd.f32 0.0, %v266
  %v268 = vpop.f32.mrf.mxu0
  %v269 = vadd.f32 0.0, %v268
  %270 = vmatmul.bf16.gmra.mxu0 %v188
  %v271 = vpop.f32.mrf.mxu0
  %v272 = vadd.f32 0.0, %v271
  %v273 = vpop.f32.mrf.mxu0
  %v274 = vadd.f32 0.0, %v273
  %275 = vmatmul.bf16.gmra.mxu0 %v191
  %v276 = vpop.f32.mrf.mxu0
  %v277 = vadd.f32 0.0, %v276
  %v278 = vpop.f32.mrf.mxu0
  %v279 = vadd.f32 0.0, %v278
  %280 = vmatmul.bf16.gmra.mxu0 %v194
  %v281 = vpop.f32.mrf.mxu0
  %v282 = vadd.f32 0.0, %v281
  %v283 = vpop.f32.mrf.mxu0
  %v284 = vadd.f32 0.0, %v283
  %285 = vmatmul.bf16.gmra.mxu0 %v197
  %v286 = vpop.f32.mrf.mxu0
  %v287 = vadd.f32 0.0, %v286
  %v288 = vpop.f32.mrf.mxu0
  %v289 = vadd.f32 0.0, %v288
  %290 = vmatmul.bf16.gmra.mxu0 %v200
  %v291 = vpop.f32.mrf.mxu0
  %v292 = vadd.f32 0.0, %v291
  %v293 = vpop.f32.mrf.mxu0
  %v294 = vadd.f32 0.0, %v293
  %295 = vmatmul.bf16.gmra.mxu0 %v203
  %v296 = vpop.f32.mrf.mxu0
  %v297 = vadd.f32 0.0, %v296
  %v298 = vpop.f32.mrf.mxu0
  %v299 = vadd.f32 0.0, %v298
  %300 = vmatmul.bf16.gmra.mxu0 %v206
  %v301 = vpop.f32.mrf.mxu0
  %v302 = vadd.f32 0.0, %v301
  %v303 = vpop.f32.mrf.mxu0
  %v304 = vadd.f32 0.0, %v303
  %305 = vdwg.mxu0
  %v322 = vunpack.c.l.b16 %v55
  %v323 = vunpack.c.l.b16 %v56
  %v324 = vunpack.c.l.b16 %v57
  %v325 = vunpack.c.l.b16 %v58
  %v326 = vunpack.c.l.b16 %v59
  %v327 = vunpack.c.l.b16 %v60
  %v328 = vunpack.c.l.b16 %v61
  %v329 = vunpack.c.l.b16 %v62
  %v330 = vunpack.c.l.b16 %v63
  %v331 = vunpack.c.l.b16 %v64
  %v332 = vunpack.c.l.b16 %v65
  %v333 = vunpack.c.l.b16 %v66
  %v334 = vunpack.c.l.b16 %v67
  %v335 = vunpack.c.l.b16 %v68
  %v336 = vunpack.c.l.b16 %v69
  %v337 = vunpack.c.l.b16 %v70
  %v338 = vpack.c.b16 %v323, %v322
  %v339 = vpack.c.b16 %v325, %v324
  %v340 = vpack.c.b16 %v327, %v326
  %v341 = vpack.c.b16 %v329, %v328
  %v342 = vpack.c.b16 %v331, %v330
  %v343 = vpack.c.b16 %v333, %v332
  %v344 = vpack.c.b16 %v335, %v334
  %v345 = vpack.c.b16 %v337, %v336
  %v354 = vunpack.c.l.b16 %v71
  %v355 = vunpack.c.h.b16 %v71
  %v356 = vunpack.c.l.b16 %v72
  %v357 = vunpack.c.h.b16 %v72
  %v358 = vunpack.c.l.b16 %v73
  %v359 = vunpack.c.h.b16 %v73
  %v360 = vunpack.c.l.b16 %v74
  %v361 = vunpack.c.h.b16 %v74
  %v362 = vunpack.c.l.b16 %v75
  %v363 = vunpack.c.h.b16 %v75
  %v364 = vunpack.c.l.b16 %v76
  %v365 = vunpack.c.h.b16 %v76
  %v366 = vunpack.c.l.b16 %v77
  %v367 = vunpack.c.h.b16 %v77
  %v368 = vunpack.c.l.b16 %v78
  %v369 = vunpack.c.h.b16 %v78
  %v370 = vpack.c.b16 %v356, %v354
  %v371 = vpack.c.b16 %v357, %v355
  %v372 = vpack.c.b16 %v360, %v358
  %v373 = vpack.c.b16 %v361, %v359
  %v374 = vpack.c.b16 %v364, %v362
  %v375 = vpack.c.b16 %v365, %v363
  %v376 = vpack.c.b16 %v368, %v366
  %v377 = vpack.c.b16 %v369, %v367
  %v387 = vsel %vm183, %v338, 0
  %v390 = vsel %vm183, %v339, 0
  %v393 = vsel %vm183, %v340, 0
  %v396 = vsel %vm183, %v341, 0
  %v399 = vsel %vm183, %v342, 0
  %v402 = vsel %vm183, %v343, 0
  %v405 = vsel %vm183, %v344, 0
  %v408 = vsel %vm183, %v345, 0
  %410 = vmatpush.bf16.msra.mxu0 0
  %411 = vmatpush.bf16.msra.mxu0 0
  %412 = vmatpush.bf16.msra.mxu0 0
  %413 = vmatpush.bf16.msra.mxu0 0
  %414 = vmatpush.bf16.msra.mxu0 %v376
  %415 = vmatpush.bf16.msra.mxu0 %v374
  %416 = vmatpush.bf16.msra.mxu0 %v372
  %417 = vmatpush.bf16.msra.mxu0 %v370
  %418 = vmatmul.bf16.gmra.mxu0 %v387
  %v419 = vpop.f32.mrf.mxu0
  %v420 = vadd.f32 %v218, %v419
  %v421 = vpop.f32.mrf.mxu0
  %v422 = vadd.f32 %v220, %v421
  %423 = vmatmul.bf16.gmra.mxu0 %v390
  %v424 = vpop.f32.mrf.mxu0
  %v425 = vadd.f32 %v223, %v424
  %v426 = vpop.f32.mrf.mxu0
  %v427 = vadd.f32 %v225, %v426
  %428 = vmatmul.bf16.gmra.mxu0 %v393
  %v429 = vpop.f32.mrf.mxu0
  %v430 = vadd.f32 %v228, %v429
  %v431 = vpop.f32.mrf.mxu0
  %v432 = vadd.f32 %v230, %v431
  %433 = vmatmul.bf16.gmra.mxu0 %v396
  %v434 = vpop.f32.mrf.mxu0
  %v435 = vadd.f32 %v233, %v434
  %v436 = vpop.f32.mrf.mxu0
  %v437 = vadd.f32 %v235, %v436
  %438 = vmatmul.bf16.gmra.mxu0 %v399
  %v439 = vpop.f32.mrf.mxu0
  %v440 = vadd.f32 %v238, %v439
  %v441 = vpop.f32.mrf.mxu0
  %v442 = vadd.f32 %v240, %v441
  %443 = vmatmul.bf16.gmra.mxu0 %v402
  %v444 = vpop.f32.mrf.mxu0
  %v445 = vadd.f32 %v243, %v444
  %v446 = vpop.f32.mrf.mxu0
  %v447 = vadd.f32 %v245, %v446
  %448 = vmatmul.bf16.gmra.mxu0 %v405
  %v449 = vpop.f32.mrf.mxu0
  %v450 = vadd.f32 %v248, %v449
  %v451 = vpop.f32.mrf.mxu0
  %v452 = vadd.f32 %v250, %v451
  %453 = vmatmul.bf16.gmra.mxu0 %v408
  %v454 = vpop.f32.mrf.mxu0
  %v455 = vadd.f32 %v253, %v454
  %v456 = vpop.f32.mrf.mxu0
  %v457 = vadd.f32 %v255, %v456
  %458 = vdwg.mxu0
  %459 = vmatpush.bf16.msra.mxu0 0
  %460 = vmatpush.bf16.msra.mxu0 0
  %461 = vmatpush.bf16.msra.mxu0 0
  %462 = vmatpush.bf16.msra.mxu0 0
  %463 = vmatpush.bf16.msra.mxu0 %v377
  %464 = vmatpush.bf16.msra.mxu0 %v375
  %465 = vmatpush.bf16.msra.mxu0 %v373
  %466 = vmatpush.bf16.msra.mxu0 %v371
  %467 = vmatmul.bf16.gmra.mxu0 %v387
  %v468 = vpop.f32.mrf.mxu0
  %v469 = vadd.f32 %v267, %v468
  %v470 = vpop.f32.mrf.mxu0
  %v471 = vadd.f32 %v269, %v470
  %472 = vmatmul.bf16.gmra.mxu0 %v390
  %v473 = vpop.f32.mrf.mxu0
  %v474 = vadd.f32 %v272, %v473
  %v475 = vpop.f32.mrf.mxu0
  %v476 = vadd.f32 %v274, %v475
  %477 = vmatmul.bf16.gmra.mxu0 %v393
  %v478 = vpop.f32.mrf.mxu0
  %v479 = vadd.f32 %v277, %v478
  %v480 = vpop.f32.mrf.mxu0
  %v481 = vadd.f32 %v279, %v480
  %482 = vmatmul.bf16.gmra.mxu0 %v396
  %v483 = vpop.f32.mrf.mxu0
  %v484 = vadd.f32 %v282, %v483
  %v485 = vpop.f32.mrf.mxu0
  %v486 = vadd.f32 %v284, %v485
  %487 = vmatmul.bf16.gmra.mxu0 %v399
  %v488 = vpop.f32.mrf.mxu0
  %v489 = vadd.f32 %v287, %v488
  %v490 = vpop.f32.mrf.mxu0
  %v491 = vadd.f32 %v289, %v490
  %492 = vmatmul.bf16.gmra.mxu0 %v402
  %v493 = vpop.f32.mrf.mxu0
  %v494 = vadd.f32 %v292, %v493
  %v495 = vpop.f32.mrf.mxu0
  %v496 = vadd.f32 %v294, %v495
  %497 = vmatmul.bf16.gmra.mxu0 %v405
  %v498 = vpop.f32.mrf.mxu0
  %v499 = vadd.f32 %v297, %v498
  %v500 = vpop.f32.mrf.mxu0
  %v501 = vadd.f32 %v299, %v500
  %502 = vmatmul.bf16.gmra.mxu0 %v408
  %v503 = vpop.f32.mrf.mxu0
  %v504 = vadd.f32 %v302, %v503
  %v505 = vpop.f32.mrf.mxu0
  %v506 = vadd.f32 %v304, %v505
  %507 = vdwg.mxu0
  %v508 = vpack.c.bf16 %v40, %v39
  %v509 = vpack.c.bf16 %v42, %v41
  %v510 = vpack.c.bf16 %v44, %v43
  %v511 = vpack.c.bf16 %v46, %v45
  %v512 = vpack.c.bf16 %v48, %v47
  %v513 = vpack.c.bf16 %v50, %v49
  %v514 = vpack.c.bf16 %v52, %v51
  %v515 = vpack.c.bf16 %v54, %v53
  %v516 = vld [vmem:[%s5] sm:$0xff]
  %v517 = vld [vmem:[%s5 + $0x8] sm:$0xff]
  %v518 = vld [vmem:[%s5 + $0x10] sm:$0xff]
  %v519 = vld [vmem:[%s5 + $0x18] sm:$0xff]
  %v520 = vld [vmem:[%s5 + $0x20] sm:$0xff]
  %v521 = vld [vmem:[%s5 + $0x28] sm:$0xff]
  %v522 = vld [vmem:[%s5 + $0x30] sm:$0xff]
  %v523 = vld [vmem:[%s5 + $0x38] sm:$0xff]
  %v532 = vunpack.c.l.b16 %v516
  %v533 = vunpack.c.h.b16 %v516
  %v534 = vunpack.c.l.b16 %v517
  %v535 = vunpack.c.h.b16 %v517
  %v536 = vunpack.c.l.b16 %v518
  %v537 = vunpack.c.h.b16 %v518
  %v538 = vunpack.c.l.b16 %v519
  %v539 = vunpack.c.h.b16 %v519
  %v540 = vunpack.c.l.b16 %v520
  %v541 = vunpack.c.h.b16 %v520
  %v542 = vunpack.c.l.b16 %v521
  %v543 = vunpack.c.h.b16 %v521
  %v544 = vunpack.c.l.b16 %v522
  %v545 = vunpack.c.h.b16 %v522
  %v546 = vunpack.c.l.b16 %v523
  %v547 = vunpack.c.h.b16 %v523
  %v548 = vpack.c.b16 %v534, %v532
  %v549 = vpack.c.b16 %v535, %v533
  %v550 = vpack.c.b16 %v538, %v536
  %v551 = vpack.c.b16 %v539, %v537
  %v552 = vpack.c.b16 %v542, %v540
  %v553 = vpack.c.b16 %v543, %v541
  %v554 = vpack.c.b16 %v546, %v544
  %v555 = vpack.c.b16 %v547, %v545
  %v565 = vsel %vm183, %v508, 0
  %v568 = vsel %vm183, %v509, 0
  %v571 = vsel %vm183, %v510, 0
  %v574 = vsel %vm183, %v511, 0
  %v577 = vsel %vm183, %v512, 0
  %v580 = vsel %vm183, %v513, 0
  %v583 = vsel %vm183, %v514, 0
  %v586 = vsel %vm183, %v515, 0
  %588 = vmatpush.bf16.msra.mxu0 0
  %589 = vmatpush.bf16.msra.mxu0 0
  %590 = vmatpush.bf16.msra.mxu0 0
  %591 = vmatpush.bf16.msra.mxu0 0
  %592 = vmatpush.bf16.msra.mxu0 %v554
  %593 = vmatpush.bf16.msra.mxu0 %v552
  %594 = vmatpush.bf16.msra.mxu0 %v550
  %595 = vmatpush.bf16.msra.mxu0 %v548
  %596 = vmatmul.bf16.gmra.mxu0 %v565
  %v597 = vpop.f32.mrf.mxu0
  %v598 = vadd.f32 0.0, %v597
  %v599 = vpop.f32.mrf.mxu0
  %v600 = vadd.f32 0.0, %v599
  %601 = vmatmul.bf16.gmra.mxu0 %v568
  %v602 = vpop.f32.mrf.mxu0
  %v603 = vadd.f32 0.0, %v602
  %v604 = vpop.f32.mrf.mxu0
  %v605 = vadd.f32 0.0, %v604
  %606 = vmatmul.bf16.gmra.mxu0 %v571
  %v607 = vpop.f32.mrf.mxu0
  %v608 = vadd.f32 0.0, %v607
  %v609 = vpop.f32.mrf.mxu0
  %v610 = vadd.f32 0.0, %v609
  %611 = vmatmul.bf16.gmra.mxu0 %v574
  %v612 = vpop.f32.mrf.mxu0
  %v613 = vadd.f32 0.0, %v612
  %v614 = vpop.f32.mrf.mxu0
  %v615 = vadd.f32 0.0, %v614
  %616 = vmatmul.bf16.gmra.mxu0 %v577
  %v617 = vpop.f32.mrf.mxu0
  %v618 = vadd.f32 0.0, %v617
  %v619 = vpop.f32.mrf.mxu0
  %v620 = vadd.f32 0.0, %v619
  %621 = vmatmul.bf16.gmra.mxu0 %v580
  %v622 = vpop.f32.mrf.mxu0
  %v623 = vadd.f32 0.0, %v622
  %v624 = vpop.f32.mrf.mxu0
  %v625 = vadd.f32 0.0, %v624
  %626 = vmatmul.bf16.gmra.mxu0 %v583
  %v627 = vpop.f32.mrf.mxu0
  %v628 = vadd.f32 0.0, %v627
  %v629 = vpop.f32.mrf.mxu0
  %v630 = vadd.f32 0.0, %v629
  %631 = vmatmul.bf16.gmra.mxu0 %v586
  %v632 = vpop.f32.mrf.mxu0
  %v633 = vadd.f32 0.0, %v632
  %v634 = vpop.f32.mrf.mxu0
  %v635 = vadd.f32 0.0, %v634
  %636 = vdwg.mxu0
  %637 = vmatpush.bf16.msra.mxu0 0
  %638 = vmatpush.bf16.msra.mxu0 0
  %639 = vmatpush.bf16.msra.mxu0 0
  %640 = vmatpush.bf16.msra.mxu0 0
  %641 = vmatpush.bf16.msra.mxu0 %v555
  %642 = vmatpush.bf16.msra.mxu0 %v553
  %643 = vmatpush.bf16.msra.mxu0 %v551
  %644 = vmatpush.bf16.msra.mxu0 %v549
  %645 = vmatmul.bf16.gmra.mxu0 %v565
  %v646 = vpop.f32.mrf.mxu0
  %v647 = vadd.f32 0.0, %v646
  %v648 = vpop.f32.mrf.mxu0
  %v649 = vadd.f32 0.0, %v648
  %650 = vmatmul.bf16.gmra.mxu0 %v568
  %v651 = vpop.f32.mrf.mxu0
  %v652 = vadd.f32 0.0, %v651
  %v653 = vpop.f32.mrf.mxu0
  %v654 = vadd.f32 0.0, %v653
  %655 = vmatmul.bf16.gmra.mxu0 %v571
  %v656 = vpop.f32.mrf.mxu0
  %v657 = vadd.f32 0.0, %v656
  %v658 = vpop.f32.mrf.mxu0
  %v659 = vadd.f32 0.0, %v658
  %660 = vmatmul.bf16.gmra.mxu0 %v574
  %v661 = vpop.f32.mrf.mxu0
  %v662 = vadd.f32 0.0, %v661
  %v663 = vpop.f32.mrf.mxu0
  %v664 = vadd.f32 0.0, %v663
  %665 = vmatmul.bf16.gmra.mxu0 %v577
  %v666 = vpop.f32.mrf.mxu0
  %v667 = vadd.f32 0.0, %v666
  %v668 = vpop.f32.mrf.mxu0
  %v669 = vadd.f32 0.0, %v668
  %670 = vmatmul.bf16.gmra.mxu0 %v580
  %v671 = vpop.f32.mrf.mxu0
  %v672 = vadd.f32 0.0, %v671
  %v673 = vpop.f32.mrf.mxu0
  %v674 = vadd.f32 0.0, %v673
  %675 = vmatmul.bf16.gmra.mxu0 %v583
  %v676 = vpop.f32.mrf.mxu0
  %v677 = vadd.f32 0.0, %v676
  %v678 = vpop.f32.mrf.mxu0
  %v679 = vadd.f32 0.0, %v678
  %680 = vmatmul.bf16.gmra.mxu0 %v586
  %v681 = vpop.f32.mrf.mxu0
  %v682 = vadd.f32 0.0, %v681
  %v683 = vpop.f32.mrf.mxu0
  %v684 = vadd.f32 0.0, %v683
  %685 = vdwg.mxu0
  %v686 = vadd.f32 %v420, %v598
  %v687 = vadd.f32 %v469, %v647
  %v688 = vadd.f32 %v422, %v600
  %v689 = vadd.f32 %v471, %v649
  %v690 = vadd.f32 %v425, %v603
  %v691 = vadd.f32 %v474, %v652
  %v692 = vadd.f32 %v427, %v605
  %v693 = vadd.f32 %v476, %v654
  %v694 = vadd.f32 %v430, %v608
  %v695 = vadd.f32 %v479, %v657
  %v696 = vadd.f32 %v432, %v610
  %v697 = vadd.f32 %v481, %v659
  %v698 = vadd.f32 %v435, %v613
  %v699 = vadd.f32 %v484, %v662
  %v700 = vadd.f32 %v437, %v615
  %v701 = vadd.f32 %v486, %v664
  %v702 = vadd.f32 %v440, %v618
  %v703 = vadd.f32 %v489, %v667
  %v704 = vadd.f32 %v442, %v620
  %v705 = vadd.f32 %v491, %v669
  %v706 = vadd.f32 %v445, %v623
  %v707 = vadd.f32 %v494, %v672
  %v708 = vadd.f32 %v447, %v625
  %v709 = vadd.f32 %v496, %v674
  %v710 = vadd.f32 %v450, %v628
  %v711 = vadd.f32 %v499, %v677
  %v712 = vadd.f32 %v452, %v630
  %v713 = vadd.f32 %v501, %v679
  %v714 = vadd.f32 %v455, %v633
  %v715 = vadd.f32 %v504, %v682
  %v716 = vadd.f32 %v457, %v635
  %v717 = vadd.f32 %v506, %v684
  %v718 = vld [vmem:[%s6] sm:$0x3]
  %v720 = vperm.slane %v718, 0
  %v721 = vperm.slane %v718, 1
  %v724 = vadd.f32 %v686, %v720
  %v725 = vadd.f32 %v687, %v721
  %v726 = vadd.f32 %v688, %v720
  %v727 = vadd.f32 %v689, %v721
  %v728 = vadd.f32 %v690, %v720
  %v729 = vadd.f32 %v691, %v721
  %v730 = vadd.f32 %v692, %v720
  %v731 = vadd.f32 %v693, %v721
  %v732 = vadd.f32 %v694, %v720
  %v733 = vadd.f32 %v695, %v721
  %v734 = vadd.f32 %v696, %v720
  %v735 = vadd.f32 %v697, %v721
  %v736 = vadd.f32 %v698, %v720
  %v737 = vadd.f32 %v699, %v721
  %v738 = vadd.f32 %v700, %v720
  %v739 = vadd.f32 %v701, %v721
  %v740 = vadd.f32 %v702, %v720
  %v741 = vadd.f32 %v703, %v721
  %v742 = vadd.f32 %v704, %v720
  %v743 = vadd.f32 %v705, %v721
  %v744 = vadd.f32 %v706, %v720
  %v745 = vadd.f32 %v707, %v721
  %v746 = vadd.f32 %v708, %v720
  %v747 = vadd.f32 %v709, %v721
  %v748 = vadd.f32 %v710, %v720
  %v749 = vadd.f32 %v711, %v721
  %v750 = vadd.f32 %v712, %v720
  %v751 = vadd.f32 %v713, %v721
  %v752 = vadd.f32 %v714, %v720
  %v753 = vadd.f32 %v715, %v721
  %v754 = vadd.f32 %v716, %v720
  %v755 = vadd.f32 %v717, %v721
  %v756 = vsel %vm183, %v725, 0.0
  %v757 = vadd.f32 %v724, %v756
  %758 = vadd.xlane.f32.xlu0 %v757
  %v759 = vpop.xlane.xlu0 %758
  %v760 = vsel %vm183, %v727, 0.0
  %v761 = vadd.f32 %v726, %v760
  %762 = vadd.xlane.f32.xlu0 %v761
  %v763 = vpop.xlane.xlu0 %762
  %v764 = vsel %vm183, %v729, 0.0
  %v765 = vadd.f32 %v728, %v764
  %766 = vadd.xlane.f32.xlu0 %v765
  %v767 = vpop.xlane.xlu0 %766
  %v768 = vsel %vm183, %v731, 0.0
  %v769 = vadd.f32 %v730, %v768
  %770 = vadd.xlane.f32.xlu0 %v769
  %v771 = vpop.xlane.xlu0 %770
  %v772 = vsel %vm183, %v733, 0.0
  %v773 = vadd.f32 %v732, %v772
  %774 = vadd.xlane.f32.xlu0 %v773
  %v775 = vpop.xlane.xlu0 %774
  %v776 = vsel %vm183, %v735, 0.0
  %v777 = vadd.f32 %v734, %v776
  %778 = vadd.xlane.f32.xlu0 %v777
  %v779 = vpop.xlane.xlu0 %778
  %v780 = vsel %vm183, %v737, 0.0
  %v781 = vadd.f32 %v736, %v780
  %782 = vadd.xlane.f32.xlu0 %v781
  %v783 = vpop.xlane.xlu0 %782
  %v784 = vsel %vm183, %v739, 0.0
  %v785 = vadd.f32 %v738, %v784
  %786 = vadd.xlane.f32.xlu0 %v785
  %v787 = vpop.xlane.xlu0 %786
  %v788 = vsel %vm183, %v741, 0.0
  %v789 = vadd.f32 %v740, %v788
  %790 = vadd.xlane.f32.xlu0 %v789
  %v791 = vpop.xlane.xlu0 %790
  %v792 = vsel %vm183, %v743, 0.0
  %v793 = vadd.f32 %v742, %v792
  %794 = vadd.xlane.f32.xlu0 %v793
  %v795 = vpop.xlane.xlu0 %794
  %v796 = vsel %vm183, %v745, 0.0
  %v797 = vadd.f32 %v744, %v796
  %798 = vadd.xlane.f32.xlu0 %v797
  %v799 = vpop.xlane.xlu0 %798
  %v800 = vsel %vm183, %v747, 0.0
  %v801 = vadd.f32 %v746, %v800
  %802 = vadd.xlane.f32.xlu0 %v801
  %v803 = vpop.xlane.xlu0 %802
  %v804 = vsel %vm183, %v749, 0.0
  %v805 = vadd.f32 %v748, %v804
  %806 = vadd.xlane.f32.xlu0 %v805
  %v807 = vpop.xlane.xlu0 %806
  %v808 = vsel %vm183, %v751, 0.0
  %v809 = vadd.f32 %v750, %v808
  %810 = vadd.xlane.f32.xlu0 %v809
  %v811 = vpop.xlane.xlu0 %810
  %v812 = vsel %vm183, %v753, 0.0
  %v813 = vadd.f32 %v752, %v812
  %814 = vadd.xlane.f32.xlu0 %v813
  %v815 = vpop.xlane.xlu0 %814
  %v816 = vsel %vm183, %v755, 0.0
  %v817 = vadd.f32 %v754, %v816
  %818 = vadd.xlane.f32.xlu0 %v817
  %v819 = vpop.xlane.xlu0 %818
  %v820 = vrcp.pop 192.0
  %v821 = vmul.f32 192.0, %v820
  %v822 = vsub.f32 1.0, %v821
  %v823 = vmul.f32 %v820, %v822
  %v824 = vadd.f32 %v820, %v823
  %vm825 = vweird.f32 %v820
  %v826 = vsel %vm825, %v820, %v824
  %v827 = vmul.f32 %v759, %v826
  %v828 = vmul.f32 %v763, %v826
  %v829 = vmul.f32 %v767, %v826
  %v830 = vmul.f32 %v771, %v826
  %v831 = vmul.f32 %v775, %v826
  %v832 = vmul.f32 %v779, %v826
  %v833 = vmul.f32 %v783, %v826
  %v834 = vmul.f32 %v787, %v826
  %v835 = vmul.f32 %v791, %v826
  %v836 = vmul.f32 %v795, %v826
  %v837 = vmul.f32 %v799, %v826
  %v838 = vmul.f32 %v803, %v826
  %v839 = vmul.f32 %v807, %v826
  %v840 = vmul.f32 %v811, %v826
  %v841 = vmul.f32 %v815, %v826
  %v842 = vmul.f32 %v819, %v826
  %v843 = vsub.f32 %v724, %v827
  %v844 = vsub.f32 %v725, %v827
  %v845 = vsub.f32 %v726, %v828
  %v846 = vsub.f32 %v727, %v828
  %v847 = vsub.f32 %v728, %v829
  %v848 = vsub.f32 %v729, %v829
  %v849 = vsub.f32 %v730, %v830
  %v850 = vsub.f32 %v731, %v830
  %v851 = vsub.f32 %v732, %v831
  %v852 = vsub.f32 %v733, %v831
  %v853 = vsub.f32 %v734, %v832
  %v854 = vsub.f32 %v735, %v832
  %v855 = vsub.f32 %v736, %v833
  %v856 = vsub.f32 %v737, %v833
  %v857 = vsub.f32 %v738, %v834
  %v858 = vsub.f32 %v739, %v834
  %v859 = vsub.f32 %v740, %v835
  %v860 = vsub.f32 %v741, %v835
  %v861 = vsub.f32 %v742, %v836
  %v862 = vsub.f32 %v743, %v836
  %v863 = vsub.f32 %v744, %v837
  %v864 = vsub.f32 %v745, %v837
  %v865 = vsub.f32 %v746, %v838
  %v866 = vsub.f32 %v747, %v838
  %v867 = vsub.f32 %v748, %v839
  %v868 = vsub.f32 %v749, %v839
  %v869 = vsub.f32 %v750, %v840
  %v870 = vsub.f32 %v751, %v840
  %v871 = vsub.f32 %v752, %v841
  %v872 = vsub.f32 %v753, %v841
  %v873 = vsub.f32 %v754, %v842
  %v874 = vsub.f32 %v755, %v842
  %v875 = vmul.f32 %v843, %v843
  %v876 = vmul.f32 %v844, %v844
  %v877 = vmul.f32 %v845, %v845
  %v878 = vmul.f32 %v846, %v846
  %v879 = vmul.f32 %v847, %v847
  %v880 = vmul.f32 %v848, %v848
  %v881 = vmul.f32 %v849, %v849
  %v882 = vmul.f32 %v850, %v850
  %v883 = vmul.f32 %v851, %v851
  %v884 = vmul.f32 %v852, %v852
  %v885 = vmul.f32 %v853, %v853
  %v886 = vmul.f32 %v854, %v854
  %v887 = vmul.f32 %v855, %v855
  %v888 = vmul.f32 %v856, %v856
  %v889 = vmul.f32 %v857, %v857
  %v890 = vmul.f32 %v858, %v858
  %v891 = vmul.f32 %v859, %v859
  %v892 = vmul.f32 %v860, %v860
  %v893 = vmul.f32 %v861, %v861
  %v894 = vmul.f32 %v862, %v862
  %v895 = vmul.f32 %v863, %v863
  %v896 = vmul.f32 %v864, %v864
  %v897 = vmul.f32 %v865, %v865
  %v898 = vmul.f32 %v866, %v866
  %v899 = vmul.f32 %v867, %v867
  %v900 = vmul.f32 %v868, %v868
  %v901 = vmul.f32 %v869, %v869
  %v902 = vmul.f32 %v870, %v870
  %v903 = vmul.f32 %v871, %v871
  %v904 = vmul.f32 %v872, %v872
  %v905 = vmul.f32 %v873, %v873
  %v906 = vmul.f32 %v874, %v874
  %v907 = vsel %vm183, %v876, 0.0
  %v908 = vadd.f32 %v875, %v907
  %909 = vadd.xlane.f32.xlu0 %v908
  %v910 = vpop.xlane.xlu0 %909
  %v911 = vsel %vm183, %v878, 0.0
  %v912 = vadd.f32 %v877, %v911
  %913 = vadd.xlane.f32.xlu0 %v912
  %v914 = vpop.xlane.xlu0 %913
  %v915 = vsel %vm183, %v880, 0.0
  %v916 = vadd.f32 %v879, %v915
  %917 = vadd.xlane.f32.xlu0 %v916
  %v918 = vpop.xlane.xlu0 %917
  %v919 = vsel %vm183, %v882, 0.0
  %v920 = vadd.f32 %v881, %v919
  %921 = vadd.xlane.f32.xlu0 %v920
  %v922 = vpop.xlane.xlu0 %921
  %v923 = vsel %vm183, %v884, 0.0
  %v924 = vadd.f32 %v883, %v923
  %925 = vadd.xlane.f32.xlu0 %v924
  %v926 = vpop.xlane.xlu0 %925
  %v927 = vsel %vm183, %v886, 0.0
  %v928 = vadd.f32 %v885, %v927
  %929 = vadd.xlane.f32.xlu0 %v928
  %v930 = vpop.xlane.xlu0 %929
  %v931 = vsel %vm183, %v888, 0.0
  %v932 = vadd.f32 %v887, %v931
  %933 = vadd.xlane.f32.xlu0 %v932
  %v934 = vpop.xlane.xlu0 %933
  %v935 = vsel %vm183, %v890, 0.0
  %v936 = vadd.f32 %v889, %v935
  %937 = vadd.xlane.f32.xlu0 %v936
  %v938 = vpop.xlane.xlu0 %937
  %v939 = vsel %vm183, %v892, 0.0
  %v940 = vadd.f32 %v891, %v939
  %941 = vadd.xlane.f32.xlu0 %v940
  %v942 = vpop.xlane.xlu0 %941
  %v943 = vsel %vm183, %v894, 0.0
  %v944 = vadd.f32 %v893, %v943
  %945 = vadd.xlane.f32.xlu0 %v944
  %v946 = vpop.xlane.xlu0 %945
  %v947 = vsel %vm183, %v896, 0.0
  %v948 = vadd.f32 %v895, %v947
  %949 = vadd.xlane.f32.xlu0 %v948
  %v950 = vpop.xlane.xlu0 %949
  %v951 = vsel %vm183, %v898, 0.0
  %v952 = vadd.f32 %v897, %v951
  %953 = vadd.xlane.f32.xlu0 %v952
  %v954 = vpop.xlane.xlu0 %953
  %v955 = vsel %vm183, %v900, 0.0
  %v956 = vadd.f32 %v899, %v955
  %957 = vadd.xlane.f32.xlu0 %v956
  %v958 = vpop.xlane.xlu0 %957
  %v959 = vsel %vm183, %v902, 0.0
  %v960 = vadd.f32 %v901, %v959
  %961 = vadd.xlane.f32.xlu0 %v960
  %v962 = vpop.xlane.xlu0 %961
  %v963 = vsel %vm183, %v904, 0.0
  %v964 = vadd.f32 %v903, %v963
  %965 = vadd.xlane.f32.xlu0 %v964
  %v966 = vpop.xlane.xlu0 %965
  %v967 = vsel %vm183, %v906, 0.0
  %v968 = vadd.f32 %v905, %v967
  %969 = vadd.xlane.f32.xlu0 %v968
  %v970 = vpop.xlane.xlu0 %969
  %v971 = vmul.f32 %v910, %v826
  %v972 = vmul.f32 %v914, %v826
  %v973 = vmul.f32 %v918, %v826
  %v974 = vmul.f32 %v922, %v826
  %v975 = vmul.f32 %v926, %v826
  %v976 = vmul.f32 %v930, %v826
  %v977 = vmul.f32 %v934, %v826
  %v978 = vmul.f32 %v938, %v826
  %v979 = vmul.f32 %v942, %v826
  %v980 = vmul.f32 %v946, %v826
  %v981 = vmul.f32 %v950, %v826
  %v982 = vmul.f32 %v954, %v826
  %v983 = vmul.f32 %v958, %v826
  %v984 = vmul.f32 %v962, %v826
  %v985 = vmul.f32 %v966, %v826
  %v986 = vmul.f32 %v970, %v826
  %v987 = vadd.f32 %v971, 1e-05
  %v988 = vadd.f32 %v972, 1e-05
  %v989 = vadd.f32 %v973, 1e-05
  %v990 = vadd.f32 %v974, 1e-05
  %v991 = vadd.f32 %v975, 1e-05
  %v992 = vadd.f32 %v976, 1e-05
  %v993 = vadd.f32 %v977, 1e-05
  %v994 = vadd.f32 %v978, 1e-05
  %v995 = vadd.f32 %v979, 1e-05
  %v996 = vadd.f32 %v980, 1e-05
  %v997 = vadd.f32 %v981, 1e-05
  %v998 = vadd.f32 %v982, 1e-05
  %v999 = vadd.f32 %v983, 1e-05
  %v1000 = vadd.f32 %v984, 1e-05
  %v1001 = vadd.f32 %v985, 1e-05
  %v1002 = vadd.f32 %v986, 1e-05
  %v1003 = vrsqrt.pop %v987
  %v1004 = vmul.f32 %v1003, %v987
  %v1005 = vmul.f32 %v1004, %v1003
  %v1006 = vmul.f32 0.5, %v1005
  %v1007 = vsub.f32 1.5, %v1006
  %v1008 = vmul.f32 %v1003, %v1007
  %vm1009 = vweird.f32 %v987
  %vm1010 = vweird.f32 %v1003
  %vm1011 = vmor %vm1009, %vm1010
  %v1012 = vsel %vm1011, %v1003, %v1008
  %v1013 = vrsqrt.pop %v988
  %v1014 = vmul.f32 %v1013, %v988
  %v1015 = vmul.f32 %v1014, %v1013
  %v1016 = vmul.f32 0.5, %v1015
  %v1017 = vsub.f32 1.5, %v1016
  %v1018 = vmul.f32 %v1013, %v1017
  %vm1019 = vweird.f32 %v988
  %vm1020 = vweird.f32 %v1013
  %vm1021 = vmor %vm1019, %vm1020
  %v1022 = vsel %vm1021, %v1013, %v1018
  %v1023 = vrsqrt.pop %v989
  %v1024 = vmul.f32 %v1023, %v989
  %v1025 = vmul.f32 %v1024, %v1023
  %v1026 = vmul.f32 0.5, %v1025
  %v1027 = vsub.f32 1.5, %v1026
  %v1028 = vmul.f32 %v1023, %v1027
  %vm1029 = vweird.f32 %v989
  %vm1030 = vweird.f32 %v1023
  %vm1031 = vmor %vm1029, %vm1030
  %v1032 = vsel %vm1031, %v1023, %v1028
  %v1033 = vrsqrt.pop %v990
  %v1034 = vmul.f32 %v1033, %v990
  %v1035 = vmul.f32 %v1034, %v1033
  %v1036 = vmul.f32 0.5, %v1035
  %v1037 = vsub.f32 1.5, %v1036
  %v1038 = vmul.f32 %v1033, %v1037
  %vm1039 = vweird.f32 %v990
  %vm1040 = vweird.f32 %v1033
  %vm1041 = vmor %vm1039, %vm1040
  %v1042 = vsel %vm1041, %v1033, %v1038
  %v1043 = vrsqrt.pop %v991
  %v1044 = vmul.f32 %v1043, %v991
  %v1045 = vmul.f32 %v1044, %v1043
  %v1046 = vmul.f32 0.5, %v1045
  %v1047 = vsub.f32 1.5, %v1046
  %v1048 = vmul.f32 %v1043, %v1047
  %vm1049 = vweird.f32 %v991
  %vm1050 = vweird.f32 %v1043
  %vm1051 = vmor %vm1049, %vm1050
  %v1052 = vsel %vm1051, %v1043, %v1048
  %v1053 = vrsqrt.pop %v992
  %v1054 = vmul.f32 %v1053, %v992
  %v1055 = vmul.f32 %v1054, %v1053
  %v1056 = vmul.f32 0.5, %v1055
  %v1057 = vsub.f32 1.5, %v1056
  %v1058 = vmul.f32 %v1053, %v1057
  %vm1059 = vweird.f32 %v992
  %vm1060 = vweird.f32 %v1053
  %vm1061 = vmor %vm1059, %vm1060
  %v1062 = vsel %vm1061, %v1053, %v1058
  %v1063 = vrsqrt.pop %v993
  %v1064 = vmul.f32 %v1063, %v993
  %v1065 = vmul.f32 %v1064, %v1063
  %v1066 = vmul.f32 0.5, %v1065
  %v1067 = vsub.f32 1.5, %v1066
  %v1068 = vmul.f32 %v1063, %v1067
  %vm1069 = vweird.f32 %v993
  %vm1070 = vweird.f32 %v1063
  %vm1071 = vmor %vm1069, %vm1070
  %v1072 = vsel %vm1071, %v1063, %v1068
  %v1073 = vrsqrt.pop %v994
  %v1074 = vmul.f32 %v1073, %v994
  %v1075 = vmul.f32 %v1074, %v1073
  %v1076 = vmul.f32 0.5, %v1075
  %v1077 = vsub.f32 1.5, %v1076
  %v1078 = vmul.f32 %v1073, %v1077
  %vm1079 = vweird.f32 %v994
  %vm1080 = vweird.f32 %v1073
  %vm1081 = vmor %vm1079, %vm1080
  %v1082 = vsel %vm1081, %v1073, %v1078
  %v1083 = vrsqrt.pop %v995
  %v1084 = vmul.f32 %v1083, %v995
  %v1085 = vmul.f32 %v1084, %v1083
  %v1086 = vmul.f32 0.5, %v1085
  %v1087 = vsub.f32 1.5, %v1086
  %v1088 = vmul.f32 %v1083, %v1087
  %vm1089 = vweird.f32 %v995
  %vm1090 = vweird.f32 %v1083
  %vm1091 = vmor %vm1089, %vm1090
  %v1092 = vsel %vm1091, %v1083, %v1088
  %v1093 = vrsqrt.pop %v996
  %v1094 = vmul.f32 %v1093, %v996
  %v1095 = vmul.f32 %v1094, %v1093
  %v1096 = vmul.f32 0.5, %v1095
  %v1097 = vsub.f32 1.5, %v1096
  %v1098 = vmul.f32 %v1093, %v1097
  %vm1099 = vweird.f32 %v996
  %vm1100 = vweird.f32 %v1093
  %vm1101 = vmor %vm1099, %vm1100
  %v1102 = vsel %vm1101, %v1093, %v1098
  %v1103 = vrsqrt.pop %v997
  %v1104 = vmul.f32 %v1103, %v997
  %v1105 = vmul.f32 %v1104, %v1103
  %v1106 = vmul.f32 0.5, %v1105
  %v1107 = vsub.f32 1.5, %v1106
  %v1108 = vmul.f32 %v1103, %v1107
  %vm1109 = vweird.f32 %v997
  %vm1110 = vweird.f32 %v1103
  %vm1111 = vmor %vm1109, %vm1110
  %v1112 = vsel %vm1111, %v1103, %v1108
  %v1113 = vrsqrt.pop %v998
  %v1114 = vmul.f32 %v1113, %v998
  %v1115 = vmul.f32 %v1114, %v1113
  %v1116 = vmul.f32 0.5, %v1115
  %v1117 = vsub.f32 1.5, %v1116
  %v1118 = vmul.f32 %v1113, %v1117
  %vm1119 = vweird.f32 %v998
  %vm1120 = vweird.f32 %v1113
  %vm1121 = vmor %vm1119, %vm1120
  %v1122 = vsel %vm1121, %v1113, %v1118
  %v1123 = vrsqrt.pop %v999
  %v1124 = vmul.f32 %v1123, %v999
  %v1125 = vmul.f32 %v1124, %v1123
  %v1126 = vmul.f32 0.5, %v1125
  %v1127 = vsub.f32 1.5, %v1126
  %v1128 = vmul.f32 %v1123, %v1127
  %vm1129 = vweird.f32 %v999
  %vm1130 = vweird.f32 %v1123
  %vm1131 = vmor %vm1129, %vm1130
  %v1132 = vsel %vm1131, %v1123, %v1128
  %v1133 = vrsqrt.pop %v1000
  %v1134 = vmul.f32 %v1133, %v1000
  %v1135 = vmul.f32 %v1134, %v1133
  %v1136 = vmul.f32 0.5, %v1135
  %v1137 = vsub.f32 1.5, %v1136
  %v1138 = vmul.f32 %v1133, %v1137
  %vm1139 = vweird.f32 %v1000
  %vm1140 = vweird.f32 %v1133
  %vm1141 = vmor %vm1139, %vm1140
  %v1142 = vsel %vm1141, %v1133, %v1138
  %v1143 = vrsqrt.pop %v1001
  %v1144 = vmul.f32 %v1143, %v1001
  %v1145 = vmul.f32 %v1144, %v1143
  %v1146 = vmul.f32 0.5, %v1145
  %v1147 = vsub.f32 1.5, %v1146
  %v1148 = vmul.f32 %v1143, %v1147
  %vm1149 = vweird.f32 %v1001
  %vm1150 = vweird.f32 %v1143
  %vm1151 = vmor %vm1149, %vm1150
  %v1152 = vsel %vm1151, %v1143, %v1148
  %v1153 = vrsqrt.pop %v1002
  %v1154 = vmul.f32 %v1153, %v1002
  %v1155 = vmul.f32 %v1154, %v1153
  %v1156 = vmul.f32 0.5, %v1155
  %v1157 = vsub.f32 1.5, %v1156
  %v1158 = vmul.f32 %v1153, %v1157
  %vm1159 = vweird.f32 %v1002
  %vm1160 = vweird.f32 %v1153
  %vm1161 = vmor %vm1159, %vm1160
  %v1162 = vsel %vm1161, %v1153, %v1158
  %v1163 = vmul.f32 %v843, %v1012
  %v1164 = vmul.f32 %v844, %v1012
  %v1165 = vmul.f32 %v845, %v1022
  %v1166 = vmul.f32 %v846, %v1022
  %v1167 = vmul.f32 %v847, %v1032
  %v1168 = vmul.f32 %v848, %v1032
  %v1169 = vmul.f32 %v849, %v1042
  %v1170 = vmul.f32 %v850, %v1042
  %v1171 = vmul.f32 %v851, %v1052
  %v1172 = vmul.f32 %v852, %v1052
  %v1173 = vmul.f32 %v853, %v1062
  %v1174 = vmul.f32 %v854, %v1062
  %v1175 = vmul.f32 %v855, %v1072
  %v1176 = vmul.f32 %v856, %v1072
  %v1177 = vmul.f32 %v857, %v1082
  %v1178 = vmul.f32 %v858, %v1082
  %v1179 = vmul.f32 %v859, %v1092
  %v1180 = vmul.f32 %v860, %v1092
  %v1181 = vmul.f32 %v861, %v1102
  %v1182 = vmul.f32 %v862, %v1102
  %v1183 = vmul.f32 %v863, %v1112
  %v1184 = vmul.f32 %v864, %v1112
  %v1185 = vmul.f32 %v865, %v1122
  %v1186 = vmul.f32 %v866, %v1122
  %v1187 = vmul.f32 %v867, %v1132
  %v1188 = vmul.f32 %v868, %v1132
  %v1189 = vmul.f32 %v869, %v1142
  %v1190 = vmul.f32 %v870, %v1142
  %v1191 = vmul.f32 %v871, %v1152
  %v1192 = vmul.f32 %v872, %v1152
  %v1193 = vmul.f32 %v873, %v1162
  %v1194 = vmul.f32 %v874, %v1162
  %v1195 = vld [vmem:[%s7] sm:$0x3]
  %v1197 = vperm.slane %v1195, 0
  %v1198 = vperm.slane %v1195, 1
  %v1201 = vmul.f32 %v1163, %v1197
  %v1202 = vmul.f32 %v1164, %v1198
  %v1203 = vmul.f32 %v1165, %v1197
  %v1204 = vmul.f32 %v1166, %v1198
  %v1205 = vmul.f32 %v1167, %v1197
  %v1206 = vmul.f32 %v1168, %v1198
  %v1207 = vmul.f32 %v1169, %v1197
  %v1208 = vmul.f32 %v1170, %v1198
  %v1209 = vmul.f32 %v1171, %v1197
  %v1210 = vmul.f32 %v1172, %v1198
  %v1211 = vmul.f32 %v1173, %v1197
  %v1212 = vmul.f32 %v1174, %v1198
  %v1213 = vmul.f32 %v1175, %v1197
  %v1214 = vmul.f32 %v1176, %v1198
  %v1215 = vmul.f32 %v1177, %v1197
  %v1216 = vmul.f32 %v1178, %v1198
  %v1217 = vmul.f32 %v1179, %v1197
  %v1218 = vmul.f32 %v1180, %v1198
  %v1219 = vmul.f32 %v1181, %v1197
  %v1220 = vmul.f32 %v1182, %v1198
  %v1221 = vmul.f32 %v1183, %v1197
  %v1222 = vmul.f32 %v1184, %v1198
  %v1223 = vmul.f32 %v1185, %v1197
  %v1224 = vmul.f32 %v1186, %v1198
  %v1225 = vmul.f32 %v1187, %v1197
  %v1226 = vmul.f32 %v1188, %v1198
  %v1227 = vmul.f32 %v1189, %v1197
  %v1228 = vmul.f32 %v1190, %v1198
  %v1229 = vmul.f32 %v1191, %v1197
  %v1230 = vmul.f32 %v1192, %v1198
  %v1231 = vmul.f32 %v1193, %v1197
  %v1232 = vmul.f32 %v1194, %v1198
  %v1233 = vld [vmem:[%s8] sm:$0x3]
  %v1235 = vperm.slane %v1233, 0
  %v1236 = vperm.slane %v1233, 1
  %v1239 = vadd.f32 %v1201, %v1235
  %v1240 = vadd.f32 %v1202, %v1236
  %v1241 = vadd.f32 %v1203, %v1235
  %v1242 = vadd.f32 %v1204, %v1236
  %v1243 = vadd.f32 %v1205, %v1235
  %v1244 = vadd.f32 %v1206, %v1236
  %v1245 = vadd.f32 %v1207, %v1235
  %v1246 = vadd.f32 %v1208, %v1236
  %v1247 = vadd.f32 %v1209, %v1235
  %v1248 = vadd.f32 %v1210, %v1236
  %v1249 = vadd.f32 %v1211, %v1235
  %v1250 = vadd.f32 %v1212, %v1236
  %v1251 = vadd.f32 %v1213, %v1235
  %v1252 = vadd.f32 %v1214, %v1236
  %v1253 = vadd.f32 %v1215, %v1235
  %v1254 = vadd.f32 %v1216, %v1236
  %v1255 = vadd.f32 %v1217, %v1235
  %v1256 = vadd.f32 %v1218, %v1236
  %v1257 = vadd.f32 %v1219, %v1235
  %v1258 = vadd.f32 %v1220, %v1236
  %v1259 = vadd.f32 %v1221, %v1235
  %v1260 = vadd.f32 %v1222, %v1236
  %v1261 = vadd.f32 %v1223, %v1235
  %v1262 = vadd.f32 %v1224, %v1236
  %v1263 = vadd.f32 %v1225, %v1235
  %v1264 = vadd.f32 %v1226, %v1236
  %v1265 = vadd.f32 %v1227, %v1235
  %v1266 = vadd.f32 %v1228, %v1236
  %v1267 = vadd.f32 %v1229, %v1235
  %v1268 = vadd.f32 %v1230, %v1236
  %v1269 = vadd.f32 %v1231, %v1235
  %v1270 = vadd.f32 %v1232, %v1236
  %v1271 = vmax.f32 %v1239, 0.0
  %v1272 = vmax.f32 %v1240, 0.0
  %v1273 = vmax.f32 %v1241, 0.0
  %v1274 = vmax.f32 %v1242, 0.0
  %v1275 = vmax.f32 %v1243, 0.0
  %v1276 = vmax.f32 %v1244, 0.0
  %v1277 = vmax.f32 %v1245, 0.0
  %v1278 = vmax.f32 %v1246, 0.0
  %v1279 = vmax.f32 %v1247, 0.0
  %v1280 = vmax.f32 %v1248, 0.0
  %v1281 = vmax.f32 %v1249, 0.0
  %v1282 = vmax.f32 %v1250, 0.0
  %v1283 = vmax.f32 %v1251, 0.0
  %v1284 = vmax.f32 %v1252, 0.0
  %v1285 = vmax.f32 %v1253, 0.0
  %v1286 = vmax.f32 %v1254, 0.0
  %v1287 = vmax.f32 %v1255, 0.0
  %v1288 = vmax.f32 %v1256, 0.0
  %v1289 = vmax.f32 %v1257, 0.0
  %v1290 = vmax.f32 %v1258, 0.0
  %v1291 = vmax.f32 %v1259, 0.0
  %v1292 = vmax.f32 %v1260, 0.0
  %v1293 = vmax.f32 %v1261, 0.0
  %v1294 = vmax.f32 %v1262, 0.0
  %v1295 = vmax.f32 %v1263, 0.0
  %v1296 = vmax.f32 %v1264, 0.0
  %v1297 = vmax.f32 %v1265, 0.0
  %v1298 = vmax.f32 %v1266, 0.0
  %v1299 = vmax.f32 %v1267, 0.0
  %v1300 = vmax.f32 %v1268, 0.0
  %v1301 = vmax.f32 %v1269, 0.0
  %v1302 = vmax.f32 %v1270, 0.0
  %v1303 = vpack.c.bf16 %v1273, %v1271
  %v1304 = vpack.c.bf16 %v1274, %v1272
  %v1305 = vpack.c.bf16 %v1277, %v1275
  %v1306 = vpack.c.bf16 %v1278, %v1276
  %v1307 = vpack.c.bf16 %v1281, %v1279
  %v1308 = vpack.c.bf16 %v1282, %v1280
  %v1309 = vpack.c.bf16 %v1285, %v1283
  %v1310 = vpack.c.bf16 %v1286, %v1284
  %v1311 = vpack.c.bf16 %v1289, %v1287
  %v1312 = vpack.c.bf16 %v1290, %v1288
  %v1313 = vpack.c.bf16 %v1293, %v1291
  %v1314 = vpack.c.bf16 %v1294, %v1292
  %v1315 = vpack.c.bf16 %v1297, %v1295
  %v1316 = vpack.c.bf16 %v1298, %v1296
  %v1317 = vpack.c.bf16 %v1301, %v1299
  %v1318 = vpack.c.bf16 %v1302, %v1300
  %v1319 = vld [vmem:[%s9] sm:$0xf]
  %v1320 = vld [vmem:[%s9 + $0x4] sm:$0xf]
  %v1321 = vld [vmem:[%s9 + $0x8] sm:$0xf]
  %v1322 = vld [vmem:[%s9 + $0xc] sm:$0xf]
  %v1323 = vld [vmem:[%s9 + $0x10] sm:$0xf]
  %v1324 = vld [vmem:[%s9 + $0x14] sm:$0xf]
  %v1325 = vld [vmem:[%s9 + $0x18] sm:$0xf]
  %v1326 = vld [vmem:[%s9 + $0x1c] sm:$0xf]
  %v1327 = vld [vmem:[%s9 + $0x20] sm:$0xf]
  %v1328 = vld [vmem:[%s9 + $0x24] sm:$0xf]
  %v1329 = vld [vmem:[%s9 + $0x28] sm:$0xf]
  %v1330 = vld [vmem:[%s9 + $0x2c] sm:$0xf]
  %v1331 = vld [vmem:[%s9 + $0x30] sm:$0xf]
  %v1332 = vld [vmem:[%s9 + $0x34] sm:$0xf]
  %v1333 = vld [vmem:[%s9 + $0x38] sm:$0xf]
  %v1334 = vld [vmem:[%s9 + $0x3c] sm:$0xf]
  %v1335 = vld [vmem:[%s9 + $0x40] sm:$0xf]
  %v1336 = vld [vmem:[%s9 + $0x44] sm:$0xf]
  %v1337 = vld [vmem:[%s9 + $0x48] sm:$0xf]
  %v1338 = vld [vmem:[%s9 + $0x4c] sm:$0xf]
  %v1339 = vld [vmem:[%s9 + $0x50] sm:$0xf]
  %v1340 = vld [vmem:[%s9 + $0x54] sm:$0xf]
  %v1341 = vld [vmem:[%s9 + $0x58] sm:$0xf]
  %v1342 = vld [vmem:[%s9 + $0x5c] sm:$0xf]
  %v1343 = vld [vmem:[%s10] sm:$0x1]
  %v1345 = vperm.slane %v1343, 0
  %v1371 = vunpack.c.l.b16 %v1319
  %v1372 = vunpack.c.l.b16 %v1320
  %v1373 = vunpack.c.l.b16 %v1321
  %v1374 = vunpack.c.l.b16 %v1322
  %v1375 = vunpack.c.l.b16 %v1323
  %v1376 = vunpack.c.l.b16 %v1324
  %v1377 = vunpack.c.l.b16 %v1325
  %v1378 = vunpack.c.l.b16 %v1326
  %v1379 = vunpack.c.l.b16 %v1327
  %v1380 = vunpack.c.l.b16 %v1328
  %v1381 = vunpack.c.l.b16 %v1329
  %v1382 = vunpack.c.l.b16 %v1330
  %v1383 = vunpack.c.l.b16 %v1331
  %v1384 = vunpack.c.l.b16 %v1332
  %v1385 = vunpack.c.l.b16 %v1333
  %v1386 = vunpack.c.l.b16 %v1334
  %v1387 = vunpack.c.l.b16 %v1335
  %v1388 = vunpack.c.l.b16 %v1336
  %v1389 = vunpack.c.l.b16 %v1337
  %v1390 = vunpack.c.l.b16 %v1338
  %v1391 = vunpack.c.l.b16 %v1339
  %v1392 = vunpack.c.l.b16 %v1340
  %v1393 = vunpack.c.l.b16 %v1341
  %v1394 = vunpack.c.l.b16 %v1342
  %v1395 = vpack.c.b16 %v1372, %v1371
  %v1396 = vpack.c.b16 %v1374, %v1373
  %v1397 = vpack.c.b16 %v1376, %v1375
  %v1398 = vpack.c.b16 %v1378, %v1377
  %v1399 = vpack.c.b16 %v1380, %v1379
  %v1400 = vpack.c.b16 %v1382, %v1381
  %v1401 = vpack.c.b16 %v1384, %v1383
  %v1402 = vpack.c.b16 %v1386, %v1385
  %v1403 = vpack.c.b16 %v1388, %v1387
  %v1404 = vpack.c.b16 %v1390, %v1389
  %v1405 = vpack.c.b16 %v1392, %v1391
  %v1406 = vpack.c.b16 %v1394, %v1393
  %v1420 = vsel %vm183, %v1304, 0
  %v1423 = vsel %vm183, %v1306, 0
  %v1426 = vsel %vm183, %v1308, 0
  %v1429 = vsel %vm183, %v1310, 0
  %v1432 = vsel %vm183, %v1312, 0
  %v1435 = vsel %vm183, %v1314, 0
  %v1438 = vsel %vm183, %v1316, 0
  %v1441 = vsel %vm183, %v1318, 0
  %1443 = vmatpush.bf16.msra.mxu0 %v1402
  %1444 = vmatpush.bf16.msra.mxu0 %v1401
  %1445 = vmatpush.bf16.msra.mxu0 %v1400
  %1446 = vmatpush.bf16.msra.mxu0 %v1399
  %1447 = vmatpush.bf16.msra.mxu0 %v1398
  %1448 = vmatpush.bf16.msra.mxu0 %v1397
  %1449 = vmatpush.bf16.msra.mxu0 %v1396
  %1450 = vmatpush.bf16.msra.mxu0 %v1395
  %1451 = vmatmul.bf16.gmra.mxu0 %v1303
  %v1452 = vpop.f32.mrf.mxu0
  %v1453 = vadd.f32 %v1345, %v1452
  %v1454 = vpop.f32.mrf.mxu0
  %v1455 = vadd.f32 %v1345, %v1454
  %1456 = vmatmul.bf16.gmra.mxu0 %v1305
  %v1457 = vpop.f32.mrf.mxu0
  %v1458 = vadd.f32 %v1345, %v1457
  %v1459 = vpop.f32.mrf.mxu0
  %v1460 = vadd.f32 %v1345, %v1459
  %1461 = vmatmul.bf16.gmra.mxu0 %v1307
  %v1462 = vpop.f32.mrf.mxu0
  %v1463 = vadd.f32 %v1345, %v1462
  %v1464 = vpop.f32.mrf.mxu0
  %v1465 = vadd.f32 %v1345, %v1464
  %1466 = vmatmul.bf16.gmra.mxu0 %v1309
  %v1467 = vpop.f32.mrf.mxu0
  %v1468 = vadd.f32 %v1345, %v1467
  %v1469 = vpop.f32.mrf.mxu0
  %v1470 = vadd.f32 %v1345, %v1469
  %1471 = vmatmul.bf16.gmra.mxu0 %v1311
  %v1472 = vpop.f32.mrf.mxu0
  %v1473 = vadd.f32 %v1345, %v1472
  %v1474 = vpop.f32.mrf.mxu0
  %v1475 = vadd.f32 %v1345, %v1474
  %1476 = vmatmul.bf16.gmra.mxu0 %v1313
  %v1477 = vpop.f32.mrf.mxu0
  %v1478 = vadd.f32 %v1345, %v1477
  %v1479 = vpop.f32.mrf.mxu0
  %v1480 = vadd.f32 %v1345, %v1479
  %1481 = vmatmul.bf16.gmra.mxu0 %v1315
  %v1482 = vpop.f32.mrf.mxu0
  %v1483 = vadd.f32 %v1345, %v1482
  %v1484 = vpop.f32.mrf.mxu0
  %v1485 = vadd.f32 %v1345, %v1484
  %1486 = vmatmul.bf16.gmra.mxu0 %v1317
  %v1487 = vpop.f32.mrf.mxu0
  %v1488 = vadd.f32 %v1345, %v1487
  %v1489 = vpop.f32.mrf.mxu0
  %v1490 = vadd.f32 %v1345, %v1489
  %1491 = vdwg.mxu0
  %1492 = vmatpush.bf16.msra.mxu0 0
  %1493 = vmatpush.bf16.msra.mxu0 0
  %1494 = vmatpush.bf16.msra.mxu0 0
  %1495 = vmatpush.bf16.msra.mxu0 0
  %1496 = vmatpush.bf16.msra.mxu0 %v1406
  %1497 = vmatpush.bf16.msra.mxu0 %v1405
  %1498 = vmatpush.bf16.msra.mxu0 %v1404
  %1499 = vmatpush.bf16.msra.mxu0 %v1403
  %1500 = vmatmul.bf16.gmra.mxu0 %v1420
  %v1501 = vpop.f32.mrf.mxu0
  %v1502 = vadd.f32 %v1453, %v1501
  %v1503 = vpop.f32.mrf.mxu0
  %v1504 = vadd.f32 %v1455, %v1503
  %1505 = vmatmul.bf16.gmra.mxu0 %v1423
  %v1506 = vpop.f32.mrf.mxu0
  %v1507 = vadd.f32 %v1458, %v1506
  %v1508 = vpop.f32.mrf.mxu0
  %v1509 = vadd.f32 %v1460, %v1508
  %1510 = vmatmul.bf16.gmra.mxu0 %v1426
  %v1511 = vpop.f32.mrf.mxu0
  %v1512 = vadd.f32 %v1463, %v1511
  %v1513 = vpop.f32.mrf.mxu0
  %v1514 = vadd.f32 %v1465, %v1513
  %1515 = vmatmul.bf16.gmra.mxu0 %v1429
  %v1516 = vpop.f32.mrf.mxu0
  %v1517 = vadd.f32 %v1468, %v1516
  %v1518 = vpop.f32.mrf.mxu0
  %v1519 = vadd.f32 %v1470, %v1518
  %1520 = vmatmul.bf16.gmra.mxu0 %v1432
  %v1521 = vpop.f32.mrf.mxu0
  %v1522 = vadd.f32 %v1473, %v1521
  %v1523 = vpop.f32.mrf.mxu0
  %v1524 = vadd.f32 %v1475, %v1523
  %1525 = vmatmul.bf16.gmra.mxu0 %v1435
  %v1526 = vpop.f32.mrf.mxu0
  %v1527 = vadd.f32 %v1478, %v1526
  %v1528 = vpop.f32.mrf.mxu0
  %v1529 = vadd.f32 %v1480, %v1528
  %1530 = vmatmul.bf16.gmra.mxu0 %v1438
  %v1531 = vpop.f32.mrf.mxu0
  %v1532 = vadd.f32 %v1483, %v1531
  %v1533 = vpop.f32.mrf.mxu0
  %v1534 = vadd.f32 %v1485, %v1533
  %1535 = vmatmul.bf16.gmra.mxu0 %v1441
  %v1536 = vpop.f32.mrf.mxu0
  %v1537 = vadd.f32 %v1488, %v1536
  %v1538 = vpop.f32.mrf.mxu0
  %v1539 = vadd.f32 %v1490, %v1538
  %1540 = vdwg.mxu0
  %v1541 = vadd.f32 %v1502, %v39
  %v1542 = vadd.f32 %v1504, %v40
  %v1543 = vadd.f32 %v1507, %v41
  %v1544 = vadd.f32 %v1509, %v42
  %v1545 = vadd.f32 %v1512, %v43
  %v1546 = vadd.f32 %v1514, %v44
  %v1547 = vadd.f32 %v1517, %v45
  %v1548 = vadd.f32 %v1519, %v46
  %v1549 = vadd.f32 %v1522, %v47
  %v1550 = vadd.f32 %v1524, %v48
  %v1551 = vadd.f32 %v1527, %v49
  %v1552 = vadd.f32 %v1529, %v50
  %v1553 = vadd.f32 %v1532, %v51
  %v1554 = vadd.f32 %v1534, %v52
  %v1555 = vadd.f32 %v1537, %v53
  %v1556 = vadd.f32 %v1539, %v54
  %v1557 = vmax.f32 %v1541, 0.0
  %v1558 = vmax.f32 %v1542, 0.0
  %v1559 = vmax.f32 %v1543, 0.0
  %v1560 = vmax.f32 %v1544, 0.0
  %v1561 = vmax.f32 %v1545, 0.0
  %v1562 = vmax.f32 %v1546, 0.0
  %v1563 = vmax.f32 %v1547, 0.0
  %v1564 = vmax.f32 %v1548, 0.0
  %v1565 = vmax.f32 %v1549, 0.0
  %v1566 = vmax.f32 %v1550, 0.0
  %v1567 = vmax.f32 %v1551, 0.0
  %v1568 = vmax.f32 %v1552, 0.0
  %v1569 = vmax.f32 %v1553, 0.0
  %v1570 = vmax.f32 %v1554, 0.0
  %v1571 = vmax.f32 %v1555, 0.0
  %v1572 = vmax.f32 %v1556, 0.0
  %1573 = vst.msk [vmem:[%s11] sm:$0xff] %vm183, %v1557
  %1574 = vst.msk [vmem:[%s11 + $0x8] sm:$0xff] %vm183, %v1558
  %1575 = vst.msk [vmem:[%s11 + $0x10] sm:$0xff] %vm183, %v1559
  %1576 = vst.msk [vmem:[%s11 + $0x18] sm:$0xff] %vm183, %v1560
  %1577 = vst.msk [vmem:[%s11 + $0x20] sm:$0xff] %vm183, %v1561
  %1578 = vst.msk [vmem:[%s11 + $0x28] sm:$0xff] %vm183, %v1562
  %1579 = vst.msk [vmem:[%s11 + $0x30] sm:$0xff] %vm183, %v1563
  %1580 = vst.msk [vmem:[%s11 + $0x38] sm:$0xff] %vm183, %v1564
  %1581 = vst.msk [vmem:[%s11 + $0x40] sm:$0xff] %vm183, %v1565
  %1582 = vst.msk [vmem:[%s11 + $0x48] sm:$0xff] %vm183, %v1566
  %1583 = vst.msk [vmem:[%s11 + $0x50] sm:$0xff] %vm183, %v1567
  %1584 = vst.msk [vmem:[%s11 + $0x58] sm:$0xff] %vm183, %v1568
  %1585 = vst.msk [vmem:[%s11 + $0x60] sm:$0xff] %vm183, %v1569
  %1586 = vst.msk [vmem:[%s11 + $0x68] sm:$0xff] %vm183, %v1570
  %1587 = vst.msk [vmem:[%s11 + $0x70] sm:$0xff] %vm183, %v1571
  %1588 = vst.msk [vmem:[%s11 + $0x78] sm:$0xff] %vm183, %v1572
  // Predicated region
  $region46: #{gat_base_forward.14} parent=0 // pred_check
    _
  $region47: #{gat_base_forward.14} parent=0 // pred_check_branch
    %1590 = sbr.rel (0) target = $region49
  $region48: #{gat_base_forward.14} parent=0 // pred_region
    _
  $region49: #{gat_base_forward.14} parent=0 // pred_fallthru
    _
  // Predicated region
  $region50: #{gat_base_forward.14} parent=0 // pred_check
    _
  $region51: #{gat_base_forward.14} parent=0 // pred_check_branch
    %1592 = sbr.rel (0) target = $region53
  $region52: #{gat_base_forward.14} parent=0 // pred_region
    _
  $region53: #{gat_base_forward.14} parent=0 // pred_fallthru
    _

</llo_original>
